<compile_context>
chip_gen: v7x
topology: tpu7x:2x2x1
jax: 0.10.0
libtpu: 0.0.40
codegen_flags: <defaults>
</compile_context>

<pallas_src>
import functools

import numpy as np

import jax
import jax.numpy as jnp
from jax import lax
from jax.experimental import pallas as pl
from jax.experimental.pallas import tpu as pltpu


# --------------------------------------------------------------------------
# Fused Pallas kernel
# --------------------------------------------------------------------------

def _flowstep_kernel(x_ref, wa_ref, ca_ref, w1_ref, c1_ref, w2_ref, c2_ref,
                     w3_ref, b3_ref, m_ref,
                     z_ref, ls_ref,
                     acc1_ref, act1_ref, act2_ref, acc3_ref,
                     *, roll_shifts, affine_eps, affine_scale_eps):
    """One batch-tile of the full FlowStep forward.

    Layout: every data slab is channel-major (rows = channels, lanes = tb*H*W).
      x_ref   : (C, L)      f32   input tile (channel-major)
      wa/ca   : (C, C)/(C,1)      folded actnorm+invconv
      w1_ref  : (9, hid, ch) bf16 conv3x3 #1 tap weights (conv-actnorm folded)
      w2_ref  : (hid, hid)   bf16 conv1x1 #2 (conv-actnorm folded)
      w3_ref  : (9, C, hid)  bf16 Conv2dZeros taps (exp(3*logs) folded, output
                                  rows permuted to [shift ; scale])
      m_ref   : (9, L)       f32  per-tap zero-padding masks
      z_ref   : (C, L)       f32  output tile: rows 0:ch = z1, rows ch: = z2'
      ls_ref  : (1, L)       f32  sum over channels of log(scale) per position
    """
    f32 = jnp.float32
    mm = w2_ref.dtype
    ch = w1_ref.shape[-1]

    def tap(v, r):
        return v if r == 0 else pltpu.roll(v, shift=r, axis=1)

    # ---- ActNorm + invertible 1x1 conv (folded): z = Wa @ x + ca --------
    # (K = C is tiny; kept in f32 — negligible MXU cost, z1 passes straight
    #  through to the output.)
    z_ref[...] = jnp.dot(wa_ref[...], x_ref[...],
                         preferred_element_type=f32) + ca_ref[...]

    # ---- coupling block, conv3x3 #1: 9 tap matmuls on rolled/masked z1 --
    acc1_ref[...] = jnp.zeros_like(acc1_ref)
    for t, r in enumerate(roll_shifts):
        z1t = tap(z_ref[0:ch, :], r) * m_ref[t:t + 1, :]
        acc1_ref[...] += jnp.dot(w1_ref[t], z1t.astype(mm),
                                 preferred_element_type=f32)
    act1_ref[...] = jnp.maximum(acc1_ref[...] + c1_ref[...], 0.0).astype(mm)

    # ---- coupling block, conv1x1 #2 + ReLU -------------------------------
    act2_ref[...] = jnp.maximum(
        jnp.dot(w2_ref[...], act1_ref[...], preferred_element_type=f32)
        + c2_ref[...], 0.0).astype(mm)

    # ---- Conv2dZeros 3x3: roll the small (C, L) matmul RESULT per tap ----
    # (the column mask commutes with the matmul, so the big (hid, L) input is
    #  never shifted).
    acc3_ref[...] = jnp.zeros_like(acc3_ref)
    for t, r in enumerate(roll_shifts):
        rt = jnp.dot(w3_ref[t], act2_ref[...], preferred_element_type=f32)
        acc3_ref[...] += tap(rt, r) * m_ref[t:t + 1, :]

    # ---- affine coupling + per-position logdet ---------------------------
    hh = acc3_ref[...] + b3_ref[...]           # rows 0:ch = shift, ch: = scale_raw
    shift = hh[0:ch, :]
    u = hh[ch:, :] + affine_scale_eps
    e = jnp.exp(-u)                            # EUP
    denom = 1.0 + e
    scale = pl.reciprocal(denom, approx=True) + affine_eps   # EUP rcp (cheap)
    z_ref[ch:, :] = (z_ref[ch:, :] + shift) * scale
    # log(sigmoid(u)+eps) == log(1 + eps*denom) - log(denom): exact form that
    # keeps the approx-reciprocal error out of the logdet reduction.
    logs = jnp.log(1.0 + affine_eps * denom) - jnp.log(denom)
    ls_ref[...] = jnp.sum(logs, axis=0, keepdims=True)


# --------------------------------------------------------------------------
# Wrapper
# --------------------------------------------------------------------------

class FlowStep:
    """JAX/Pallas port of the Glow FlowStep forward pass (normal_flow) with
    flow_permutation='invconv', flow_coupling='affine', actnorm enabled."""

    def __init__(self, params, *, affine_eps=1e-3, affine_scale_eps=0.0,
                 batch_tile=8, matmul_dtype=jnp.bfloat16,
                 vmem_budget_bytes=20 * 1024 * 1024):
        self.p = {k: jnp.asarray(v, jnp.float32) for k, v in params.items()}
        self.affine_eps = float(affine_eps)
        self.affine_scale_eps = float(affine_scale_eps)
        self.batch_tile = int(batch_tile)
        self.matmul_dtype = matmul_dtype
        self.vmem_budget_bytes = int(vmem_budget_bytes)
        self.hidden = self.p['w1'].shape[0]

    def __call__(self, x, logdet=None, reverse=False):
        if reverse:
            # TODO(synk): reverse_flow (inverse) path not implemented in Pallas.
            raise NotImplementedError("reverse_flow not implemented")
        return self._normal_flow(x, logdet)

    # -- tiling --------------------------------------------------------------
    def _vmem_estimate(self, tb, c, hid, hw):
        L = tb * hw
        ch = c // 2
        mmb = np.dtype(self.matmul_dtype).itemsize
        f32b = 4
        blocks = (c * L * f32b            # x tile
                  + c * L * f32b          # z tile
                  + L * f32b              # log-scale tile
                  + 9 * L * f32b          # masks
                  + c * c * f32b + 9 * hid * ch * mmb + hid * hid * mmb
                  + 9 * c * hid * mmb + (2 * c + 2 * hid) * f32b)
        scratch = hid * L * f32b + 2 * hid * L * mmb + c * L * f32b
        return 2 * blocks + scratch       # pipelined blocks double-buffered

    def _pick_batch_tile(self, n, c, hw):
        hid = self.hidden
        # cap at n//2 so the 'parallel' grid axis has >=2 steps (v7x megacore,
        # DMA/compute pipelining on all generations).
        cap = max(1, min(self.batch_tile, n if n == 1 else n // 2))
        best = 1
        for tb in range(1, cap + 1):
            if n % tb:
                continue
            if (tb * hw) % 128 != 0:
                continue                  # lane dim must stay 128-aligned
            if self._vmem_estimate(tb, c, hid, hw) <= self.vmem_budget_bytes:
                best = tb
        if (best * hw) % 128 != 0:
            # TODO(synk): pad lanes for tiny H*W (deep Glow levels); for now
            # fall back to a single full-extent block.
            best = n
        return best

    # -- forward -------------------------------------------------------------
    def _normal_flow(self, x, logdet):
        p = self.p
        n, c, h, w = x.shape
        assert c % 2 == 0
        hw, ch, hid = h * w, c // 2, self.hidden
        mm = self.matmul_dtype
        f32 = jnp.float32

        tb = self._pick_batch_tile(n, c, hw)
        L = tb * hw
        grid = (n // tb,)

        # ---- channel-major, lane-dense layout: (C, N*H*W) ------------------
        xcm = x.reshape(n, c, hw).transpose(1, 0, 2).reshape(c, n * hw).astype(f32)

        # ---- fold per-channel affines into the matmul weights/biases -------
        wa = (p['invconv_w'] * p['actnorm_scale'][None, :]).astype(f32)
        ca = (p['invconv_w'] @ (p['actnorm_scale'] * p['actnorm_bias'])
              ).reshape(c, 1).astype(f32)

        w1f = p['w1'] * p['an1_scale'][:, None, None, None]
        w1t = w1f.transpose(2, 3, 0, 1).reshape(9, hid, ch).astype(mm)
        c1 = (p['an1_scale'] * p['an1_bias']).reshape(hid, 1).astype(f32)

        w2f = (p['w2'] * p['an2_scale'][:, None]).astype(mm)
        c2 = (p['an2_scale'] * p['an2_bias']).reshape(hid, 1).astype(f32)

        e3 = jnp.exp(3.0 * p['logs3'])
        perm = jnp.concatenate([jnp.arange(0, c, 2), jnp.arange(1, c, 2)])
        w3p = (p['w3'] * e3[:, None, None, None])[perm]          # [shift; scale] rows
        w3t = w3p.transpose(2, 3, 0, 1).reshape(9, c, hid).astype(mm)
        b3p = (p['b3'] * e3)[perm].reshape(c, 1).astype(f32)

        # ---- 3x3 tap roll amounts + zero-padding masks (host-side consts) --
        ys, xs = np.divmod(np.arange(hw), w)
        mask_rows, roll_shifts = [], []
        for dy in range(3):
            for dx in range(3):
                valid = ((ys + dy - 1 >= 0) & (ys + dy - 1 < h)
                         & (xs + dx - 1 >= 0) & (xs + dx - 1 < w))
                mask_rows.append(np.tile(valid.astype(np.float32), tb))
                s = (dy - 1) * w + (dx - 1)
                roll_shifts.append(int((-s) % L))
        masks = jnp.asarray(np.stack(mask_rows))                 # (9, L)

        kernel = functools.partial(_flowstep_kernel,
                                   roll_shifts=tuple(roll_shifts),
                                   affine_eps=self.affine_eps,
                                   affine_scale_eps=self.affine_scale_eps)

        bcast2 = lambda i: (0, 0)
        bcast3 = lambda i: (0, 0, 0)
        z_cm, ls = pl.pallas_call(
            kernel,
            out_shape=(jax.ShapeDtypeStruct((c, n * hw), f32),
                       jax.ShapeDtypeStruct((1, n * hw), f32)),
            grid=grid,
            in_specs=[
                pl.BlockSpec((c, L), lambda i: (0, i)),          # x (channel-major)
                pl.BlockSpec((c, c), bcast2),                    # wa
                pl.BlockSpec((c, 1), bcast2),                    # ca
                pl.BlockSpec((9, hid, ch), bcast3),              # w1 taps
                pl.BlockSpec((hid, 1), bcast2),                  # c1
                pl.BlockSpec((hid, hid), bcast2),                # w2
                pl.BlockSpec((hid, 1), bcast2),                  # c2
                pl.BlockSpec((9, c, hid), bcast3),               # w3 taps
                pl.BlockSpec((c, 1), bcast2),                    # b3
                pl.BlockSpec((9, L), bcast2),                    # masks
            ],
            out_specs=(pl.BlockSpec((c, L), lambda i: (0, i)),
                       pl.BlockSpec((1, L), lambda i: (0, i))),
            scratch_shapes=[
                pltpu.VMEM((hid, L), f32),    # conv1 f32 accumulator
                pltpu.VMEM((hid, L), mm),     # relu(conv1) activations
                pltpu.VMEM((hid, L), mm),     # relu(conv2) activations
                pltpu.VMEM((c, L), f32),      # Conv2dZeros accumulator
            ],
            compiler_params=pltpu.CompilerParams(
                dimension_semantics=("parallel",),
                vmem_limit_bytes=32 * 1024 * 1024),
        )(xcm, wa, ca, w1t, c1, w2f, c2, w3t, b3p, masks)

        # ---- back to NCHW + logdet assembly (tiny, data-independent XLA) ----
        z_out = z_cm.reshape(c, n, hw).transpose(1, 0, 2).reshape(n, c, h, w)
        dld_param = (hw * jnp.sum(jnp.log(jnp.abs(p['actnorm_scale'])))
                     + hw * jnp.linalg.slogdet(p['invconv_w'])[1])
        dld = ls.reshape(n, hw).sum(axis=1)
        if logdet is None:
            ld_in = jnp.zeros((n,), f32)
        else:
            ld_in = logdet.reshape(n).astype(f32)
        return z_out, ld_in + dld_param + dld


# --------------------------------------------------------------------------
# Pure-JAX reference (independent path: lax.conv / einsum)
# --------------------------------------------------------------------------

def _reference_flowstep(x, logdet, params, affine_eps, affine_scale_eps):
    p = params
    n, c, h, w = x.shape

    def bc(v):
        return v[None, :, None, None]

    def conv(a, wgt):
        return lax.conv_general_dilated(
            a, wgt, (1, 1), 'SAME',
            dimension_numbers=('NCHW', 'OIHW', 'NCHW'),
            precision=lax.Precision.HIGHEST)

    # ActNorm2d
    z = (x + bc(p['actnorm_bias'])) * bc(p['actnorm_scale'])
    ld = logdet + h * w * jnp.sum(jnp.log(jnp.abs(p['actnorm_scale'])))
    # InvertibleConv1x1
    z = jnp.einsum('oc,nchw->nohw', p['invconv_w'], z,
                   precision=lax.Precision.HIGHEST)
    ld = ld + h * w * jnp.linalg.slogdet(p['invconv_w'])[1]
    # Affine coupling
    z1, z2 = z[:, :c // 2], z[:, c // 2:]
    hh = conv(z1, p['w1'])
    hh = (hh + bc(p['an1_bias'])) * bc(p['an1_scale'])
    hh = jax.nn.relu(hh)
    hh = conv(hh, p['w2'][:, :, None, None])
    hh = (hh + bc(p['an2_bias'])) * bc(p['an2_scale'])
    hh = jax.nn.relu(hh)
    hh = (conv(hh, p['w3']) + bc(p['b3'])) * bc(jnp.exp(3.0 * p['logs3']))
    shift, scale_raw = hh[:, 0::2], hh[:, 1::2]
    scale = jax.nn.sigmoid(scale_raw + affine_scale_eps) + affine_eps
    z2 = (z2 + shift) * scale
    ld = ld + jnp.sum(jnp.log(scale), axis=(1, 2, 3))
    z = jnp.concatenate([z1, z2], axis=1)
    return z, ld


if __name__ == "__main__":
    key = jax.random.PRNGKey(0)
    ks = jax.random.split(key, 14)
    N, C, H, W = 2, 4, 16, 16
    HIDDEN = 32
    CH = C // 2

    x = jax.random.normal(ks[0], (N, C, H, W), jnp.float32)
    logdet = jax.random.normal(ks[1], (N,), jnp.float32)

    params = {
        'actnorm_bias': 0.1 * jax.random.normal(ks[2], (C,), jnp.float32),
        'actnorm_scale': jnp.exp(0.1 * jax.random.normal(ks[3], (C,), jnp.float32)),
        'invconv_w': jnp.linalg.qr(jax.random.normal(ks[4], (C, C), jnp.float32))[0],
        'w1': 0.1 * jax.random.normal(ks[5], (HIDDEN, CH, 3, 3), jnp.float32),
        'an1_bias': 0.1 * jax.random.normal(ks[6], (HIDDEN,), jnp.float32),
        'an1_scale': jnp.exp(0.05 * jax.random.normal(ks[7], (HIDDEN,), jnp.float32)),
        'w2': 0.1 * jax.random.normal(ks[8], (HIDDEN, HIDDEN), jnp.float32),
        'an2_bias': 0.1 * jax.random.normal(ks[9], (HIDDEN,), jnp.float32),
        'an2_scale': jnp.exp(0.05 * jax.random.normal(ks[10], (HIDDEN,), jnp.float32)),
        'w3': 0.02 * jax.random.normal(ks[11], (C, HIDDEN, 3, 3), jnp.float32),
        'b3': 0.02 * jax.random.normal(ks[12], (C,), jnp.float32),
        'logs3': 0.02 * jax.random.normal(ks[13], (C,), jnp.float32),
    }

    module = FlowStep(params, affine_eps=1e-3, affine_scale_eps=0.0, batch_tile=8)

    z, ld = module(x, logdet=logdet, reverse=False)
    z = jax.block_until_ready(z)
    ld = jax.block_until_ready(ld)

    z_ref, ld_ref = _reference_flowstep(x, logdet, params, 1e-3, 0.0)
    # Tolerance covers bf16 MXU matmuls (f32 accumulation) vs the XLA
    # HIGHEST-precision f32 conv reference, plus the approx EUP reciprocal in
    # the sigmoid (which is kept out of the logdet path by construction).
    assert jnp.allclose(z, z_ref, atol=3e-2, rtol=3e-2), \
        float(jnp.max(jnp.abs(z - z_ref)))
    assert jnp.allclose(ld, ld_ref, atol=1e-1, rtol=1e-2), \
        float(jnp.max(jnp.abs(ld - ld_ref)))

    print("KERNEL_OK")
</pallas_src>

<mosaic_0001>
module attributes {stable_mosaic.version = 11 : i64} {
  func.func @_flowstep_kernel(%arg0: i32, %arg1: memref<4x256xf32, #tpu.memory_space<vmem>>, %arg2: memref<4x4xf32, #tpu.memory_space<vmem>>, %arg3: memref<4x1xf32, #tpu.memory_space<vmem>>, %arg4: memref<9x32x2xbf16, #tpu.memory_space<vmem>>, %arg5: memref<32x1xf32, #tpu.memory_space<vmem>>, %arg6: memref<32x32xbf16, #tpu.memory_space<vmem>>, %arg7: memref<32x1xf32, #tpu.memory_space<vmem>>, %arg8: memref<9x4x32xbf16, #tpu.memory_space<vmem>>, %arg9: memref<4x1xf32, #tpu.memory_space<vmem>>, %arg10: memref<9x256xf32, #tpu.memory_space<vmem>>, %arg11: memref<4x256xf32, #tpu.memory_space<vmem>>, %arg12: memref<1x256xf32, #tpu.memory_space<vmem>>, %arg13: memref<32x256xf32, #tpu.memory_space<vmem>>, %arg14: memref<32x256xbf16, #tpu.memory_space<vmem>>, %arg15: memref<32x256xbf16, #tpu.memory_space<vmem>>, %arg16: memref<4x256xf32, #tpu.memory_space<vmem>>) attributes {dimension_semantics = [#tpu.dimension_semantics<parallel>], iteration_bounds = array<i64: 2>, scalar_prefetch = 0 : i64, scratch_operands = 4 : i64, tpu.core_type = #tpu.core_type<tc>, window_params = [{transform_indices = @transform_0, window_bounds = array<i64: 4, 256>}, {pipeline_mode = #tpu.pipeline_mode<synchronous>, transform_indices = @transform_1, window_bounds = array<i64: 4, 4>}, {pipeline_mode = #tpu.pipeline_mode<synchronous>, transform_indices = @transform_2, window_bounds = array<i64: 4, 1>}, {pipeline_mode = #tpu.pipeline_mode<synchronous>, transform_indices = @transform_3, window_bounds = array<i64: 9, 32, 2>}, {pipeline_mode = #tpu.pipeline_mode<synchronous>, transform_indices = @transform_4, window_bounds = array<i64: 32, 1>}, {pipeline_mode = #tpu.pipeline_mode<synchronous>, transform_indices = @transform_5, window_bounds = array<i64: 32, 32>}, {pipeline_mode = #tpu.pipeline_mode<synchronous>, transform_indices = @transform_6, window_bounds = array<i64: 32, 1>}, {pipeline_mode = #tpu.pipeline_mode<synchronous>, transform_indices = @transform_7, window_bounds = array<i64: 9, 4, 32>}, {pipeline_mode = #tpu.pipeline_mode<synchronous>, transform_indices = @transform_8, window_bounds = array<i64: 4, 1>}, {pipeline_mode = #tpu.pipeline_mode<synchronous>, transform_indices = @transform_9, window_bounds = array<i64: 9, 256>}, {transform_indices = @transform_10, window_bounds = array<i64: 4, 256>}, {transform_indices = @transform_11, window_bounds = array<i64: 1, 256>}]} {
    %c0 = arith.constant 0 : index
    %c0_0 = arith.constant 0 : index
    %0 = vector.load %arg2[%c0, %c0_0] : memref<4x4xf32, #tpu.memory_space<vmem>>, vector<4x4xf32>
    %c0_1 = arith.constant 0 : index
    %c0_2 = arith.constant 0 : index
    %1 = vector.load %arg1[%c0_1, %c0_2] : memref<4x256xf32, #tpu.memory_space<vmem>>, vector<4x256xf32>
    %cst = arith.constant dense<0.000000e+00> : vector<4x256xf32>
    %2 = tpu.matmul %0, %1, %cst {dimension_numbers = #tpu.dot_dimension_numbers<[1], [0], [0], [1], [0, 0, 1, 1], [], []>} : vector<4x4xf32>, vector<4x256xf32>, vector<4x256xf32> -> vector<4x256xf32>
    %c0_3 = arith.constant 0 : index
    %c0_4 = arith.constant 0 : index
    %3 = vector.load %arg3[%c0_3, %c0_4] : memref<4x1xf32, #tpu.memory_space<vmem>>, vector<4x1xf32>
    %4 = vector.broadcast %3 : vector<4x1xf32> to vector<4x256xf32>
    %5 = arith.addf %2, %4 : vector<4x256xf32>
    %c0_5 = arith.constant 0 : index
    %c0_6 = arith.constant 0 : index
    %6 = vector.load %arg11[%c0_5, %c0_6] : memref<4x256xf32, #tpu.memory_space<vmem>>, vector<4x256xf32>
    tpu.vector_store %arg11[%c0_5, %c0_6], %5 {strides = array<i32>} : memref<4x256xf32, #tpu.memory_space<vmem>>, vector<4x256xf32>,
    %cst_7 = arith.constant 0.000000e+00 : f32
    %7 = vector.broadcast %cst_7 : f32 to vector<32x256xf32>
    %c0_8 = arith.constant 0 : index
    %c0_9 = arith.constant 0 : index
    %8 = vector.load %arg13[%c0_8, %c0_9] : memref<32x256xf32, #tpu.memory_space<vmem>>, vector<32x256xf32>
    tpu.vector_store %arg13[%c0_8, %c0_9], %7 {strides = array<i32>} : memref<32x256xf32, #tpu.memory_space<vmem>>, vector<32x256xf32>,
    %c0_10 = arith.constant 0 : index
    %c0_11 = arith.constant 0 : index
    %9 = vector.load %arg11[%c0_10, %c0_11] : memref<4x256xf32, #tpu.memory_space<vmem>>, vector<2x256xf32>
    %c17_i32 = arith.constant 17 : i32
    %10 = tpu.dynamic_rotate %9 by %c17_i32 dim 1 : vector<2x256xf32>, i32 -> vector<2x256xf32>
    %c0_12 = arith.constant 0 : index
    %c0_13 = arith.constant 0 : index
    %11 = vector.load %arg10[%c0_12, %c0_13] : memref<9x256xf32, #tpu.memory_space<vmem>>, vector<1x256xf32>
    %12 = vector.broadcast %11 : vector<1x256xf32> to vector<2x256xf32>
    %13 = arith.mulf %10, %12 : vector<2x256xf32>
    %c0_14 = arith.constant 0 : index
    %c0_15 = arith.constant 0 : index
    %14 = vector.load %arg13[%c0_14, %c0_15] : memref<32x256xf32, #tpu.memory_space<vmem>>, vector<32x256xf32>
    %c0_16 = arith.constant 0 : index
    %c0_17 = arith.constant 0 : index
    %c0_18 = arith.constant 0 : index
    %15 = vector.load %arg4[%c0_16, %c0_17, %c0_18] : memref<9x32x2xbf16, #tpu.memory_space<vmem>>, vector<1x32x2xbf16>
    %16 = vector.shape_cast %15 : vector<1x32x2xbf16> to vector<32x2xbf16>
    %17 = arith.truncf %13 : vector<2x256xf32> to vector<2x256xbf16>
    %cst_19 = arith.constant dense<0.000000e+00> : vector<32x256xf32>
    %18 = tpu.matmul %16, %17, %cst_19 {dimension_numbers = #tpu.dot_dimension_numbers<[1], [0], [0], [1], [0, 0, 1, 1], [], []>} : vector<32x2xbf16>, vector<2x256xbf16>, vector<32x256xf32> -> vector<32x256xf32>
    %19 = arith.addf %14, %18 : vector<32x256xf32>
    %c0_20 = arith.constant 0 : index
    %c0_21 = arith.constant 0 : index
    %20 = vector.load %arg13[%c0_20, %c0_21] : memref<32x256xf32, #tpu.memory_space<vmem>>, vector<32x256xf32>
    tpu.vector_store %arg13[%c0_20, %c0_21], %19 {strides = array<i32>} : memref<32x256xf32, #tpu.memory_space<vmem>>, vector<32x256xf32>,
    %c0_22 = arith.constant 0 : index
    %c0_23 = arith.constant 0 : index
    %21 = vector.load %arg11[%c0_22, %c0_23] : memref<4x256xf32, #tpu.memory_space<vmem>>, vector<2x256xf32>
    %c16_i32 = arith.constant 16 : i32
    %22 = tpu.dynamic_rotate %21 by %c16_i32 dim 1 : vector<2x256xf32>, i32 -> vector<2x256xf32>
    %c1 = arith.constant 1 : index
    %c0_24 = arith.constant 0 : index
    %23 = vector.load %arg10[%c1, %c0_24] : memref<9x256xf32, #tpu.memory_space<vmem>>, vector<1x256xf32>
    %24 = vector.broadcast %23 : vector<1x256xf32> to vector<2x256xf32>
    %25 = arith.mulf %22, %24 : vector<2x256xf32>
    %c0_25 = arith.constant 0 : index
    %c0_26 = arith.constant 0 : index
    %26 = vector.load %arg13[%c0_25, %c0_26] : memref<32x256xf32, #tpu.memory_space<vmem>>, vector<32x256xf32>
    %c1_27 = arith.constant 1 : index
    %c0_28 = arith.constant 0 : index
    %c0_29 = arith.constant 0 : index
    %27 = vector.load %arg4[%c1_27, %c0_28, %c0_29] : memref<9x32x2xbf16, #tpu.memory_space<vmem>>, vector<1x32x2xbf16>
    %28 = vector.shape_cast %27 : vector<1x32x2xbf16> to vector<32x2xbf16>
    %29 = arith.truncf %25 : vector<2x256xf32> to vector<2x256xbf16>
    %cst_30 = arith.constant dense<0.000000e+00> : vector<32x256xf32>
    %30 = tpu.matmul %28, %29, %cst_30 {dimension_numbers = #tpu.dot_dimension_numbers<[1], [0], [0], [1], [0, 0, 1, 1], [], []>} : vector<32x2xbf16>, vector<2x256xbf16>, vector<32x256xf32> -> vector<32x256xf32>
    %31 = arith.addf %26, %30 : vector<32x256xf32>
    %c0_31 = arith.constant 0 : index
    %c0_32 = arith.constant 0 : index
    %32 = vector.load %arg13[%c0_31, %c0_32] : memref<32x256xf32, #tpu.memory_space<vmem>>, vector<32x256xf32>
    tpu.vector_store %arg13[%c0_31, %c0_32], %31 {strides = array<i32>} : memref<32x256xf32, #tpu.memory_space<vmem>>, vector<32x256xf32>,
    %c0_33 = arith.constant 0 : index
    %c0_34 = arith.constant 0 : index
    %33 = vector.load %arg11[%c0_33, %c0_34] : memref<4x256xf32, #tpu.memory_space<vmem>>, vector<2x256xf32>
    %c15_i32 = arith.constant 15 : i32
    %34 = tpu.dynamic_rotate %33 by %c15_i32 dim 1 : vector<2x256xf32>, i32 -> vector<2x256xf32>
    %c2 = arith.constant 2 : index
    %c0_35 = arith.constant 0 : index
    %35 = vector.load %arg10[%c2, %c0_35] : memref<9x256xf32, #tpu.memory_space<vmem>>, vector<1x256xf32>
    %36 = vector.broadcast %35 : vector<1x256xf32> to vector<2x256xf32>
    %37 = arith.mulf %34, %36 : vector<2x256xf32>
    %c0_36 = arith.constant 0 : index
    %c0_37 = arith.constant 0 : index
    %38 = vector.load %arg13[%c0_36, %c0_37] : memref<32x256xf32, #tpu.memory_space<vmem>>, vector<32x256xf32>
    %c2_38 = arith.constant 2 : index
    %c0_39 = arith.constant 0 : index
    %c0_40 = arith.constant 0 : index
    %39 = vector.load %arg4[%c2_38, %c0_39, %c0_40] : memref<9x32x2xbf16, #tpu.memory_space<vmem>>, vector<1x32x2xbf16>
    %40 = vector.shape_cast %39 : vector<1x32x2xbf16> to vector<32x2xbf16>
    %41 = arith.truncf %37 : vector<2x256xf32> to vector<2x256xbf16>
    %cst_41 = arith.constant dense<0.000000e+00> : vector<32x256xf32>
    %42 = tpu.matmul %40, %41, %cst_41 {dimension_numbers = #tpu.dot_dimension_numbers<[1], [0], [0], [1], [0, 0, 1, 1], [], []>} : vector<32x2xbf16>, vector<2x256xbf16>, vector<32x256xf32> -> vector<32x256xf32>
    %43 = arith.addf %38, %42 : vector<32x256xf32>
    %c0_42 = arith.constant 0 : index
    %c0_43 = arith.constant 0 : index
    %44 = vector.load %arg13[%c0_42, %c0_43] : memref<32x256xf32, #tpu.memory_space<vmem>>, vector<32x256xf32>
    tpu.vector_store %arg13[%c0_42, %c0_43], %43 {strides = array<i32>} : memref<32x256xf32, #tpu.memory_space<vmem>>, vector<32x256xf32>,
    %c0_44 = arith.constant 0 : index
    %c0_45 = arith.constant 0 : index
    %45 = vector.load %arg11[%c0_44, %c0_45] : memref<4x256xf32, #tpu.memory_space<vmem>>, vector<2x256xf32>
    %c1_i32 = arith.constant 1 : i32
    %46 = tpu.dynamic_rotate %45 by %c1_i32 dim 1 : vector<2x256xf32>, i32 -> vector<2x256xf32>
    %c3 = arith.constant 3 : index
    %c0_46 = arith.constant 0 : index
    %47 = vector.load %arg10[%c3, %c0_46] : memref<9x256xf32, #tpu.memory_space<vmem>>, vector<1x256xf32>
    %48 = vector.broadcast %47 : vector<1x256xf32> to vector<2x256xf32>
    %49 = arith.mulf %46, %48 : vector<2x256xf32>
    %c0_47 = arith.constant 0 : index
    %c0_48 = arith.constant 0 : index
    %50 = vector.load %arg13[%c0_47, %c0_48] : memref<32x256xf32, #tpu.memory_space<vmem>>, vector<32x256xf32>
    %c3_49 = arith.constant 3 : index
    %c0_50 = arith.constant 0 : index
    %c0_51 = arith.constant 0 : index
    %51 = vector.load %arg4[%c3_49, %c0_50, %c0_51] : memref<9x32x2xbf16, #tpu.memory_space<vmem>>, vector<1x32x2xbf16>
    %52 = vector.shape_cast %51 : vector<1x32x2xbf16> to vector<32x2xbf16>
    %53 = arith.truncf %49 : vector<2x256xf32> to vector<2x256xbf16>
    %cst_52 = arith.constant dense<0.000000e+00> : vector<32x256xf32>
    %54 = tpu.matmul %52, %53, %cst_52 {dimension_numbers = #tpu.dot_dimension_numbers<[1], [0], [0], [1], [0, 0, 1, 1], [], []>} : vector<32x2xbf16>, vector<2x256xbf16>, vector<32x256xf32> -> vector<32x256xf32>
    %55 = arith.addf %50, %54 : vector<32x256xf32>
    %c0_53 = arith.constant 0 : index
    %c0_54 = arith.constant 0 : index
    %56 = vector.load %arg13[%c0_53, %c0_54] : memref<32x256xf32, #tpu.memory_space<vmem>>, vector<32x256xf32>
    tpu.vector_store %arg13[%c0_53, %c0_54], %55 {strides = array<i32>} : memref<32x256xf32, #tpu.memory_space<vmem>>, vector<32x256xf32>,
    %c0_55 = arith.constant 0 : index
    %c0_56 = arith.constant 0 : index
    %57 = vector.load %arg11[%c0_55, %c0_56] : memref<4x256xf32, #tpu.memory_space<vmem>>, vector<2x256xf32>
    %c4 = arith.constant 4 : index
    %c0_57 = arith.constant 0 : index
    %58 = vector.load %arg10[%c4, %c0_57] : memref<9x256xf32, #tpu.memory_space<vmem>>, vector<1x256xf32>
    %59 = vector.broadcast %58 : vector<1x256xf32> to vector<2x256xf32>
    %60 = arith.mulf %57, %59 : vector<2x256xf32>
    %c0_58 = arith.constant 0 : index
    %c0_59 = arith.constant 0 : index
    %61 = vector.load %arg13[%c0_58, %c0_59] : memref<32x256xf32, #tpu.memory_space<vmem>>, vector<32x256xf32>
    %c4_60 = arith.constant 4 : index
    %c0_61 = arith.constant 0 : index
    %c0_62 = arith.constant 0 : index
    %62 = vector.load %arg4[%c4_60, %c0_61, %c0_62] : memref<9x32x2xbf16, #tpu.memory_space<vmem>>, vector<1x32x2xbf16>
    %63 = vector.shape_cast %62 : vector<1x32x2xbf16> to vector<32x2xbf16>
    %64 = arith.truncf %60 : vector<2x256xf32> to vector<2x256xbf16>
    %cst_63 = arith.constant dense<0.000000e+00> : vector<32x256xf32>
    %65 = tpu.matmul %63, %64, %cst_63 {dimension_numbers = #tpu.dot_dimension_numbers<[1], [0], [0], [1], [0, 0, 1, 1], [], []>} : vector<32x2xbf16>, vector<2x256xbf16>, vector<32x256xf32> -> vector<32x256xf32>
    %66 = arith.addf %61, %65 : vector<32x256xf32>
    %c0_64 = arith.constant 0 : index
    %c0_65 = arith.constant 0 : index
    %67 = vector.load %arg13[%c0_64, %c0_65] : memref<32x256xf32, #tpu.memory_space<vmem>>, vector<32x256xf32>
    tpu.vector_store %arg13[%c0_64, %c0_65], %66 {strides = array<i32>} : memref<32x256xf32, #tpu.memory_space<vmem>>, vector<32x256xf32>,
    %c0_66 = arith.constant 0 : index
    %c0_67 = arith.constant 0 : index
    %68 = vector.load %arg11[%c0_66, %c0_67] : memref<4x256xf32, #tpu.memory_space<vmem>>, vector<2x256xf32>
    %c255_i32 = arith.constant 255 : i32
    %69 = tpu.dynamic_rotate %68 by %c255_i32 dim 1 : vector<2x256xf32>, i32 -> vector<2x256xf32>
    %c5 = arith.constant 5 : index
    %c0_68 = arith.constant 0 : index
    %70 = vector.load %arg10[%c5, %c0_68] : memref<9x256xf32, #tpu.memory_space<vmem>>, vector<1x256xf32>
    %71 = vector.broadcast %70 : vector<1x256xf32> to vector<2x256xf32>
    %72 = arith.mulf %69, %71 : vector<2x256xf32>
    %c0_69 = arith.constant 0 : index
    %c0_70 = arith.constant 0 : index
    %73 = vector.load %arg13[%c0_69, %c0_70] : memref<32x256xf32, #tpu.memory_space<vmem>>, vector<32x256xf32>
    %c5_71 = arith.constant 5 : index
    %c0_72 = arith.constant 0 : index
    %c0_73 = arith.constant 0 : index
    %74 = vector.load %arg4[%c5_71, %c0_72, %c0_73] : memref<9x32x2xbf16, #tpu.memory_space<vmem>>, vector<1x32x2xbf16>
    %75 = vector.shape_cast %74 : vector<1x32x2xbf16> to vector<32x2xbf16>
    %76 = arith.truncf %72 : vector<2x256xf32> to vector<2x256xbf16>
    %cst_74 = arith.constant dense<0.000000e+00> : vector<32x256xf32>
    %77 = tpu.matmul %75, %76, %cst_74 {dimension_numbers = #tpu.dot_dimension_numbers<[1], [0], [0], [1], [0, 0, 1, 1], [], []>} : vector<32x2xbf16>, vector<2x256xbf16>, vector<32x256xf32> -> vector<32x256xf32>
    %78 = arith.addf %73, %77 : vector<32x256xf32>
    %c0_75 = arith.constant 0 : index
    %c0_76 = arith.constant 0 : index
    %79 = vector.load %arg13[%c0_75, %c0_76] : memref<32x256xf32, #tpu.memory_space<vmem>>, vector<32x256xf32>
    tpu.vector_store %arg13[%c0_75, %c0_76], %78 {strides = array<i32>} : memref<32x256xf32, #tpu.memory_space<vmem>>, vector<32x256xf32>,
    %c0_77 = arith.constant 0 : index
    %c0_78 = arith.constant 0 : index
    %80 = vector.load %arg11[%c0_77, %c0_78] : memref<4x256xf32, #tpu.memory_space<vmem>>, vector<2x256xf32>
    %c241_i32 = arith.constant 241 : i32
    %81 = tpu.dynamic_rotate %80 by %c241_i32 dim 1 : vector<2x256xf32>, i32 -> vector<2x256xf32>
    %c6 = arith.constant 6 : index
    %c0_79 = arith.constant 0 : index
    %82 = vector.load %arg10[%c6, %c0_79] : memref<9x256xf32, #tpu.memory_space<vmem>>, vector<1x256xf32>
    %83 = vector.broadcast %82 : vector<1x256xf32> to vector<2x256xf32>
    %84 = arith.mulf %81, %83 : vector<2x256xf32>
    %c0_80 = arith.constant 0 : index
    %c0_81 = arith.constant 0 : index
    %85 = vector.load %arg13[%c0_80, %c0_81] : memref<32x256xf32, #tpu.memory_space<vmem>>, vector<32x256xf32>
    %c6_82 = arith.constant 6 : index
    %c0_83 = arith.constant 0 : index
    %c0_84 = arith.constant 0 : index
    %86 = vector.load %arg4[%c6_82, %c0_83, %c0_84] : memref<9x32x2xbf16, #tpu.memory_space<vmem>>, vector<1x32x2xbf16>
    %87 = vector.shape_cast %86 : vector<1x32x2xbf16> to vector<32x2xbf16>
    %88 = arith.truncf %84 : vector<2x256xf32> to vector<2x256xbf16>
    %cst_85 = arith.constant dense<0.000000e+00> : vector<32x256xf32>
    %89 = tpu.matmul %87, %88, %cst_85 {dimension_numbers = #tpu.dot_dimension_numbers<[1], [0], [0], [1], [0, 0, 1, 1], [], []>} : vector<32x2xbf16>, vector<2x256xbf16>, vector<32x256xf32> -> vector<32x256xf32>
    %90 = arith.addf %85, %89 : vector<32x256xf32>
    %c0_86 = arith.constant 0 : index
    %c0_87 = arith.constant 0 : index
    %91 = vector.load %arg13[%c0_86, %c0_87] : memref<32x256xf32, #tpu.memory_space<vmem>>, vector<32x256xf32>
    tpu.vector_store %arg13[%c0_86, %c0_87], %90 {strides = array<i32>} : memref<32x256xf32, #tpu.memory_space<vmem>>, vector<32x256xf32>,
    %c0_88 = arith.constant 0 : index
    %c0_89 = arith.constant 0 : index
    %92 = vector.load %arg11[%c0_88, %c0_89] : memref<4x256xf32, #tpu.memory_space<vmem>>, vector<2x256xf32>
    %c240_i32 = arith.constant 240 : i32
    %93 = tpu.dynamic_rotate %92 by %c240_i32 dim 1 : vector<2x256xf32>, i32 -> vector<2x256xf32>
    %c7 = arith.constant 7 : index
    %c0_90 = arith.constant 0 : index
    %94 = vector.load %arg10[%c7, %c0_90] : memref<9x256xf32, #tpu.memory_space<vmem>>, vector<1x256xf32>
    %95 = vector.broadcast %94 : vector<1x256xf32> to vector<2x256xf32>
    %96 = arith.mulf %93, %95 : vector<2x256xf32>
    %c0_91 = arith.constant 0 : index
    %c0_92 = arith.constant 0 : index
    %97 = vector.load %arg13[%c0_91, %c0_92] : memref<32x256xf32, #tpu.memory_space<vmem>>, vector<32x256xf32>
    %c7_93 = arith.constant 7 : index
    %c0_94 = arith.constant 0 : index
    %c0_95 = arith.constant 0 : index
    %98 = vector.load %arg4[%c7_93, %c0_94, %c0_95] : memref<9x32x2xbf16, #tpu.memory_space<vmem>>, vector<1x32x2xbf16>
    %99 = vector.shape_cast %98 : vector<1x32x2xbf16> to vector<32x2xbf16>
    %100 = arith.truncf %96 : vector<2x256xf32> to vector<2x256xbf16>
    %cst_96 = arith.constant dense<0.000000e+00> : vector<32x256xf32>
    %101 = tpu.matmul %99, %100, %cst_96 {dimension_numbers = #tpu.dot_dimension_numbers<[1], [0], [0], [1], [0, 0, 1, 1], [], []>} : vector<32x2xbf16>, vector<2x256xbf16>, vector<32x256xf32> -> vector<32x256xf32>
    %102 = arith.addf %97, %101 : vector<32x256xf32>
    %c0_97 = arith.constant 0 : index
    %c0_98 = arith.constant 0 : index
    %103 = vector.load %arg13[%c0_97, %c0_98] : memref<32x256xf32, #tpu.memory_space<vmem>>, vector<32x256xf32>
    tpu.vector_store %arg13[%c0_97, %c0_98], %102 {strides = array<i32>} : memref<32x256xf32, #tpu.memory_space<vmem>>, vector<32x256xf32>,
    %c0_99 = arith.constant 0 : index
    %c0_100 = arith.constant 0 : index
    %104 = vector.load %arg11[%c0_99, %c0_100] : memref<4x256xf32, #tpu.memory_space<vmem>>, vector<2x256xf32>
    %c239_i32 = arith.constant 239 : i32
    %105 = tpu.dynamic_rotate %104 by %c239_i32 dim 1 : vector<2x256xf32>, i32 -> vector<2x256xf32>
    %c8 = arith.constant 8 : index
    %c0_101 = arith.constant 0 : index
    %106 = vector.load %arg10[%c8, %c0_101] : memref<9x256xf32, #tpu.memory_space<vmem>>, vector<1x256xf32>
    %107 = vector.broadcast %106 : vector<1x256xf32> to vector<2x256xf32>
    %108 = arith.mulf %105, %107 : vector<2x256xf32>
    %c0_102 = arith.constant 0 : index
    %c0_103 = arith.constant 0 : index
    %109 = vector.load %arg13[%c0_102, %c0_103] : memref<32x256xf32, #tpu.memory_space<vmem>>, vector<32x256xf32>
    %c8_104 = arith.constant 8 : index
    %c0_105 = arith.constant 0 : index
    %c0_106 = arith.constant 0 : index
    %110 = vector.load %arg4[%c8_104, %c0_105, %c0_106] : memref<9x32x2xbf16, #tpu.memory_space<vmem>>, vector<1x32x2xbf16>
    %111 = vector.shape_cast %110 : vector<1x32x2xbf16> to vector<32x2xbf16>
    %112 = arith.truncf %108 : vector<2x256xf32> to vector<2x256xbf16>
    %cst_107 = arith.constant dense<0.000000e+00> : vector<32x256xf32>
    %113 = tpu.matmul %111, %112, %cst_107 {dimension_numbers = #tpu.dot_dimension_numbers<[1], [0], [0], [1], [0, 0, 1, 1], [], []>} : vector<32x2xbf16>, vector<2x256xbf16>, vector<32x256xf32> -> vector<32x256xf32>
    %114 = arith.addf %109, %113 : vector<32x256xf32>
    %c0_108 = arith.constant 0 : index
    %c0_109 = arith.constant 0 : index
    %115 = vector.load %arg13[%c0_108, %c0_109] : memref<32x256xf32, #tpu.memory_space<vmem>>, vector<32x256xf32>
    tpu.vector_store %arg13[%c0_108, %c0_109], %114 {strides = array<i32>} : memref<32x256xf32, #tpu.memory_space<vmem>>, vector<32x256xf32>,
    %c0_110 = arith.constant 0 : index
    %c0_111 = arith.constant 0 : index
    %116 = vector.load %arg13[%c0_110, %c0_111] : memref<32x256xf32, #tpu.memory_space<vmem>>, vector<32x256xf32>
    %c0_112 = arith.constant 0 : index
    %c0_113 = arith.constant 0 : index
    %117 = vector.load %arg5[%c0_112, %c0_113] : memref<32x1xf32, #tpu.memory_space<vmem>>, vector<32x1xf32>
    %118 = vector.broadcast %117 : vector<32x1xf32> to vector<32x256xf32>
    %119 = arith.addf %116, %118 : vector<32x256xf32>
    %cst_114 = arith.constant 0.000000e+00 : f32
    %120 = vector.broadcast %cst_114 : f32 to vector<32x256xf32>
    %121 = arith.maximumf %119, %120 : vector<32x256xf32>
    %122 = arith.truncf %121 : vector<32x256xf32> to vector<32x256xbf16>
    %c0_115 = arith.constant 0 : index
    %c0_116 = arith.constant 0 : index
    %123 = vector.load %arg14[%c0_115, %c0_116] : memref<32x256xbf16, #tpu.memory_space<vmem>>, vector<32x256xbf16>
    tpu.vector_store %arg14[%c0_115, %c0_116], %122 {strides = array<i32>} : memref<32x256xbf16, #tpu.memory_space<vmem>>, vector<32x256xbf16>,
    %c0_117 = arith.constant 0 : index
    %c0_118 = arith.constant 0 : index
    %124 = vector.load %arg6[%c0_117, %c0_118] : memref<32x32xbf16, #tpu.memory_space<vmem>>, vector<32x32xbf16>
    %c0_119 = arith.constant 0 : index
    %c0_120 = arith.constant 0 : index
    %125 = vector.load %arg14[%c0_119, %c0_120] : memref<32x256xbf16, #tpu.memory_space<vmem>>, vector<32x256xbf16>
    %cst_121 = arith.constant dense<0.000000e+00> : vector<32x256xf32>
    %126 = tpu.matmul %124, %125, %cst_121 {dimension_numbers = #tpu.dot_dimension_numbers<[1], [0], [0], [1], [0, 0, 1, 1], [], []>} : vector<32x32xbf16>, vector<32x256xbf16>, vector<32x256xf32> -> vector<32x256xf32>
    %c0_122 = arith.constant 0 : index
    %c0_123 = arith.constant 0 : index
    %127 = vector.load %arg7[%c0_122, %c0_123] : memref<32x1xf32, #tpu.memory_space<vmem>>, vector<32x1xf32>
    %128 = vector.broadcast %127 : vector<32x1xf32> to vector<32x256xf32>
    %129 = arith.addf %126, %128 : vector<32x256xf32>
    %cst_124 = arith.constant 0.000000e+00 : f32
    %130 = vector.broadcast %cst_124 : f32 to vector<32x256xf32>
    %131 = arith.maximumf %129, %130 : vector<32x256xf32>
    %132 = arith.truncf %131 : vector<32x256xf32> to vector<32x256xbf16>
    %c0_125 = arith.constant 0 : index
    %c0_126 = arith.constant 0 : index
    %133 = vector.load %arg15[%c0_125, %c0_126] : memref<32x256xbf16, #tpu.memory_space<vmem>>, vector<32x256xbf16>
    tpu.vector_store %arg15[%c0_125, %c0_126], %132 {strides = array<i32>} : memref<32x256xbf16, #tpu.memory_space<vmem>>, vector<32x256xbf16>,
    %cst_127 = arith.constant 0.000000e+00 : f32
    %134 = vector.broadcast %cst_127 : f32 to vector<4x256xf32>
    %c0_128 = arith.constant 0 : index
    %c0_129 = arith.constant 0 : index
    %135 = vector.load %arg16[%c0_128, %c0_129] : memref<4x256xf32, #tpu.memory_space<vmem>>, vector<4x256xf32>
    tpu.vector_store %arg16[%c0_128, %c0_129], %134 {strides = array<i32>} : memref<4x256xf32, #tpu.memory_space<vmem>>, vector<4x256xf32>,
    %c0_130 = arith.constant 0 : index
    %c0_131 = arith.constant 0 : index
    %c0_132 = arith.constant 0 : index
    %136 = vector.load %arg8[%c0_130, %c0_131, %c0_132] : memref<9x4x32xbf16, #tpu.memory_space<vmem>>, vector<1x4x32xbf16>
    %137 = vector.shape_cast %136 : vector<1x4x32xbf16> to vector<4x32xbf16>
    %c0_133 = arith.constant 0 : index
    %c0_134 = arith.constant 0 : index
    %138 = vector.load %arg15[%c0_133, %c0_134] : memref<32x256xbf16, #tpu.memory_space<vmem>>, vector<32x256xbf16>
    %cst_135 = arith.constant dense<0.000000e+00> : vector<4x256xf32>
    %139 = tpu.matmul %137, %138, %cst_135 {dimension_numbers = #tpu.dot_dimension_numbers<[1], [0], [0], [1], [0, 0, 1, 1], [], []>} : vector<4x32xbf16>, vector<32x256xbf16>, vector<4x256xf32> -> vector<4x256xf32>
    %c0_136 = arith.constant 0 : index
    %c0_137 = arith.constant 0 : index
    %140 = vector.load %arg16[%c0_136, %c0_137] : memref<4x256xf32, #tpu.memory_space<vmem>>, vector<4x256xf32>
    %c17_i32_138 = arith.constant 17 : i32
    %141 = tpu.dynamic_rotate %139 by %c17_i32_138 dim 1 : vector<4x256xf32>, i32 -> vector<4x256xf32>
    %c0_139 = arith.constant 0 : index
    %c0_140 = arith.constant 0 : index
    %142 = vector.load %arg10[%c0_139, %c0_140] : memref<9x256xf32, #tpu.memory_space<vmem>>, vector<1x256xf32>
    %143 = vector.broadcast %142 : vector<1x256xf32> to vector<4x256xf32>
    %144 = arith.mulf %141, %143 : vector<4x256xf32>
    %145 = arith.addf %140, %144 : vector<4x256xf32>
    %c0_141 = arith.constant 0 : index
    %c0_142 = arith.constant 0 : index
    %146 = vector.load %arg16[%c0_141, %c0_142] : memref<4x256xf32, #tpu.memory_space<vmem>>, vector<4x256xf32>
    tpu.vector_store %arg16[%c0_141, %c0_142], %145 {strides = array<i32>} : memref<4x256xf32, #tpu.memory_space<vmem>>, vector<4x256xf32>,
    %c1_143 = arith.constant 1 : index
    %c0_144 = arith.constant 0 : index
    %c0_145 = arith.constant 0 : index
    %147 = vector.load %arg8[%c1_143, %c0_144, %c0_145] : memref<9x4x32xbf16, #tpu.memory_space<vmem>>, vector<1x4x32xbf16>
    %148 = vector.shape_cast %147 : vector<1x4x32xbf16> to vector<4x32xbf16>
    %c0_146 = arith.constant 0 : index
    %c0_147 = arith.constant 0 : index
    %149 = vector.load %arg15[%c0_146, %c0_147] : memref<32x256xbf16, #tpu.memory_space<vmem>>, vector<32x256xbf16>
    %cst_148 = arith.constant dense<0.000000e+00> : vector<4x256xf32>
    %150 = tpu.matmul %148, %149, %cst_148 {dimension_numbers = #tpu.dot_dimension_numbers<[1], [0], [0], [1], [0, 0, 1, 1], [], []>} : vector<4x32xbf16>, vector<32x256xbf16>, vector<4x256xf32> -> vector<4x256xf32>
    %c0_149 = arith.constant 0 : index
    %c0_150 = arith.constant 0 : index
    %151 = vector.load %arg16[%c0_149, %c0_150] : memref<4x256xf32, #tpu.memory_space<vmem>>, vector<4x256xf32>
    %c16_i32_151 = arith.constant 16 : i32
    %152 = tpu.dynamic_rotate %150 by %c16_i32_151 dim 1 : vector<4x256xf32>, i32 -> vector<4x256xf32>
    %c1_152 = arith.constant 1 : index
    %c0_153 = arith.constant 0 : index
    %153 = vector.load %arg10[%c1_152, %c0_153] : memref<9x256xf32, #tpu.memory_space<vmem>>, vector<1x256xf32>
    %154 = vector.broadcast %153 : vector<1x256xf32> to vector<4x256xf32>
    %155 = arith.mulf %152, %154 : vector<4x256xf32>
    %156 = arith.addf %151, %155 : vector<4x256xf32>
    %c0_154 = arith.constant 0 : index
    %c0_155 = arith.constant 0 : index
    %157 = vector.load %arg16[%c0_154, %c0_155] : memref<4x256xf32, #tpu.memory_space<vmem>>, vector<4x256xf32>
    tpu.vector_store %arg16[%c0_154, %c0_155], %156 {strides = array<i32>} : memref<4x256xf32, #tpu.memory_space<vmem>>, vector<4x256xf32>,
    %c2_156 = arith.constant 2 : index
    %c0_157 = arith.constant 0 : index
    %c0_158 = arith.constant 0 : index
    %158 = vector.load %arg8[%c2_156, %c0_157, %c0_158] : memref<9x4x32xbf16, #tpu.memory_space<vmem>>, vector<1x4x32xbf16>
    %159 = vector.shape_cast %158 : vector<1x4x32xbf16> to vector<4x32xbf16>
    %c0_159 = arith.constant 0 : index
    %c0_160 = arith.constant 0 : index
    %160 = vector.load %arg15[%c0_159, %c0_160] : memref<32x256xbf16, #tpu.memory_space<vmem>>, vector<32x256xbf16>
    %cst_161 = arith.constant dense<0.000000e+00> : vector<4x256xf32>
    %161 = tpu.matmul %159, %160, %cst_161 {dimension_numbers = #tpu.dot_dimension_numbers<[1], [0], [0], [1], [0, 0, 1, 1], [], []>} : vector<4x32xbf16>, vector<32x256xbf16>, vector<4x256xf32> -> vector<4x256xf32>
    %c0_162 = arith.constant 0 : index
    %c0_163 = arith.constant 0 : index
    %162 = vector.load %arg16[%c0_162, %c0_163] : memref<4x256xf32, #tpu.memory_space<vmem>>, vector<4x256xf32>
    %c15_i32_164 = arith.constant 15 : i32
    %163 = tpu.dynamic_rotate %161 by %c15_i32_164 dim 1 : vector<4x256xf32>, i32 -> vector<4x256xf32>
    %c2_165 = arith.constant 2 : index
    %c0_166 = arith.constant 0 : index
    %164 = vector.load %arg10[%c2_165, %c0_166] : memref<9x256xf32, #tpu.memory_space<vmem>>, vector<1x256xf32>
    %165 = vector.broadcast %164 : vector<1x256xf32> to vector<4x256xf32>
    %166 = arith.mulf %163, %165 : vector<4x256xf32>
    %167 = arith.addf %162, %166 : vector<4x256xf32>
    %c0_167 = arith.constant 0 : index
    %c0_168 = arith.constant 0 : index
    %168 = vector.load %arg16[%c0_167, %c0_168] : memref<4x256xf32, #tpu.memory_space<vmem>>, vector<4x256xf32>
    tpu.vector_store %arg16[%c0_167, %c0_168], %167 {strides = array<i32>} : memref<4x256xf32, #tpu.memory_space<vmem>>, vector<4x256xf32>,
    %c3_169 = arith.constant 3 : index
    %c0_170 = arith.constant 0 : index
    %c0_171 = arith.constant 0 : index
    %169 = vector.load %arg8[%c3_169, %c0_170, %c0_171] : memref<9x4x32xbf16, #tpu.memory_space<vmem>>, vector<1x4x32xbf16>
    %170 = vector.shape_cast %169 : vector<1x4x32xbf16> to vector<4x32xbf16>
    %c0_172 = arith.constant 0 : index
    %c0_173 = arith.constant 0 : index
    %171 = vector.load %arg15[%c0_172, %c0_173] : memref<32x256xbf16, #tpu.memory_space<vmem>>, vector<32x256xbf16>
    %cst_174 = arith.constant dense<0.000000e+00> : vector<4x256xf32>
    %172 = tpu.matmul %170, %171, %cst_174 {dimension_numbers = #tpu.dot_dimension_numbers<[1], [0], [0], [1], [0, 0, 1, 1], [], []>} : vector<4x32xbf16>, vector<32x256xbf16>, vector<4x256xf32> -> vector<4x256xf32>
    %c0_175 = arith.constant 0 : index
    %c0_176 = arith.constant 0 : index
    %173 = vector.load %arg16[%c0_175, %c0_176] : memref<4x256xf32, #tpu.memory_space<vmem>>, vector<4x256xf32>
    %c1_i32_177 = arith.constant 1 : i32
    %174 = tpu.dynamic_rotate %172 by %c1_i32_177 dim 1 : vector<4x256xf32>, i32 -> vector<4x256xf32>
    %c3_178 = arith.constant 3 : index
    %c0_179 = arith.constant 0 : index
    %175 = vector.load %arg10[%c3_178, %c0_179] : memref<9x256xf32, #tpu.memory_space<vmem>>, vector<1x256xf32>
    %176 = vector.broadcast %175 : vector<1x256xf32> to vector<4x256xf32>
    %177 = arith.mulf %174, %176 : vector<4x256xf32>
    %178 = arith.addf %173, %177 : vector<4x256xf32>
    %c0_180 = arith.constant 0 : index
    %c0_181 = arith.constant 0 : index
    %179 = vector.load %arg16[%c0_180, %c0_181] : memref<4x256xf32, #tpu.memory_space<vmem>>, vector<4x256xf32>
    tpu.vector_store %arg16[%c0_180, %c0_181], %178 {strides = array<i32>} : memref<4x256xf32, #tpu.memory_space<vmem>>, vector<4x256xf32>,
    %c4_182 = arith.constant 4 : index
    %c0_183 = arith.constant 0 : index
    %c0_184 = arith.constant 0 : index
    %180 = vector.load %arg8[%c4_182, %c0_183, %c0_184] : memref<9x4x32xbf16, #tpu.memory_space<vmem>>, vector<1x4x32xbf16>
    %181 = vector.shape_cast %180 : vector<1x4x32xbf16> to vector<4x32xbf16>
    %c0_185 = arith.constant 0 : index
    %c0_186 = arith.constant 0 : index
    %182 = vector.load %arg15[%c0_185, %c0_186] : memref<32x256xbf16, #tpu.memory_space<vmem>>, vector<32x256xbf16>
    %cst_187 = arith.constant dense<0.000000e+00> : vector<4x256xf32>
    %183 = tpu.matmul %181, %182, %cst_187 {dimension_numbers = #tpu.dot_dimension_numbers<[1], [0], [0], [1], [0, 0, 1, 1], [], []>} : vector<4x32xbf16>, vector<32x256xbf16>, vector<4x256xf32> -> vector<4x256xf32>
    %c0_188 = arith.constant 0 : index
    %c0_189 = arith.constant 0 : index
    %184 = vector.load %arg16[%c0_188, %c0_189] : memref<4x256xf32, #tpu.memory_space<vmem>>, vector<4x256xf32>
    %c4_190 = arith.constant 4 : index
    %c0_191 = arith.constant 0 : index
    %185 = vector.load %arg10[%c4_190, %c0_191] : memref<9x256xf32, #tpu.memory_space<vmem>>, vector<1x256xf32>
    %186 = vector.broadcast %185 : vector<1x256xf32> to vector<4x256xf32>
    %187 = arith.mulf %183, %186 : vector<4x256xf32>
    %188 = arith.addf %184, %187 : vector<4x256xf32>
    %c0_192 = arith.constant 0 : index
    %c0_193 = arith.constant 0 : index
    %189 = vector.load %arg16[%c0_192, %c0_193] : memref<4x256xf32, #tpu.memory_space<vmem>>, vector<4x256xf32>
    tpu.vector_store %arg16[%c0_192, %c0_193], %188 {strides = array<i32>} : memref<4x256xf32, #tpu.memory_space<vmem>>, vector<4x256xf32>,
    %c5_194 = arith.constant 5 : index
    %c0_195 = arith.constant 0 : index
    %c0_196 = arith.constant 0 : index
    %190 = vector.load %arg8[%c5_194, %c0_195, %c0_196] : memref<9x4x32xbf16, #tpu.memory_space<vmem>>, vector<1x4x32xbf16>
    %191 = vector.shape_cast %190 : vector<1x4x32xbf16> to vector<4x32xbf16>
    %c0_197 = arith.constant 0 : index
    %c0_198 = arith.constant 0 : index
    %192 = vector.load %arg15[%c0_197, %c0_198] : memref<32x256xbf16, #tpu.memory_space<vmem>>, vector<32x256xbf16>
    %cst_199 = arith.constant dense<0.000000e+00> : vector<4x256xf32>
    %193 = tpu.matmul %191, %192, %cst_199 {dimension_numbers = #tpu.dot_dimension_numbers<[1], [0], [0], [1], [0, 0, 1, 1], [], []>} : vector<4x32xbf16>, vector<32x256xbf16>, vector<4x256xf32> -> vector<4x256xf32>
    %c0_200 = arith.constant 0 : index
    %c0_201 = arith.constant 0 : index
    %194 = vector.load %arg16[%c0_200, %c0_201] : memref<4x256xf32, #tpu.memory_space<vmem>>, vector<4x256xf32>
    %c255_i32_202 = arith.constant 255 : i32
    %195 = tpu.dynamic_rotate %193 by %c255_i32_202 dim 1 : vector<4x256xf32>, i32 -> vector<4x256xf32>
    %c5_203 = arith.constant 5 : index
    %c0_204 = arith.constant 0 : index
    %196 = vector.load %arg10[%c5_203, %c0_204] : memref<9x256xf32, #tpu.memory_space<vmem>>, vector<1x256xf32>
    %197 = vector.broadcast %196 : vector<1x256xf32> to vector<4x256xf32>
    %198 = arith.mulf %195, %197 : vector<4x256xf32>
    %199 = arith.addf %194, %198 : vector<4x256xf32>
    %c0_205 = arith.constant 0 : index
    %c0_206 = arith.constant 0 : index
    %200 = vector.load %arg16[%c0_205, %c0_206] : memref<4x256xf32, #tpu.memory_space<vmem>>, vector<4x256xf32>
    tpu.vector_store %arg16[%c0_205, %c0_206], %199 {strides = array<i32>} : memref<4x256xf32, #tpu.memory_space<vmem>>, vector<4x256xf32>,
    %c6_207 = arith.constant 6 : index
    %c0_208 = arith.constant 0 : index
    %c0_209 = arith.constant 0 : index
    %201 = vector.load %arg8[%c6_207, %c0_208, %c0_209] : memref<9x4x32xbf16, #tpu.memory_space<vmem>>, vector<1x4x32xbf16>
    %202 = vector.shape_cast %201 : vector<1x4x32xbf16> to vector<4x32xbf16>
    %c0_210 = arith.constant 0 : index
    %c0_211 = arith.constant 0 : index
    %203 = vector.load %arg15[%c0_210, %c0_211] : memref<32x256xbf16, #tpu.memory_space<vmem>>, vector<32x256xbf16>
    %cst_212 = arith.constant dense<0.000000e+00> : vector<4x256xf32>
    %204 = tpu.matmul %202, %203, %cst_212 {dimension_numbers = #tpu.dot_dimension_numbers<[1], [0], [0], [1], [0, 0, 1, 1], [], []>} : vector<4x32xbf16>, vector<32x256xbf16>, vector<4x256xf32> -> vector<4x256xf32>
    %c0_213 = arith.constant 0 : index
    %c0_214 = arith.constant 0 : index
    %205 = vector.load %arg16[%c0_213, %c0_214] : memref<4x256xf32, #tpu.memory_space<vmem>>, vector<4x256xf32>
    %c241_i32_215 = arith.constant 241 : i32
    %206 = tpu.dynamic_rotate %204 by %c241_i32_215 dim 1 : vector<4x256xf32>, i32 -> vector<4x256xf32>
    %c6_216 = arith.constant 6 : index
    %c0_217 = arith.constant 0 : index
    %207 = vector.load %arg10[%c6_216, %c0_217] : memref<9x256xf32, #tpu.memory_space<vmem>>, vector<1x256xf32>
    %208 = vector.broadcast %207 : vector<1x256xf32> to vector<4x256xf32>
    %209 = arith.mulf %206, %208 : vector<4x256xf32>
    %210 = arith.addf %205, %209 : vector<4x256xf32>
    %c0_218 = arith.constant 0 : index
    %c0_219 = arith.constant 0 : index
    %211 = vector.load %arg16[%c0_218, %c0_219] : memref<4x256xf32, #tpu.memory_space<vmem>>, vector<4x256xf32>
    tpu.vector_store %arg16[%c0_218, %c0_219], %210 {strides = array<i32>} : memref<4x256xf32, #tpu.memory_space<vmem>>, vector<4x256xf32>,
    %c7_220 = arith.constant 7 : index
    %c0_221 = arith.constant 0 : index
    %c0_222 = arith.constant 0 : index
    %212 = vector.load %arg8[%c7_220, %c0_221, %c0_222] : memref<9x4x32xbf16, #tpu.memory_space<vmem>>, vector<1x4x32xbf16>
    %213 = vector.shape_cast %212 : vector<1x4x32xbf16> to vector<4x32xbf16>
    %c0_223 = arith.constant 0 : index
    %c0_224 = arith.constant 0 : index
    %214 = vector.load %arg15[%c0_223, %c0_224] : memref<32x256xbf16, #tpu.memory_space<vmem>>, vector<32x256xbf16>
    %cst_225 = arith.constant dense<0.000000e+00> : vector<4x256xf32>
    %215 = tpu.matmul %213, %214, %cst_225 {dimension_numbers = #tpu.dot_dimension_numbers<[1], [0], [0], [1], [0, 0, 1, 1], [], []>} : vector<4x32xbf16>, vector<32x256xbf16>, vector<4x256xf32> -> vector<4x256xf32>
    %c0_226 = arith.constant 0 : index
    %c0_227 = arith.constant 0 : index
    %216 = vector.load %arg16[%c0_226, %c0_227] : memref<4x256xf32, #tpu.memory_space<vmem>>, vector<4x256xf32>
    %c240_i32_228 = arith.constant 240 : i32
    %217 = tpu.dynamic_rotate %215 by %c240_i32_228 dim 1 : vector<4x256xf32>, i32 -> vector<4x256xf32>
    %c7_229 = arith.constant 7 : index
    %c0_230 = arith.constant 0 : index
    %218 = vector.load %arg10[%c7_229, %c0_230] : memref<9x256xf32, #tpu.memory_space<vmem>>, vector<1x256xf32>
    %219 = vector.broadcast %218 : vector<1x256xf32> to vector<4x256xf32>
    %220 = arith.mulf %217, %219 : vector<4x256xf32>
    %221 = arith.addf %216, %220 : vector<4x256xf32>
    %c0_231 = arith.constant 0 : index
    %c0_232 = arith.constant 0 : index
    %222 = vector.load %arg16[%c0_231, %c0_232] : memref<4x256xf32, #tpu.memory_space<vmem>>, vector<4x256xf32>
    tpu.vector_store %arg16[%c0_231, %c0_232], %221 {strides = array<i32>} : memref<4x256xf32, #tpu.memory_space<vmem>>, vector<4x256xf32>,
    %c8_233 = arith.constant 8 : index
    %c0_234 = arith.constant 0 : index
    %c0_235 = arith.constant 0 : index
    %223 = vector.load %arg8[%c8_233, %c0_234, %c0_235] : memref<9x4x32xbf16, #tpu.memory_space<vmem>>, vector<1x4x32xbf16>
    %224 = vector.shape_cast %223 : vector<1x4x32xbf16> to vector<4x32xbf16>
    %c0_236 = arith.constant 0 : index
    %c0_237 = arith.constant 0 : index
    %225 = vector.load %arg15[%c0_236, %c0_237] : memref<32x256xbf16, #tpu.memory_space<vmem>>, vector<32x256xbf16>
    %cst_238 = arith.constant dense<0.000000e+00> : vector<4x256xf32>
    %226 = tpu.matmul %224, %225, %cst_238 {dimension_numbers = #tpu.dot_dimension_numbers<[1], [0], [0], [1], [0, 0, 1, 1], [], []>} : vector<4x32xbf16>, vector<32x256xbf16>, vector<4x256xf32> -> vector<4x256xf32>
    %c0_239 = arith.constant 0 : index
    %c0_240 = arith.constant 0 : index
    %227 = vector.load %arg16[%c0_239, %c0_240] : memref<4x256xf32, #tpu.memory_space<vmem>>, vector<4x256xf32>
    %c239_i32_241 = arith.constant 239 : i32
    %228 = tpu.dynamic_rotate %226 by %c239_i32_241 dim 1 : vector<4x256xf32>, i32 -> vector<4x256xf32>
    %c8_242 = arith.constant 8 : index
    %c0_243 = arith.constant 0 : index
    %229 = vector.load %arg10[%c8_242, %c0_243] : memref<9x256xf32, #tpu.memory_space<vmem>>, vector<1x256xf32>
    %230 = vector.broadcast %229 : vector<1x256xf32> to vector<4x256xf32>
    %231 = arith.mulf %228, %230 : vector<4x256xf32>
    %232 = arith.addf %227, %231 : vector<4x256xf32>
    %c0_244 = arith.constant 0 : index
    %c0_245 = arith.constant 0 : index
    %233 = vector.load %arg16[%c0_244, %c0_245] : memref<4x256xf32, #tpu.memory_space<vmem>>, vector<4x256xf32>
    tpu.vector_store %arg16[%c0_244, %c0_245], %232 {strides = array<i32>} : memref<4x256xf32, #tpu.memory_space<vmem>>, vector<4x256xf32>,
    %c0_246 = arith.constant 0 : index
    %c0_247 = arith.constant 0 : index
    %234 = vector.load %arg16[%c0_246, %c0_247] : memref<4x256xf32, #tpu.memory_space<vmem>>, vector<4x256xf32>
    %c0_248 = arith.constant 0 : index
    %c0_249 = arith.constant 0 : index
    %235 = vector.load %arg9[%c0_248, %c0_249] : memref<4x1xf32, #tpu.memory_space<vmem>>, vector<4x1xf32>
    %236 = vector.broadcast %235 : vector<4x1xf32> to vector<4x256xf32>
    %237 = arith.addf %234, %236 : vector<4x256xf32>
    %238 = vector.extract_strided_slice %237 {offsets = [0, 0], sizes = [2, 256], strides = [1, 1]} : vector<4x256xf32> to vector<2x256xf32>
    %239 = vector.extract_strided_slice %237 {offsets = [2, 0], sizes = [2, 256], strides = [1, 1]} : vector<4x256xf32> to vector<2x256xf32>
    %cst_250 = arith.constant 0.000000e+00 : f32
    %240 = vector.broadcast %cst_250 : f32 to vector<2x256xf32>
    %241 = arith.addf %239, %240 : vector<2x256xf32>
    %cst_251 = arith.constant 0.000000e+00 : f32
    %242 = vector.broadcast %cst_251 : f32 to vector<2x256xf32>
    %243 = arith.subf %242, %241 : vector<2x256xf32>
    %244 = math.exp %243 : vector<2x256xf32>
    %cst_252 = arith.constant 1.000000e+00 : f32
    %245 = vector.broadcast %cst_252 : f32 to vector<2x256xf32>
    %246 = arith.addf %245, %244 : vector<2x256xf32>
    %247 = tpu.reciprocal %246 {approx = true} : vector<2x256xf32> -> vector<2x256xf32>
    %cst_253 = arith.constant 1.000000e-03 : f32
    %248 = vector.broadcast %cst_253 : f32 to vector<2x256xf32>
    %249 = arith.addf %247, %248 : vector<2x256xf32>
    %c2_254 = arith.constant 2 : index
    %c0_255 = arith.constant 0 : index
    %250 = vector.load %arg11[%c2_254, %c0_255] : memref<4x256xf32, #tpu.memory_space<vmem>>, vector<2x256xf32>
    %251 = arith.addf %250, %238 : vector<2x256xf32>
    %252 = arith.mulf %251, %249 : vector<2x256xf32>
    %c2_256 = arith.constant 2 : index
    %c0_257 = arith.constant 0 : index
    %253 = vector.load %arg11[%c2_256, %c0_257] : memref<4x256xf32, #tpu.memory_space<vmem>>, vector<2x256xf32>
    tpu.vector_store %arg11[%c2_256, %c0_257], %252 {strides = array<i32>} : memref<4x256xf32, #tpu.memory_space<vmem>>, vector<2x256xf32>,
    %cst_258 = arith.constant 1.000000e-03 : f32
    %254 = vector.broadcast %cst_258 : f32 to vector<2x256xf32>
    %255 = arith.mulf %254, %246 : vector<2x256xf32>
    %cst_259 = arith.constant 1.000000e+00 : f32
    %256 = vector.broadcast %cst_259 : f32 to vector<2x256xf32>
    %257 = arith.addf %256, %255 : vector<2x256xf32>
    %258 = math.log %257 : vector<2x256xf32>
    %259 = math.log %246 : vector<2x256xf32>
    %260 = arith.subf %258, %259 : vector<2x256xf32>
    %cst_260 = arith.constant dense<0.000000e+00> : vector<256xf32>
    %261 = vector.multi_reduction <add>, %260, %cst_260 [0] : vector<2x256xf32> to vector<256xf32>
    %262 = vector.shape_cast %261 : vector<256xf32> to vector<1x256xf32>
    %c0_261 = arith.constant 0 : index
    %c0_262 = arith.constant 0 : index
    %263 = vector.load %arg12[%c0_261, %c0_262] : memref<1x256xf32, #tpu.memory_space<vmem>>, vector<1x256xf32>
    tpu.vector_store %arg12[%c0_261, %c0_262], %262 {strides = array<i32>} : memref<1x256xf32, #tpu.memory_space<vmem>>, vector<1x256xf32>,
    return
  }
  func.func @transform_0(%arg0: i32) -> (i32, i32) {
    %c0_i32 = arith.constant 0 : i32
    %c0_i32_0 = arith.constant 0 : i32
    return %c0_i32, %arg0 : i32, i32
  }
  func.func @transform_1(%arg0: i32) -> (i32, i32) {
    %c0_i32 = arith.constant 0 : i32
    %c0_i32_0 = arith.constant 0 : i32
    %c0_i32_1 = arith.constant 0 : i32
    return %c0_i32, %c0_i32_0 : i32, i32
  }
  func.func @transform_2(%arg0: i32) -> (i32, i32) {
    %c0_i32 = arith.constant 0 : i32
    %c0_i32_0 = arith.constant 0 : i32
    %c0_i32_1 = arith.constant 0 : i32
    return %c0_i32, %c0_i32_0 : i32, i32
  }
  func.func @transform_3(%arg0: i32) -> (i32, i32, i32) {
    %c0_i32 = arith.constant 0 : i32
    %c0_i32_0 = arith.constant 0 : i32
    %c0_i32_1 = arith.constant 0 : i32
    %c0_i32_2 = arith.constant 0 : i32
    return %c0_i32, %c0_i32_0, %c0_i32_1 : i32, i32, i32
  }
  func.func @transform_4(%arg0: i32) -> (i32, i32) {
    %c0_i32 = arith.constant 0 : i32
    %c0_i32_0 = arith.constant 0 : i32
    %c0_i32_1 = arith.constant 0 : i32
    return %c0_i32, %c0_i32_0 : i32, i32
  }
  func.func @transform_5(%arg0: i32) -> (i32, i32) {
    %c0_i32 = arith.constant 0 : i32
    %c0_i32_0 = arith.constant 0 : i32
    %c0_i32_1 = arith.constant 0 : i32
    return %c0_i32, %c0_i32_0 : i32, i32
  }
  func.func @transform_6(%arg0: i32) -> (i32, i32) {
    %c0_i32 = arith.constant 0 : i32
    %c0_i32_0 = arith.constant 0 : i32
    %c0_i32_1 = arith.constant 0 : i32
    return %c0_i32, %c0_i32_0 : i32, i32
  }
  func.func @transform_7(%arg0: i32) -> (i32, i32, i32) {
    %c0_i32 = arith.constant 0 : i32
    %c0_i32_0 = arith.constant 0 : i32
    %c0_i32_1 = arith.constant 0 : i32
    %c0_i32_2 = arith.constant 0 : i32
    return %c0_i32, %c0_i32_0, %c0_i32_1 : i32, i32, i32
  }
  func.func @transform_8(%arg0: i32) -> (i32, i32) {
    %c0_i32 = arith.constant 0 : i32
    %c0_i32_0 = arith.constant 0 : i32
    %c0_i32_1 = arith.constant 0 : i32
    return %c0_i32, %c0_i32_0 : i32, i32
  }
  func.func @transform_9(%arg0: i32) -> (i32, i32) {
    %c0_i32 = arith.constant 0 : i32
    %c0_i32_0 = arith.constant 0 : i32
    %c0_i32_1 = arith.constant 0 : i32
    return %c0_i32, %c0_i32_0 : i32, i32
  }
  func.func @transform_10(%arg0: i32) -> (i32, i32) {
    %c0_i32 = arith.constant 0 : i32
    %c0_i32_0 = arith.constant 0 : i32
    return %c0_i32, %arg0 : i32, i32
  }
  func.func @transform_11(%arg0: i32) -> (i32, i32) {
    %c0_i32 = arith.constant 0 : i32
    %c0_i32_0 = arith.constant 0 : i32
    return %c0_i32, %arg0 : i32, i32
  }
}

</mosaic_0001>

<llo_original>
// kernel: tpu_custom_call.1
$region0: #{tpu_custom_call.1}
  #allocation0 [shape = 'u32[]', space=smem, size = 0x4, offset = 0x4, fixed_abs, tag = 'smem constant byte address 0x4 - core index']
  #allocation1 [shape = 'u32[144,128]{1,0:T(1,128)}', space=vmem, size = 0x12000, scoped, tag = 'internal scratch']
  #allocation2 [shape = 'f32[32,256]{1,0:T(8,128)}', space=vmem, size = 0x8000, scoped, tag = 'scratch operand']
  #allocation3 [shape = 'bf16[32,256]{1,0:T(16,128)(2,1)}', space=vmem, size = 0x4000, scoped, tag = 'scratch operand']
  #allocation4 [shape = 'bf16[32,256]{1,0:T(16,128)(2,1)}', space=vmem, size = 0x4000, scoped, tag = 'scratch operand']
  #allocation5 [shape = 'f32[4,256]{1,0:T(4,128)}', space=vmem, size = 0x1000, scoped, tag = 'scratch operand']
  %s0 = inlined_call_operand.vmem [shape: f32[4,512], index: 0, kind: input, shape index: {}]
  %s1 = inlined_call_operand.vmem [shape: f32[4,4], index: 1, kind: input, shape index: {}]
  %s2 = inlined_call_operand.vmem [shape: f32[4,1], index: 2, kind: input, shape index: {}]
  %s3 = inlined_call_operand.vmem [shape: bf16[9,32,2], index: 3, kind: input, shape index: {}]
  %s4 = inlined_call_operand.vmem [shape: f32[32,1], index: 4, kind: input, shape index: {}]
  %s5 = inlined_call_operand.vmem [shape: bf16[32,32], index: 5, kind: input, shape index: {}]
  %s6 = inlined_call_operand.vmem [shape: f32[32,1], index: 6, kind: input, shape index: {}]
  %s7 = inlined_call_operand.vmem [shape: bf16[9,4,32], index: 7, kind: input, shape index: {}]
  %s8 = inlined_call_operand.vmem [shape: f32[4,1], index: 8, kind: input, shape index: {}]
  %s9 = inlined_call_operand.vmem [shape: f32[9,256], index: 9, kind: input, shape index: {}]
  %s10 = inlined_call_operand.hbm [shape: f32[4,512], index: 10, kind: output, shape index: {0}]
  %s11 = inlined_call_operand.hbm [shape: f32[1,512], index: 11, kind: output, shape index: {1}]
  %12 = xla_tuple %s10, %s11
  %s13 = sld [smem:[#allocation0]]
  $region81: #{tpu_custom_call.1} parent=0
    _
  %s15 = ssub.s32 1, %s13
  %s16 = scalar_select 0, %s15, %s13
  $region1: #{tpu_custom_call.1} parent=0
    #allocation6 [shape = 'u8[8192]{0}', space=vmem, size = 0x2000, scoped, tag = 'output window, operand 0']
    #allocation7 [shape = 's32[2]{0}', space=sflag, size = 0x8, scoped, tag = 'scoped memory for tpu_custom_call.1']
    #allocation8 [shape = 'u8[2048]{0}', space=vmem, size = 0x800, scoped, tag = 'output window, operand 1']
    #allocation9 [shape = 's32[2]{0}', space=sflag, size = 0x8, scoped, tag = 'scoped memory for tpu_custom_call.1']
    %17 = vsyncpa [#allocation7], 0
    %s18 = scalar_lea.sflag [#allocation7], 1
    %19 = vsyncpa %s18, 0
    %20 = vsyncpa [#allocation9], 0
    %s21 = scalar_lea.sflag [#allocation9], 1
    %22 = vsyncpa %s21, 0
    loop: start=0, step=1, limit=4
    $region2: #{tpu_custom_call.1} parent=1 // loop_pre_header
      _
    $region3: #{tpu_custom_call.1} parent=1 // loop_header
      %s24 = sphi 0, %s28
      %p25 = scmp.ge.s32.totalorder %s24, 4
      %s34 = sphi 0, %s36
      %s37 = sphi 0, %s34
      %s38 = sphi 0, %s37
      %s54 = sphi 0, %s38
      %s58 = sphi 0, %s58
      %s60 = sphi 0, %s58
      %s61 = sphi 0, %s60
      %s75 = sphi 0, %s61
      %s79 = sphi 0, %s79
      %s81 = sphi 0, %s79
      %s82 = sphi 0, %s81
      %s96 = sphi 0, %s82
      %s100 = sphi 0, %s100
      %s102 = sphi 0, %s100
      %s103 = sphi 0, %s102
      %s117 = sphi 0, %s103
      %s121 = sphi 0, %s121
      %s123 = sphi 0, %s121
      %s124 = sphi 0, %s123
      %s138 = sphi 0, %s124
      %s142 = sphi 0, %s142
      %s144 = sphi 0, %s142
      %s145 = sphi 0, %s144
      %s159 = sphi 0, %s145
      %s163 = sphi 0, %s163
      %s165 = sphi 0, %s163
      %s166 = sphi 0, %s165
      %s180 = sphi 0, %s166
      %s184 = sphi 0, %s184
      %s186 = sphi 0, %s184
      %s187 = sphi 0, %s186
      %s201 = sphi 0, %s187
      %s205 = sphi 0, %s205
      %s207 = sphi 0, %s205
      %s208 = sphi 0, %s207
      %s222 = sphi 0, %s208
      %s226 = sphi 0, %s226
      %s228 = sphi 0, %s226
      %s229 = sphi 0, %s228
      %s243 = sphi 0, %s229
      %s249 = sphi 0, %s251
      %s252 = sphi 0, %s249
      %s253 = sphi 0, %s252
      %s269 = sphi 0, %s253
      %s275 = sphi 0, %s277
      %s278 = sphi 0, %s275
      %s279 = sphi 0, %s278
      %s295 = sphi 0, %s279
    $region4: #{tpu_custom_call.1} parent=1 // loop_header_branch
      %27 = sbr.rel (%p25) target = $region8
    $region5: #{tpu_custom_call.1} parent=1 // loop_body
      %s29 = ssub.s32 %s24, 1
      %s30 = ssub.s32 %s24, 2
      %s31 = sadd.s32 %s24, 1
      %s32 = ssub.s32 %s24, %s31
      %p33 = scmp.eq.s32.totalorder %s32, 0
      %s35 = sadd.s32 %s34, 1
      %s36 = scalar_select %p33, %s34, %s35
      %p39 = pneg %p33
      %p40 = scmp.eq.s32.totalorder %s24, 1
      %p41 = por %p39, %p40
      %p42 = scmp.ne.s32.totalorder %s34, %s37
      %p43 = scmp.eq.s32.totalorder %s24, 0
      %p44 = por %p42, %p43
      %p45 = scmp.ne.s32.totalorder %s34, %s37
      %p46 = scmp.eq.s32.totalorder %s29, 1
      %p47 = por %p45, %p46
      %p48 = scmp.ne.s32.totalorder %s37, %s38
      %p49 = scmp.eq.s32.totalorder %s29, 0
      %p50 = por %p48, %p49
      %p51 = scmp.ne.s32.totalorder %s37, %s38
      %p52 = scmp.eq.s32.totalorder %s30, 1
      %p53 = por %p51, %p52
      %p55 = scmp.ne.s32.totalorder %s38, %s54
      %p56 = scmp.eq.s32.totalorder %s30, 0
      %p57 = por %p55, %p56
      %s59 = sadd.s32 %s58, 1
      %p62 = scmp.eq.s32.totalorder %s24, 1
      %p63 = scmp.ne.s32.totalorder %s58, %s60
      %p64 = scmp.eq.s32.totalorder %s24, 0
      %p65 = por %p63, %p64
      %p66 = scmp.ne.s32.totalorder %s58, %s60
      %p67 = scmp.eq.s32.totalorder %s29, 1
      %p68 = por %p66, %p67
      %p69 = scmp.ne.s32.totalorder %s60, %s61
      %p70 = scmp.eq.s32.totalorder %s29, 0
      %p71 = por %p69, %p70
      %p72 = scmp.ne.s32.totalorder %s60, %s61
      %p73 = scmp.eq.s32.totalorder %s30, 1
      %p74 = por %p72, %p73
      %p76 = scmp.ne.s32.totalorder %s61, %s75
      %p77 = scmp.eq.s32.totalorder %s30, 0
      %p78 = por %p76, %p77
      %s80 = sadd.s32 %s79, 1
      %p83 = scmp.eq.s32.totalorder %s24, 1
      %p84 = scmp.ne.s32.totalorder %s79, %s81
      %p85 = scmp.eq.s32.totalorder %s24, 0
      %p86 = por %p84, %p85
      %p87 = scmp.ne.s32.totalorder %s79, %s81
      %p88 = scmp.eq.s32.totalorder %s29, 1
      %p89 = por %p87, %p88
      %p90 = scmp.ne.s32.totalorder %s81, %s82
      %p91 = scmp.eq.s32.totalorder %s29, 0
      %p92 = por %p90, %p91
      %p93 = scmp.ne.s32.totalorder %s81, %s82
      %p94 = scmp.eq.s32.totalorder %s30, 1
      %p95 = por %p93, %p94
      %p97 = scmp.ne.s32.totalorder %s82, %s96
      %p98 = scmp.eq.s32.totalorder %s30, 0
      %p99 = por %p97, %p98
      %s101 = sadd.s32 %s100, 1
      %p104 = scmp.eq.s32.totalorder %s24, 1
      %p105 = scmp.ne.s32.totalorder %s100, %s102
      %p106 = scmp.eq.s32.totalorder %s24, 0
      %p107 = por %p105, %p106
      %p108 = scmp.ne.s32.totalorder %s100, %s102
      %p109 = scmp.eq.s32.totalorder %s29, 1
      %p110 = por %p108, %p109
      %p111 = scmp.ne.s32.totalorder %s102, %s103
      %p112 = scmp.eq.s32.totalorder %s29, 0
      %p113 = por %p111, %p112
      %p114 = scmp.ne.s32.totalorder %s102, %s103
      %p115 = scmp.eq.s32.totalorder %s30, 1
      %p116 = por %p114, %p115
      %p118 = scmp.ne.s32.totalorder %s103, %s117
      %p119 = scmp.eq.s32.totalorder %s30, 0
      %p120 = por %p118, %p119
      %s122 = sadd.s32 %s121, 1
      %p125 = scmp.eq.s32.totalorder %s24, 1
      %p126 = scmp.ne.s32.totalorder %s121, %s123
      %p127 = scmp.eq.s32.totalorder %s24, 0
      %p128 = por %p126, %p127
      %p129 = scmp.ne.s32.totalorder %s121, %s123
      %p130 = scmp.eq.s32.totalorder %s29, 1
      %p131 = por %p129, %p130
      %p132 = scmp.ne.s32.totalorder %s123, %s124
      %p133 = scmp.eq.s32.totalorder %s29, 0
      %p134 = por %p132, %p133
      %p135 = scmp.ne.s32.totalorder %s123, %s124
      %p136 = scmp.eq.s32.totalorder %s30, 1
      %p137 = por %p135, %p136
      %p139 = scmp.ne.s32.totalorder %s124, %s138
      %p140 = scmp.eq.s32.totalorder %s30, 0
      %p141 = por %p139, %p140
      %s143 = sadd.s32 %s142, 1
      %p146 = scmp.eq.s32.totalorder %s24, 1
      %p147 = scmp.ne.s32.totalorder %s142, %s144
      %p148 = scmp.eq.s32.totalorder %s24, 0
      %p149 = por %p147, %p148
      %p150 = scmp.ne.s32.totalorder %s142, %s144
      %p151 = scmp.eq.s32.totalorder %s29, 1
      %p152 = por %p150, %p151
      %p153 = scmp.ne.s32.totalorder %s144, %s145
      %p154 = scmp.eq.s32.totalorder %s29, 0
      %p155 = por %p153, %p154
      %p156 = scmp.ne.s32.totalorder %s144, %s145
      %p157 = scmp.eq.s32.totalorder %s30, 1
      %p158 = por %p156, %p157
      %p160 = scmp.ne.s32.totalorder %s145, %s159
      %p161 = scmp.eq.s32.totalorder %s30, 0
      %p162 = por %p160, %p161
      %s164 = sadd.s32 %s163, 1
      %p167 = scmp.eq.s32.totalorder %s24, 1
      %p168 = scmp.ne.s32.totalorder %s163, %s165
      %p169 = scmp.eq.s32.totalorder %s24, 0
      %p170 = por %p168, %p169
      %p171 = scmp.ne.s32.totalorder %s163, %s165
      %p172 = scmp.eq.s32.totalorder %s29, 1
      %p173 = por %p171, %p172
      %p174 = scmp.ne.s32.totalorder %s165, %s166
      %p175 = scmp.eq.s32.totalorder %s29, 0
      %p176 = por %p174, %p175
      %p177 = scmp.ne.s32.totalorder %s165, %s166
      %p178 = scmp.eq.s32.totalorder %s30, 1
      %p179 = por %p177, %p178
      %p181 = scmp.ne.s32.totalorder %s166, %s180
      %p182 = scmp.eq.s32.totalorder %s30, 0
      %p183 = por %p181, %p182
      %s185 = sadd.s32 %s184, 1
      %p188 = scmp.eq.s32.totalorder %s24, 1
      %p189 = scmp.ne.s32.totalorder %s184, %s186
      %p190 = scmp.eq.s32.totalorder %s24, 0
      %p191 = por %p189, %p190
      %p192 = scmp.ne.s32.totalorder %s184, %s186
      %p193 = scmp.eq.s32.totalorder %s29, 1
      %p194 = por %p192, %p193
      %p195 = scmp.ne.s32.totalorder %s186, %s187
      %p196 = scmp.eq.s32.totalorder %s29, 0
      %p197 = por %p195, %p196
      %p198 = scmp.ne.s32.totalorder %s186, %s187
      %p199 = scmp.eq.s32.totalorder %s30, 1
      %p200 = por %p198, %p199
      %p202 = scmp.ne.s32.totalorder %s187, %s201
      %p203 = scmp.eq.s32.totalorder %s30, 0
      %p204 = por %p202, %p203
      %s206 = sadd.s32 %s205, 1
      %p209 = scmp.eq.s32.totalorder %s24, 1
      %p210 = scmp.ne.s32.totalorder %s205, %s207
      %p211 = scmp.eq.s32.totalorder %s24, 0
      %p212 = por %p210, %p211
      %p213 = scmp.ne.s32.totalorder %s205, %s207
      %p214 = scmp.eq.s32.totalorder %s29, 1
      %p215 = por %p213, %p214
      %p216 = scmp.ne.s32.totalorder %s207, %s208
      %p217 = scmp.eq.s32.totalorder %s29, 0
      %p218 = por %p216, %p217
      %p219 = scmp.ne.s32.totalorder %s207, %s208
      %p220 = scmp.eq.s32.totalorder %s30, 1
      %p221 = por %p219, %p220
      %p223 = scmp.ne.s32.totalorder %s208, %s222
      %p224 = scmp.eq.s32.totalorder %s30, 0
      %p225 = por %p223, %p224
      %s227 = sadd.s32 %s226, 1
      %p230 = scmp.eq.s32.totalorder %s24, 1
      %p231 = scmp.ne.s32.totalorder %s226, %s228
      %p232 = scmp.eq.s32.totalorder %s24, 0
      %p233 = por %p231, %p232
      %p234 = scmp.ne.s32.totalorder %s226, %s228
      %p235 = scmp.eq.s32.totalorder %s29, 1
      %p236 = por %p234, %p235
      %p237 = scmp.ne.s32.totalorder %s228, %s229
      %p238 = scmp.eq.s32.totalorder %s29, 0
      %p239 = por %p237, %p238
      %p240 = scmp.ne.s32.totalorder %s228, %s229
      %p241 = scmp.eq.s32.totalorder %s30, 1
      %p242 = por %p240, %p241
      %p244 = scmp.ne.s32.totalorder %s229, %s243
      %p245 = scmp.eq.s32.totalorder %s30, 0
      %p246 = por %p244, %p245
      %s247 = ssub.s32 %s24, %s31
      %p248 = scmp.eq.s32.totalorder %s247, 0
      %s250 = sadd.s32 %s249, 1
      %s251 = scalar_select %p248, %s249, %s250
      %p254 = pneg %p248
      %p255 = scmp.eq.s32.totalorder %s24, 1
      %p256 = por %p254, %p255
      %p257 = scmp.ne.s32.totalorder %s249, %s252
      %p258 = scmp.eq.s32.totalorder %s24, 0
      %p259 = por %p257, %p258
      %p260 = scmp.ne.s32.totalorder %s249, %s252
      %p261 = scmp.eq.s32.totalorder %s29, 1
      %p262 = por %p260, %p261
      %p263 = scmp.ne.s32.totalorder %s252, %s253
      %p264 = scmp.eq.s32.totalorder %s29, 0
      %p265 = por %p263, %p264
      %p266 = scmp.ne.s32.totalorder %s252, %s253
      %p267 = scmp.eq.s32.totalorder %s30, 1
      %p268 = por %p266, %p267
      %p270 = scmp.ne.s32.totalorder %s253, %s269
      %p271 = scmp.eq.s32.totalorder %s30, 0
      %p272 = por %p270, %p271
      %s273 = ssub.s32 %s24, %s31
      %p274 = scmp.eq.s32.totalorder %s273, 0
      %s276 = sadd.s32 %s275, 1
      %s277 = scalar_select %p274, %s275, %s276
      %p280 = pneg %p274
      %p281 = scmp.eq.s32.totalorder %s24, 1
      %p282 = por %p280, %p281
      %p283 = scmp.ne.s32.totalorder %s275, %s278
      %p284 = scmp.eq.s32.totalorder %s24, 0
      %p285 = por %p283, %p284
      %p286 = scmp.ne.s32.totalorder %s275, %s278
      %p287 = scmp.eq.s32.totalorder %s29, 1
      %p288 = por %p286, %p287
      %p289 = scmp.ne.s32.totalorder %s278, %s279
      %p290 = scmp.eq.s32.totalorder %s29, 0
      %p291 = por %p289, %p290
      %p292 = scmp.ne.s32.totalorder %s278, %s279
      %p293 = scmp.eq.s32.totalorder %s30, 1
      %p294 = por %p292, %p293
      %p296 = scmp.ne.s32.totalorder %s279, %s295
      %p297 = scmp.eq.s32.totalorder %s30, 0
      %p298 = por %p296, %p297
      %p299 = scmp.le.s32.totalorder 1, %s24
      %p300 = scmp.lt.s32.totalorder %s24, 3
      %p301 = pnand %p299, %p300
      %p302 = pneg %p301
      // Predicated region
      $region9: #{tpu_custom_call.1} parent=5 // pred_check
        _
      $region10: #{tpu_custom_call.1} parent=5 // pred_check_branch
        %304 = sbr.rel (%p301) target = $region12
      $region11: #{tpu_custom_call.1} parent=5 // pred_region
        %s305 = ssub.s32 %s24, 1
        // Predicated region
        $region13: #{tpu_custom_call.1} parent=11 // pred_check
          %p306 = pneg %p71
        $region14: #{tpu_custom_call.1} parent=11 // pred_check_branch
          %308 = sbr.rel (%p306) target = $region16
        $region15: #{tpu_custom_call.1} parent=11 // pred_region
          _
        $region16: #{tpu_custom_call.1} parent=11 // pred_fallthru
          _
        // Predicated region
        $region17: #{tpu_custom_call.1} parent=11 // pred_check
          %p309 = pneg %p92
        $region18: #{tpu_custom_call.1} parent=11 // pred_check_branch
          %311 = sbr.rel (%p309) target = $region20
        $region19: #{tpu_custom_call.1} parent=11 // pred_region
          _
        $region20: #{tpu_custom_call.1} parent=11 // pred_fallthru
          _
        // Predicated region
        $region21: #{tpu_custom_call.1} parent=11 // pred_check
          %p312 = pneg %p113
        $region22: #{tpu_custom_call.1} parent=11 // pred_check_branch
          %314 = sbr.rel (%p312) target = $region24
        $region23: #{tpu_custom_call.1} parent=11 // pred_region
          _
        $region24: #{tpu_custom_call.1} parent=11 // pred_fallthru
          _
        // Predicated region
        $region25: #{tpu_custom_call.1} parent=11 // pred_check
          %p315 = pneg %p134
        $region26: #{tpu_custom_call.1} parent=11 // pred_check_branch
          %317 = sbr.rel (%p315) target = $region28
        $region27: #{tpu_custom_call.1} parent=11 // pred_region
          _
        $region28: #{tpu_custom_call.1} parent=11 // pred_fallthru
          _
        // Predicated region
        $region29: #{tpu_custom_call.1} parent=11 // pred_check
          %p318 = pneg %p155
        $region30: #{tpu_custom_call.1} parent=11 // pred_check_branch
          %320 = sbr.rel (%p318) target = $region32
        $region31: #{tpu_custom_call.1} parent=11 // pred_region
          _
        $region32: #{tpu_custom_call.1} parent=11 // pred_fallthru
          _
        // Predicated region
        $region33: #{tpu_custom_call.1} parent=11 // pred_check
          %p321 = pneg %p176
        $region34: #{tpu_custom_call.1} parent=11 // pred_check_branch
          %323 = sbr.rel (%p321) target = $region36
        $region35: #{tpu_custom_call.1} parent=11 // pred_region
          _
        $region36: #{tpu_custom_call.1} parent=11 // pred_fallthru
          _
        // Predicated region
        $region37: #{tpu_custom_call.1} parent=11 // pred_check
          %p324 = pneg %p197
        $region38: #{tpu_custom_call.1} parent=11 // pred_check_branch
          %326 = sbr.rel (%p324) target = $region40
        $region39: #{tpu_custom_call.1} parent=11 // pred_region
          _
        $region40: #{tpu_custom_call.1} parent=11 // pred_fallthru
          _
        // Predicated region
        $region41: #{tpu_custom_call.1} parent=11 // pred_check
          %p327 = pneg %p218
        $region42: #{tpu_custom_call.1} parent=11 // pred_check_branch
          %329 = sbr.rel (%p327) target = $region44
        $region43: #{tpu_custom_call.1} parent=11 // pred_region
          _
        $region44: #{tpu_custom_call.1} parent=11 // pred_fallthru
          _
        // Predicated region
        $region45: #{tpu_custom_call.1} parent=11 // pred_check
          %p330 = pneg %p239
        $region46: #{tpu_custom_call.1} parent=11 // pred_check_branch
          %332 = sbr.rel (%p330) target = $region48
        $region47: #{tpu_custom_call.1} parent=11 // pred_region
          _
        $region48: #{tpu_custom_call.1} parent=11 // pred_fallthru
          _
      $region12: #{tpu_custom_call.1} parent=5 // pred_fallthru
        _
      %p333 = scmp.lt.s32.totalorder %s24, 2
      // Predicated region
      $region49: #{tpu_custom_call.1} parent=5 // pred_check
        %p334 = pneg %p333
      $region50: #{tpu_custom_call.1} parent=5 // pred_check_branch
        %336 = sbr.rel (%p334) target = $region52
      $region51: #{tpu_custom_call.1} parent=5 // pred_region
        // Predicated region
        $region53: #{tpu_custom_call.1} parent=51 // pred_check
          %p337 = pneg %p44
        $region54: #{tpu_custom_call.1} parent=51 // pred_check_branch
          %339 = sbr.rel (%p337) target = $region56
        $region55: #{tpu_custom_call.1} parent=51 // pred_region
          %s340 = smul.u32 2, %s24
          %p341 = scmp.lt.s32.totalorder %s340, 3
          %s342 = scalar_select %p341, %s340, 3
          %s343 = smul.addr %s342, 4
          %s344 = scalar_lea.vmem %s0, %s343
          %s345 = smul.u32 2, %s24
        $region56: #{tpu_custom_call.1} parent=51 // pred_fallthru
          _
      $region52: #{tpu_custom_call.1} parent=5 // pred_fallthru
        _
      %p346 = scmp.le.s32.totalorder 1, %s24
      %p347 = scmp.lt.s32.totalorder %s24, 3
      %p348 = pnand %p346, %p347
      %p349 = pneg %p348
      // Predicated region
      $region57: #{tpu_custom_call.1} parent=5 // pred_check
        _
      $region58: #{tpu_custom_call.1} parent=5 // pred_check_branch
        %351 = sbr.rel (%p348) target = $region60
      $region59: #{tpu_custom_call.1} parent=5 // pred_region
        %s352 = ssub.s32 %s24, 1
        %s353 = smul.u32 2, %s29
        %p354 = scmp.lt.s32.totalorder %s353, 3
        %s355 = scalar_select %p354, %s353, 3
        %s356 = smul.addr %s355, 4
        %s357 = scalar_lea.vmem %s0, %s356
        %p358 = pneg %p50
        %p359 = pneg %p47
        %p360 = pneg %p71
        %p361 = pneg %p68
        %p362 = pneg %p92
        %p363 = pneg %p89
        %p364 = pneg %p113
        %p365 = pneg %p110
        %p366 = pneg %p134
        %p367 = pneg %p131
        %p368 = pneg %p155
        %p369 = pneg %p152
        %p370 = pneg %p176
        %p371 = pneg %p173
        %p372 = pneg %p197
        %p373 = pneg %p194
        %p374 = pneg %p218
        %p375 = pneg %p215
        %p376 = pneg %p239
        %p377 = pneg %p236
        %p378 = pneg %p265
        %p379 = pneg %p262
        %s380 = sand.u32 %s252, 1
        %s381 = scalar_lea.sflag [#allocation7], %s380
        %s382 = sand.u32 %s252, 1
        %s383 = smul.addr %s382, 8
        %s384 = scalar_lea.vmem [#allocation6], %s383
        %p385 = pneg %p291
        %p386 = pneg %p288
        %s387 = sand.u32 %s278, 1
        %s388 = scalar_lea.sflag [#allocation9], %s387
        %s389 = sand.u32 %s278, 1
        %s390 = smul.addr %s389, 2
        %s391 = scalar_lea.vmem [#allocation8], %s390
        %s392 = smul.u32 2, %s29
        %p393 = scmp.lt.s32.totalorder %s392, 3
        %s394 = scalar_select %p393, %s392, 3
        %s395 = smul.addr %s394, 4
        %s396 = scalar_lea.vmem %s0, %s395
        %s397 = smul.u32 2, %s29
        %s398 = smul.u32 2, %s29
        %s399 = smul.u32 2, %s29
        %v401 = vld [vmem:[%s1] sm:$0xf]
        %v402 = vld [vmem:[%s396] sm:$0xff]
        %v403 = vld [vmem:[%s2] sm:$0xf]
        %405 = vset.pattern.permute.xlu0 0
        %406 = vperm.xlu0 %405, %v403
        %v407 = vpop.permute.xlu0 %406
        %v410 = vcombine.high %v402, %v402
        %vm411 = vcmask 31744
        %v413 = vsel %vm411, %v401, 0
        %vm415 = vcmask 1043456
        %v416 = vsel %vm415, %v402, 0
        %v418 = vsel %vm415, %v410, 0
        %420 = vmatprep.subr.mxu0 %v418
        %421 = vmatpush1.msra.mxu0 %v416
        %422 = vmatprep.subr.mxu0 0.0
        %423 = vmatpush1.msra.mxu0 0.0
        %424 = vmatprep.subr.mxu0 0.0
        %425 = vmatpush1.msra.mxu0 0.0
        %426 = vmatprep.subr.mxu0 0.0
        %427 = vmatpush1.msra.mxu0 0.0
        %428 = vmatprep.subr.mxu0 0.0
        %429 = vmatpush1.msra.mxu0 0.0
        %430 = vmatprep.subr.mxu0 0.0
        %431 = vmatpush1.msra.mxu0 0.0
        %432 = vmatprep.subr.mxu0 0.0
        %433 = vmatpush1.msra.mxu0 0.0
        %434 = vmatprep.subr.mxu0 0.0
        %435 = vmatpush1.msra.mxu0 0.0
        %436 = vmatprep.subr.mxu0 0.0
        %437 = vmatpush1.msra.mxu0 0.0
        %438 = vmatprep.subr.mxu0 0.0
        %439 = vmatpush1.msra.mxu0 0.0
        %440 = vmatprep.subr.mxu0 0.0
        %441 = vmatpush1.msra.mxu0 0.0
        %442 = vmatprep.subr.mxu0 0.0
        %443 = vmatpush1.msra.mxu0 0.0
        %444 = vmatprep.subr.mxu0 0.0
        %445 = vmatpush1.msra.mxu0 0.0
        %446 = vmatprep.subr.mxu0 0.0
        %447 = vmatpush1.msra.mxu0 0.0
        %448 = vmatprep.subr.mxu0 0.0
        %449 = vmatpush1.msra.mxu0 0.0
        %450 = vmatprep.subr.mxu0 0.0
        %451 = vmatpush1.msra.mxu0 0.0
        %452 = vmatprep.subr.mxu0 0.0
        %453 = vmatpush1.msra.mxu0 0.0
        %454 = vmatprep.subr.mxu0 0.0
        %455 = vmatpush1.msra.mxu0 0.0
        %456 = vmatprep.subr.mxu0 0.0
        %457 = vmatpush1.msra.mxu0 0.0
        %458 = vmatprep.subr.mxu0 0.0
        %459 = vmatpush1.msra.mxu0 0.0
        %460 = vmatprep.subr.mxu0 0.0
        %461 = vmatpush1.msra.mxu0 0.0
        %462 = vmatprep.subr.mxu0 0.0
        %463 = vmatpush1.msra.mxu0 0.0
        %464 = vmatprep.subr.mxu0 0.0
        %465 = vmatpush1.msra.mxu0 0.0
        %466 = vmatprep.subr.mxu0 0.0
        %467 = vmatpush1.msra.mxu0 0.0
        %468 = vmatprep.subr.mxu0 0.0
        %469 = vmatpush1.msra.mxu0 0.0
        %470 = vmatprep.subr.mxu0 0.0
        %471 = vmatpush1.msra.mxu0 0.0
        %472 = vmatprep.subr.mxu0 0.0
        %473 = vmatpush1.msra.mxu0 0.0
        %474 = vmatprep.subr.mxu0 0.0
        %475 = vmatpush1.msra.mxu0 0.0
        %476 = vmatprep.subr.mxu0 0.0
        %477 = vmatpush1.msra.mxu0 0.0
        %478 = vmatprep.subr.mxu0 0.0
        %479 = vmatpush1.msra.mxu0 0.0
        %480 = vmatprep.subr.mxu0 0.0
        %481 = vmatpush1.msra.mxu0 0.0
        %482 = vmatprep.subr.mxu0 0.0
        %483 = vmatpush1.msra.mxu0 0.0
        %484 = vmatprep.mubr.f32.mxu0 0.0
        %485 = vmatmul.mubr.f32.gmra.mrb[0].mxu0 %v413
        %v486 = vpop.f32.mrb[0].mxu0
        %v487 = vadd.f32 %v407, %v486
        %v488 = vpop.f32.mrb[0].mxu0
        %v489 = vadd.f32 %v407, %v488
        %490 = vdwg.mxu0
        %v493 = vcombine.low %v487, %v489
        %495 = vst [vmem:[%s384] sm:$0xff] %v493
        %496 = vst [vmem:[#allocation2] sm:$0xff] 0.0
        %497 = vst [vmem:[#allocation2 + $0x8] sm:$0xff] 0.0
        %498 = vst [vmem:[#allocation2 + $0x10] sm:$0xff] 0.0
        %499 = vst [vmem:[#allocation2 + $0x18] sm:$0xff] 0.0
        %500 = vst [vmem:[#allocation2 + $0x20] sm:$0xff] 0.0
        %501 = vst [vmem:[#allocation2 + $0x28] sm:$0xff] 0.0
        %502 = vst [vmem:[#allocation2 + $0x30] sm:$0xff] 0.0
        %503 = vst [vmem:[#allocation2 + $0x38] sm:$0xff] 0.0
        %v504 = vld [vmem:[%s384] sm:$0x33]
        %v506 = vcombine.high %v504, %v504
        %508 = vrot.lane.b32.xlu0 %v504, 17
        %v509 = vpop.permute.xlu0 %508
        %510 = vrot.lane.b32.xlu0 %v506, 17
        %v511 = vpop.permute.xlu0 %510
        %v512 = vlaneseq
        %v513 = vand.u32 %v512, 127
        %vm514 = vcmp.lt.s32.totalorder %v513, 17
        %v515 = vsel %vm514, %v509, %v511
        %v516 = vsel %vm514, %v511, %v509
        %v517 = vld [vmem:[%s9] ss:$8 sm:$0x3]
        %v519 = vlaneseq
        %v520 = vshrl.u32 %v519, 7
        %v521 = vsub.s32 0, %v520
        %v522 = vrot.slane %v517, %v521
        %v523 = vlaneseq
        %v524 = vshrl.u32 %v523, 7
        %v525 = vsub.s32 1, %v524
        %v526 = vrot.slane %v517, %v525
        %v529 = vmul.f32 %v516, %v522
        %v530 = vmul.f32 %v515, %v526
        %v531 = vld [vmem:[#allocation2] sm:$0xff]
        %v532 = vld [vmem:[#allocation2 + $0x8] sm:$0xff]
        %v533 = vld [vmem:[#allocation2 + $0x10] sm:$0xff]
        %v534 = vld [vmem:[#allocation2 + $0x18] sm:$0xff]
        %v535 = vld [vmem:[#allocation2 + $0x20] sm:$0xff]
        %v536 = vld [vmem:[#allocation2 + $0x28] sm:$0xff]
        %v537 = vld [vmem:[#allocation2 + $0x30] sm:$0xff]
        %v538 = vld [vmem:[#allocation2 + $0x38] sm:$0xff]
        %v539 = vld [vmem:[%s3] sm:$0xf]
        %v540 = vld [vmem:[%s3 + $0x4] sm:$0xf]
        %v541 = vld [vmem:[%s3 + $0x8] sm:$0xf]
        %v542 = vld [vmem:[%s3 + $0xc] sm:$0xf]
        %v543 = vpack.c.bf16 %v529, %v529
        %v544 = vpack.c.bf16 %v530, %v530
        %v549 = vunpack.c.l.b16 %v539
        %v550 = vunpack.c.l.b16 %v540
        %v551 = vunpack.c.l.b16 %v541
        %v552 = vunpack.c.l.b16 %v542
        %v553 = vpack.c.b16 %v550, %v549
        %v554 = vpack.c.b16 %v552, %v551
        %vm555 = vcmask 15360
        %v557 = vsel %vm555, %v553, 0
        %v560 = vsel %vm555, %v554, 0
        %vm562 = vcmask 1040384
        %v564 = vsel %vm562, %v543, 0
        %v567 = vsel %vm562, %v544, 0
        %569 = vmatprep.subr.bf16.mxu0 %v567
        %570 = vmatpush1.bf16.msra.mxu0 %v564
        %571 = vmatprep.subr.bf16.mxu0 0
        %572 = vmatpush1.bf16.msra.mxu0 0
        %573 = vmatprep.subr.bf16.mxu0 0
        %574 = vmatpush1.bf16.msra.mxu0 0
        %575 = vmatprep.subr.bf16.mxu0 0
        %576 = vmatpush1.bf16.msra.mxu0 0
        %577 = vmatprep.subr.bf16.mxu0 0
        %578 = vmatpush1.bf16.msra.mxu0 0
        %579 = vmatprep.subr.bf16.mxu0 0
        %580 = vmatpush1.bf16.msra.mxu0 0
        %581 = vmatprep.subr.bf16.mxu0 0
        %582 = vmatpush1.bf16.msra.mxu0 0
        %583 = vmatprep.subr.bf16.mxu0 0
        %584 = vmatpush1.bf16.msra.mxu0 0
        %585 = vmatprep.subr.bf16.mxu0 0
        %586 = vmatpush1.bf16.msra.mxu0 0
        %587 = vmatprep.subr.bf16.mxu0 0
        %588 = vmatpush1.bf16.msra.mxu0 0
        %589 = vmatprep.subr.bf16.mxu0 0
        %590 = vmatpush1.bf16.msra.mxu0 0
        %591 = vmatprep.subr.bf16.mxu0 0
        %592 = vmatpush1.bf16.msra.mxu0 0
        %593 = vmatprep.subr.bf16.mxu0 0
        %594 = vmatpush1.bf16.msra.mxu0 0
        %595 = vmatprep.subr.bf16.mxu0 0
        %596 = vmatpush1.bf16.msra.mxu0 0
        %597 = vmatprep.subr.bf16.mxu0 0
        %598 = vmatpush1.bf16.msra.mxu0 0
        %599 = vmatprep.subr.bf16.mxu0 0
        %600 = vmatpush1.bf16.msra.mxu0 0
        %601 = vmatprep.mubr.bf16.mxu0 0
        %602 = vmatmul.mubr.bf16.gmra.mrb[0].mxu0 %v557
        %v603 = vpop.f32.mrb[0].mxu0
        %v604 = vadd.f32 0.0, %v603
        %v605 = vpop.f32.mrb[0].mxu0
        %v606 = vadd.f32 0.0, %v605
        %v607 = vpop.f32.mrb[0].mxu0
        %v608 = vadd.f32 0.0, %v607
        %v609 = vpop.f32.mrb[0].mxu0
        %v610 = vadd.f32 0.0, %v609
        %611 = vmatprep.mubr.bf16.mxu0 0
        %612 = vmatmul.mubr.bf16.gmra.mrb[0].mxu0 %v560
        %v613 = vpop.f32.mrb[0].mxu0
        %v614 = vadd.f32 0.0, %v613
        %v615 = vpop.f32.mrb[0].mxu0
        %v616 = vadd.f32 0.0, %v615
        %v617 = vpop.f32.mrb[0].mxu0
        %v618 = vadd.f32 0.0, %v617
        %v619 = vpop.f32.mrb[0].mxu0
        %v620 = vadd.f32 0.0, %v619
        %621 = vdwg.mxu0
        %v622 = vadd.f32 %v531, %v604
        %v623 = vadd.f32 %v532, %v606
        %v624 = vadd.f32 %v533, %v608
        %v625 = vadd.f32 %v534, %v610
        %v626 = vadd.f32 %v535, %v614
        %v627 = vadd.f32 %v536, %v616
        %v628 = vadd.f32 %v537, %v618
        %v629 = vadd.f32 %v538, %v620
        %630 = vst [vmem:[#allocation2] sm:$0xff] %v622
        %631 = vst [vmem:[#allocation2 + $0x8] sm:$0xff] %v623
        %632 = vst [vmem:[#allocation2 + $0x10] sm:$0xff] %v624
        %633 = vst [vmem:[#allocation2 + $0x18] sm:$0xff] %v625
        %634 = vst [vmem:[#allocation2 + $0x20] sm:$0xff] %v626
        %635 = vst [vmem:[#allocation2 + $0x28] sm:$0xff] %v627
        %636 = vst [vmem:[#allocation2 + $0x30] sm:$0xff] %v628
        %637 = vst [vmem:[#allocation2 + $0x38] sm:$0xff] %v629
        %v638 = vld [vmem:[%s384] sm:$0x33]
        %v640 = vcombine.high %v638, %v638
        %642 = vrot.lane.b32.xlu0 %v638, 16
        %v643 = vpop.permute.xlu0 %642
        %644 = vrot.lane.b32.xlu0 %v640, 16
        %v645 = vpop.permute.xlu0 %644
        %vm646 = vcmp.lt.s32.totalorder %v513, 16
        %v647 = vsel %vm646, %v643, %v645
        %v648 = vsel %vm646, %v645, %v643
        %s649 = scalar_lea.vmem %s9, 1
        %v650 = vld [vmem:[%s649] ss:$8 sm:$0x3]
        %v652 = vlaneseq
        %v653 = vshrl.u32 %v652, 7
        %v654 = vsub.s32 0, %v653
        %v655 = vrot.slane %v650, %v654
        %v656 = vlaneseq
        %v657 = vshrl.u32 %v656, 7
        %v658 = vsub.s32 1, %v657
        %v659 = vrot.slane %v650, %v658
        %v662 = vmul.f32 %v648, %v655
        %v663 = vmul.f32 %v647, %v659
        %v664 = vld [vmem:[#allocation2] sm:$0xff]
        %v665 = vld [vmem:[#allocation2 + $0x8] sm:$0xff]
        %v666 = vld [vmem:[#allocation2 + $0x10] sm:$0xff]
        %v667 = vld [vmem:[#allocation2 + $0x18] sm:$0xff]
        %v668 = vld [vmem:[#allocation2 + $0x20] sm:$0xff]
        %v669 = vld [vmem:[#allocation2 + $0x28] sm:$0xff]
        %v670 = vld [vmem:[#allocation2 + $0x30] sm:$0xff]
        %v671 = vld [vmem:[#allocation2 + $0x38] sm:$0xff]
        %s672 = scalar_lea.vmem %s3, 16
        %v673 = vld [vmem:[%s672] sm:$0xf]
        %v674 = vld [vmem:[%s672 + $0x4] sm:$0xf]
        %v675 = vld [vmem:[%s672 + $0x8] sm:$0xf]
        %v676 = vld [vmem:[%s672 + $0xc] sm:$0xf]
        %v677 = vpack.c.bf16 %v662, %v662
        %v678 = vpack.c.bf16 %v663, %v663
        %v683 = vunpack.c.l.b16 %v673
        %v684 = vunpack.c.l.b16 %v674
        %v685 = vunpack.c.l.b16 %v675
        %v686 = vunpack.c.l.b16 %v676
        %v687 = vpack.c.b16 %v684, %v683
        %v688 = vpack.c.b16 %v686, %v685
        %v690 = vsel %vm555, %v687, 0
        %v693 = vsel %vm555, %v688, 0
        %v696 = vsel %vm562, %v677, 0
        %v699 = vsel %vm562, %v678, 0
        %701 = vmatprep.subr.bf16.mxu0 %v699
        %702 = vmatpush1.bf16.msra.mxu0 %v696
        %703 = vmatprep.subr.bf16.mxu0 0
        %704 = vmatpush1.bf16.msra.mxu0 0
        %705 = vmatprep.subr.bf16.mxu0 0
        %706 = vmatpush1.bf16.msra.mxu0 0
        %707 = vmatprep.subr.bf16.mxu0 0
        %708 = vmatpush1.bf16.msra.mxu0 0
        %709 = vmatprep.subr.bf16.mxu0 0
        %710 = vmatpush1.bf16.msra.mxu0 0
        %711 = vmatprep.subr.bf16.mxu0 0
        %712 = vmatpush1.bf16.msra.mxu0 0
        %713 = vmatprep.subr.bf16.mxu0 0
        %714 = vmatpush1.bf16.msra.mxu0 0
        %715 = vmatprep.subr.bf16.mxu0 0
        %716 = vmatpush1.bf16.msra.mxu0 0
        %717 = vmatprep.subr.bf16.mxu0 0
        %718 = vmatpush1.bf16.msra.mxu0 0
        %719 = vmatprep.subr.bf16.mxu0 0
        %720 = vmatpush1.bf16.msra.mxu0 0
        %721 = vmatprep.subr.bf16.mxu0 0
        %722 = vmatpush1.bf16.msra.mxu0 0
        %723 = vmatprep.subr.bf16.mxu0 0
        %724 = vmatpush1.bf16.msra.mxu0 0
        %725 = vmatprep.subr.bf16.mxu0 0
        %726 = vmatpush1.bf16.msra.mxu0 0
        %727 = vmatprep.subr.bf16.mxu0 0
        %728 = vmatpush1.bf16.msra.mxu0 0
        %729 = vmatprep.subr.bf16.mxu0 0
        %730 = vmatpush1.bf16.msra.mxu0 0
        %731 = vmatprep.subr.bf16.mxu0 0
        %732 = vmatpush1.bf16.msra.mxu0 0
        %733 = vmatprep.mubr.bf16.mxu0 0
        %734 = vmatmul.mubr.bf16.gmra.mrb[0].mxu0 %v690
        %v735 = vpop.f32.mrb[0].mxu0
        %v736 = vadd.f32 0.0, %v735
        %v737 = vpop.f32.mrb[0].mxu0
        %v738 = vadd.f32 0.0, %v737
        %v739 = vpop.f32.mrb[0].mxu0
        %v740 = vadd.f32 0.0, %v739
        %v741 = vpop.f32.mrb[0].mxu0
        %v742 = vadd.f32 0.0, %v741
        %743 = vmatprep.mubr.bf16.mxu0 0
        %744 = vmatmul.mubr.bf16.gmra.mrb[0].mxu0 %v693
        %v745 = vpop.f32.mrb[0].mxu0
        %v746 = vadd.f32 0.0, %v745
        %v747 = vpop.f32.mrb[0].mxu0
        %v748 = vadd.f32 0.0, %v747
        %v749 = vpop.f32.mrb[0].mxu0
        %v750 = vadd.f32 0.0, %v749
        %v751 = vpop.f32.mrb[0].mxu0
        %v752 = vadd.f32 0.0, %v751
        %753 = vdwg.mxu0
        %v754 = vadd.f32 %v664, %v736
        %v755 = vadd.f32 %v665, %v738
        %v756 = vadd.f32 %v666, %v740
        %v757 = vadd.f32 %v667, %v742
        %v758 = vadd.f32 %v668, %v746
        %v759 = vadd.f32 %v669, %v748
        %v760 = vadd.f32 %v670, %v750
        %v761 = vadd.f32 %v671, %v752
        %762 = vst [vmem:[#allocation2] sm:$0xff] %v754
        %763 = vst [vmem:[#allocation2 + $0x8] sm:$0xff] %v755
        %764 = vst [vmem:[#allocation2 + $0x10] sm:$0xff] %v756
        %765 = vst [vmem:[#allocation2 + $0x18] sm:$0xff] %v757
        %766 = vst [vmem:[#allocation2 + $0x20] sm:$0xff] %v758
        %767 = vst [vmem:[#allocation2 + $0x28] sm:$0xff] %v759
        %768 = vst [vmem:[#allocation2 + $0x30] sm:$0xff] %v760
        %769 = vst [vmem:[#allocation2 + $0x38] sm:$0xff] %v761
        %v770 = vld [vmem:[%s384] sm:$0x33]
        %v772 = vcombine.high %v770, %v770
        %774 = vrot.lane.b32.xlu0 %v770, 15
        %v775 = vpop.permute.xlu0 %774
        %776 = vrot.lane.b32.xlu0 %v772, 15
        %v777 = vpop.permute.xlu0 %776
        %vm778 = vcmp.lt.s32.totalorder %v513, 15
        %v779 = vsel %vm778, %v775, %v777
        %v780 = vsel %vm778, %v777, %v775
        %s781 = scalar_lea.vmem %s9, 2
        %v782 = vld [vmem:[%s781] ss:$8 sm:$0x3]
        %v784 = vlaneseq
        %v785 = vshrl.u32 %v784, 7
        %v786 = vsub.s32 0, %v785
        %v787 = vrot.slane %v782, %v786
        %v788 = vlaneseq
        %v789 = vshrl.u32 %v788, 7
        %v790 = vsub.s32 1, %v789
        %v791 = vrot.slane %v782, %v790
        %v794 = vmul.f32 %v780, %v787
        %v795 = vmul.f32 %v779, %v791
        %v796 = vld [vmem:[#allocation2] sm:$0xff]
        %v797 = vld [vmem:[#allocation2 + $0x8] sm:$0xff]
        %v798 = vld [vmem:[#allocation2 + $0x10] sm:$0xff]
        %v799 = vld [vmem:[#allocation2 + $0x18] sm:$0xff]
        %v800 = vld [vmem:[#allocation2 + $0x20] sm:$0xff]
        %v801 = vld [vmem:[#allocation2 + $0x28] sm:$0xff]
        %v802 = vld [vmem:[#allocation2 + $0x30] sm:$0xff]
        %v803 = vld [vmem:[#allocation2 + $0x38] sm:$0xff]
        %s804 = scalar_lea.vmem %s3, 32
        %v805 = vld [vmem:[%s804] sm:$0xf]
        %v806 = vld [vmem:[%s804 + $0x4] sm:$0xf]
        %v807 = vld [vmem:[%s804 + $0x8] sm:$0xf]
        %v808 = vld [vmem:[%s804 + $0xc] sm:$0xf]
        %v809 = vpack.c.bf16 %v794, %v794
        %v810 = vpack.c.bf16 %v795, %v795
        %v815 = vunpack.c.l.b16 %v805
        %v816 = vunpack.c.l.b16 %v806
        %v817 = vunpack.c.l.b16 %v807
        %v818 = vunpack.c.l.b16 %v808
        %v819 = vpack.c.b16 %v816, %v815
        %v820 = vpack.c.b16 %v818, %v817
        %v822 = vsel %vm555, %v819, 0
        %v825 = vsel %vm555, %v820, 0
        %v828 = vsel %vm562, %v809, 0
        %v831 = vsel %vm562, %v810, 0
        %833 = vmatprep.subr.bf16.mxu0 %v831
        %834 = vmatpush1.bf16.msra.mxu0 %v828
        %835 = vmatprep.subr.bf16.mxu0 0
        %836 = vmatpush1.bf16.msra.mxu0 0
        %837 = vmatprep.subr.bf16.mxu0 0
        %838 = vmatpush1.bf16.msra.mxu0 0
        %839 = vmatprep.subr.bf16.mxu0 0
        %840 = vmatpush1.bf16.msra.mxu0 0
        %841 = vmatprep.subr.bf16.mxu0 0
        %842 = vmatpush1.bf16.msra.mxu0 0
        %843 = vmatprep.subr.bf16.mxu0 0
        %844 = vmatpush1.bf16.msra.mxu0 0
        %845 = vmatprep.subr.bf16.mxu0 0
        %846 = vmatpush1.bf16.msra.mxu0 0
        %847 = vmatprep.subr.bf16.mxu0 0
        %848 = vmatpush1.bf16.msra.mxu0 0
        %849 = vmatprep.subr.bf16.mxu0 0
        %850 = vmatpush1.bf16.msra.mxu0 0
        %851 = vmatprep.subr.bf16.mxu0 0
        %852 = vmatpush1.bf16.msra.mxu0 0
        %853 = vmatprep.subr.bf16.mxu0 0
        %854 = vmatpush1.bf16.msra.mxu0 0
        %855 = vmatprep.subr.bf16.mxu0 0
        %856 = vmatpush1.bf16.msra.mxu0 0
        %857 = vmatprep.subr.bf16.mxu0 0
        %858 = vmatpush1.bf16.msra.mxu0 0
        %859 = vmatprep.subr.bf16.mxu0 0
        %860 = vmatpush1.bf16.msra.mxu0 0
        %861 = vmatprep.subr.bf16.mxu0 0
        %862 = vmatpush1.bf16.msra.mxu0 0
        %863 = vmatprep.subr.bf16.mxu0 0
        %864 = vmatpush1.bf16.msra.mxu0 0
        %865 = vmatprep.mubr.bf16.mxu0 0
        %866 = vmatmul.mubr.bf16.gmra.mrb[0].mxu0 %v822
        %v867 = vpop.f32.mrb[0].mxu0
        %v868 = vadd.f32 0.0, %v867
        %v869 = vpop.f32.mrb[0].mxu0
        %v870 = vadd.f32 0.0, %v869
        %v871 = vpop.f32.mrb[0].mxu0
        %v872 = vadd.f32 0.0, %v871
        %v873 = vpop.f32.mrb[0].mxu0
        %v874 = vadd.f32 0.0, %v873
        %875 = vmatprep.mubr.bf16.mxu0 0
        %876 = vmatmul.mubr.bf16.gmra.mrb[0].mxu0 %v825
        %v877 = vpop.f32.mrb[0].mxu0
        %v878 = vadd.f32 0.0, %v877
        %v879 = vpop.f32.mrb[0].mxu0
        %v880 = vadd.f32 0.0, %v879
        %v881 = vpop.f32.mrb[0].mxu0
        %v882 = vadd.f32 0.0, %v881
        %v883 = vpop.f32.mrb[0].mxu0
        %v884 = vadd.f32 0.0, %v883
        %885 = vdwg.mxu0
        %v886 = vadd.f32 %v796, %v868
        %v887 = vadd.f32 %v797, %v870
        %v888 = vadd.f32 %v798, %v872
        %v889 = vadd.f32 %v799, %v874
        %v890 = vadd.f32 %v800, %v878
        %v891 = vadd.f32 %v801, %v880
        %v892 = vadd.f32 %v802, %v882
        %v893 = vadd.f32 %v803, %v884
        %894 = vst [vmem:[#allocation2] sm:$0xff] %v886
        %895 = vst [vmem:[#allocation2 + $0x8] sm:$0xff] %v887
        %896 = vst [vmem:[#allocation2 + $0x10] sm:$0xff] %v888
        %897 = vst [vmem:[#allocation2 + $0x18] sm:$0xff] %v889
        %898 = vst [vmem:[#allocation2 + $0x20] sm:$0xff] %v890
        %899 = vst [vmem:[#allocation2 + $0x28] sm:$0xff] %v891
        %900 = vst [vmem:[#allocation2 + $0x30] sm:$0xff] %v892
        %901 = vst [vmem:[#allocation2 + $0x38] sm:$0xff] %v893
        %v902 = vld [vmem:[%s384] sm:$0x33]
        %v904 = vcombine.high %v902, %v902
        %906 = vrot.lane.b32.xlu0 %v902, 1
        %v907 = vpop.permute.xlu0 %906
        %908 = vrot.lane.b32.xlu0 %v904, 1
        %v909 = vpop.permute.xlu0 %908
        %vm910 = vcmp.lt.s32.totalorder %v513, 1
        %v911 = vsel %vm910, %v907, %v909
        %v912 = vsel %vm910, %v909, %v907
        %s913 = scalar_lea.vmem %s9, 3
        %v914 = vld [vmem:[%s913] ss:$8 sm:$0x3]
        %v916 = vlaneseq
        %v917 = vshrl.u32 %v916, 7
        %v918 = vsub.s32 0, %v917
        %v919 = vrot.slane %v914, %v918
        %v920 = vlaneseq
        %v921 = vshrl.u32 %v920, 7
        %v922 = vsub.s32 1, %v921
        %v923 = vrot.slane %v914, %v922
        %v926 = vmul.f32 %v912, %v919
        %v927 = vmul.f32 %v911, %v923
        %v928 = vld [vmem:[#allocation2] sm:$0xff]
        %v929 = vld [vmem:[#allocation2 + $0x8] sm:$0xff]
        %v930 = vld [vmem:[#allocation2 + $0x10] sm:$0xff]
        %v931 = vld [vmem:[#allocation2 + $0x18] sm:$0xff]
        %v932 = vld [vmem:[#allocation2 + $0x20] sm:$0xff]
        %v933 = vld [vmem:[#allocation2 + $0x28] sm:$0xff]
        %v934 = vld [vmem:[#allocation2 + $0x30] sm:$0xff]
        %v935 = vld [vmem:[#allocation2 + $0x38] sm:$0xff]
        %s936 = scalar_lea.vmem %s3, 48
        %v937 = vld [vmem:[%s936] sm:$0xf]
        %v938 = vld [vmem:[%s936 + $0x4] sm:$0xf]
        %v939 = vld [vmem:[%s936 + $0x8] sm:$0xf]
        %v940 = vld [vmem:[%s936 + $0xc] sm:$0xf]
        %v941 = vpack.c.bf16 %v926, %v926
        %v942 = vpack.c.bf16 %v927, %v927
        %v947 = vunpack.c.l.b16 %v937
        %v948 = vunpack.c.l.b16 %v938
        %v949 = vunpack.c.l.b16 %v939
        %v950 = vunpack.c.l.b16 %v940
        %v951 = vpack.c.b16 %v948, %v947
        %v952 = vpack.c.b16 %v950, %v949
        %v954 = vsel %vm555, %v951, 0
        %v957 = vsel %vm555, %v952, 0
        %v960 = vsel %vm562, %v941, 0
        %v963 = vsel %vm562, %v942, 0
        %965 = vmatprep.subr.bf16.mxu0 %v963
        %966 = vmatpush1.bf16.msra.mxu0 %v960
        %967 = vmatprep.subr.bf16.mxu0 0
        %968 = vmatpush1.bf16.msra.mxu0 0
        %969 = vmatprep.subr.bf16.mxu0 0
        %970 = vmatpush1.bf16.msra.mxu0 0
        %971 = vmatprep.subr.bf16.mxu0 0
        %972 = vmatpush1.bf16.msra.mxu0 0
        %973 = vmatprep.subr.bf16.mxu0 0
        %974 = vmatpush1.bf16.msra.mxu0 0
        %975 = vmatprep.subr.bf16.mxu0 0
        %976 = vmatpush1.bf16.msra.mxu0 0
        %977 = vmatprep.subr.bf16.mxu0 0
        %978 = vmatpush1.bf16.msra.mxu0 0
        %979 = vmatprep.subr.bf16.mxu0 0
        %980 = vmatpush1.bf16.msra.mxu0 0
        %981 = vmatprep.subr.bf16.mxu0 0
        %982 = vmatpush1.bf16.msra.mxu0 0
        %983 = vmatprep.subr.bf16.mxu0 0
        %984 = vmatpush1.bf16.msra.mxu0 0
        %985 = vmatprep.subr.bf16.mxu0 0
        %986 = vmatpush1.bf16.msra.mxu0 0
        %987 = vmatprep.subr.bf16.mxu0 0
        %988 = vmatpush1.bf16.msra.mxu0 0
        %989 = vmatprep.subr.bf16.mxu0 0
        %990 = vmatpush1.bf16.msra.mxu0 0
        %991 = vmatprep.subr.bf16.mxu0 0
        %992 = vmatpush1.bf16.msra.mxu0 0
        %993 = vmatprep.subr.bf16.mxu0 0
        %994 = vmatpush1.bf16.msra.mxu0 0
        %995 = vmatprep.subr.bf16.mxu0 0
        %996 = vmatpush1.bf16.msra.mxu0 0
        %997 = vmatprep.mubr.bf16.mxu0 0
        %998 = vmatmul.mubr.bf16.gmra.mrb[0].mxu0 %v954
        %v999 = vpop.f32.mrb[0].mxu0
        %v1000 = vadd.f32 0.0, %v999
        %v1001 = vpop.f32.mrb[0].mxu0
        %v1002 = vadd.f32 0.0, %v1001
        %v1003 = vpop.f32.mrb[0].mxu0
        %v1004 = vadd.f32 0.0, %v1003
        %v1005 = vpop.f32.mrb[0].mxu0
        %v1006 = vadd.f32 0.0, %v1005
        %1007 = vmatprep.mubr.bf16.mxu0 0
        %1008 = vmatmul.mubr.bf16.gmra.mrb[0].mxu0 %v957
        %v1009 = vpop.f32.mrb[0].mxu0
        %v1010 = vadd.f32 0.0, %v1009
        %v1011 = vpop.f32.mrb[0].mxu0
        %v1012 = vadd.f32 0.0, %v1011
        %v1013 = vpop.f32.mrb[0].mxu0
        %v1014 = vadd.f32 0.0, %v1013
        %v1015 = vpop.f32.mrb[0].mxu0
        %v1016 = vadd.f32 0.0, %v1015
        %1017 = vdwg.mxu0
        %v1018 = vadd.f32 %v928, %v1000
        %v1019 = vadd.f32 %v929, %v1002
        %v1020 = vadd.f32 %v930, %v1004
        %v1021 = vadd.f32 %v931, %v1006
        %v1022 = vadd.f32 %v932, %v1010
        %v1023 = vadd.f32 %v933, %v1012
        %v1024 = vadd.f32 %v934, %v1014
        %v1025 = vadd.f32 %v935, %v1016
        %1026 = vst [vmem:[#allocation2] sm:$0xff] %v1018
        %1027 = vst [vmem:[#allocation2 + $0x8] sm:$0xff] %v1019
        %1028 = vst [vmem:[#allocation2 + $0x10] sm:$0xff] %v1020
        %1029 = vst [vmem:[#allocation2 + $0x18] sm:$0xff] %v1021
        %1030 = vst [vmem:[#allocation2 + $0x20] sm:$0xff] %v1022
        %1031 = vst [vmem:[#allocation2 + $0x28] sm:$0xff] %v1023
        %1032 = vst [vmem:[#allocation2 + $0x30] sm:$0xff] %v1024
        %1033 = vst [vmem:[#allocation2 + $0x38] sm:$0xff] %v1025
        %v1034 = vld [vmem:[%s384] sm:$0x33]
        %s1035 = scalar_lea.vmem %s9, 4
        %v1036 = vld [vmem:[%s1035] ss:$8 sm:$0x3]
        %v1038 = vlaneseq
        %v1039 = vshrl.u32 %v1038, 7
        %v1040 = vsub.s32 0, %v1039
        %v1041 = vrot.slane %v1036, %v1040
        %v1042 = vlaneseq
        %v1043 = vshrl.u32 %v1042, 7
        %v1044 = vsub.s32 1, %v1043
        %v1045 = vrot.slane %v1036, %v1044
        %v1046 = vcombine.low %v1041, %v1045
        %v1048 = vmul.f32 %v1034, %v1046
        %v1049 = vld [vmem:[#allocation2] sm:$0xff]
        %v1050 = vld [vmem:[#allocation2 + $0x8] sm:$0xff]
        %v1051 = vld [vmem:[#allocation2 + $0x10] sm:$0xff]
        %v1052 = vld [vmem:[#allocation2 + $0x18] sm:$0xff]
        %v1053 = vld [vmem:[#allocation2 + $0x20] sm:$0xff]
        %v1054 = vld [vmem:[#allocation2 + $0x28] sm:$0xff]
        %v1055 = vld [vmem:[#allocation2 + $0x30] sm:$0xff]
        %v1056 = vld [vmem:[#allocation2 + $0x38] sm:$0xff]
        %s1057 = scalar_lea.vmem %s3, 64
        %v1058 = vld [vmem:[%s1057] sm:$0xf]
        %v1059 = vld [vmem:[%s1057 + $0x4] sm:$0xf]
        %v1060 = vld [vmem:[%s1057 + $0x8] sm:$0xf]
        %v1061 = vld [vmem:[%s1057 + $0xc] sm:$0xf]
        %v1063 = vcombine.high %v1048, %v1048
        %v1065 = vpack.c.bf16 %v1048, %v1048
        %v1066 = vpack.c.bf16 %v1063, %v1063
        %v1071 = vunpack.c.l.b16 %v1058
        %v1072 = vunpack.c.l.b16 %v1059
        %v1073 = vunpack.c.l.b16 %v1060
        %v1074 = vunpack.c.l.b16 %v1061
        %v1075 = vpack.c.b16 %v1072, %v1071
        %v1076 = vpack.c.b16 %v1074, %v1073
        %v1078 = vsel %vm555, %v1075, 0
        %v1081 = vsel %vm555, %v1076, 0
        %v1084 = vsel %vm562, %v1065, 0
        %v1087 = vsel %vm562, %v1066, 0
        %1089 = vmatprep.subr.bf16.mxu0 %v1087
        %1090 = vmatpush1.bf16.msra.mxu0 %v1084
        %1091 = vmatprep.subr.bf16.mxu0 0
        %1092 = vmatpush1.bf16.msra.mxu0 0
        %1093 = vmatprep.subr.bf16.mxu0 0
        %1094 = vmatpush1.bf16.msra.mxu0 0
        %1095 = vmatprep.subr.bf16.mxu0 0
        %1096 = vmatpush1.bf16.msra.mxu0 0
        %1097 = vmatprep.subr.bf16.mxu0 0
        %1098 = vmatpush1.bf16.msra.mxu0 0
        %1099 = vmatprep.subr.bf16.mxu0 0
        %1100 = vmatpush1.bf16.msra.mxu0 0
        %1101 = vmatprep.subr.bf16.mxu0 0
        %1102 = vmatpush1.bf16.msra.mxu0 0
        %1103 = vmatprep.subr.bf16.mxu0 0
        %1104 = vmatpush1.bf16.msra.mxu0 0
        %1105 = vmatprep.subr.bf16.mxu0 0
        %1106 = vmatpush1.bf16.msra.mxu0 0
        %1107 = vmatprep.subr.bf16.mxu0 0
        %1108 = vmatpush1.bf16.msra.mxu0 0
        %1109 = vmatprep.subr.bf16.mxu0 0
        %1110 = vmatpush1.bf16.msra.mxu0 0
        %1111 = vmatprep.subr.bf16.mxu0 0
        %1112 = vmatpush1.bf16.msra.mxu0 0
        %1113 = vmatprep.subr.bf16.mxu0 0
        %1114 = vmatpush1.bf16.msra.mxu0 0
        %1115 = vmatprep.subr.bf16.mxu0 0
        %1116 = vmatpush1.bf16.msra.mxu0 0
        %1117 = vmatprep.subr.bf16.mxu0 0
        %1118 = vmatpush1.bf16.msra.mxu0 0
        %1119 = vmatprep.subr.bf16.mxu0 0
        %1120 = vmatpush1.bf16.msra.mxu0 0
        %1121 = vmatprep.mubr.bf16.mxu0 0
        %1122 = vmatmul.mubr.bf16.gmra.mrb[0].mxu0 %v1078
        %v1123 = vpop.f32.mrb[0].mxu0
        %v1124 = vadd.f32 0.0, %v1123
        %v1125 = vpop.f32.mrb[0].mxu0
        %v1126 = vadd.f32 0.0, %v1125
        %v1127 = vpop.f32.mrb[0].mxu0
        %v1128 = vadd.f32 0.0, %v1127
        %v1129 = vpop.f32.mrb[0].mxu0
        %v1130 = vadd.f32 0.0, %v1129
        %1131 = vmatprep.mubr.bf16.mxu0 0
        %1132 = vmatmul.mubr.bf16.gmra.mrb[0].mxu0 %v1081
        %v1133 = vpop.f32.mrb[0].mxu0
        %v1134 = vadd.f32 0.0, %v1133
        %v1135 = vpop.f32.mrb[0].mxu0
        %v1136 = vadd.f32 0.0, %v1135
        %v1137 = vpop.f32.mrb[0].mxu0
        %v1138 = vadd.f32 0.0, %v1137
        %v1139 = vpop.f32.mrb[0].mxu0
        %v1140 = vadd.f32 0.0, %v1139
        %1141 = vdwg.mxu0
        %v1142 = vadd.f32 %v1049, %v1124
        %v1143 = vadd.f32 %v1050, %v1126
        %v1144 = vadd.f32 %v1051, %v1128
        %v1145 = vadd.f32 %v1052, %v1130
        %v1146 = vadd.f32 %v1053, %v1134
        %v1147 = vadd.f32 %v1054, %v1136
        %v1148 = vadd.f32 %v1055, %v1138
        %v1149 = vadd.f32 %v1056, %v1140
        %1150 = vst [vmem:[#allocation2] sm:$0xff] %v1142
        %1151 = vst [vmem:[#allocation2 + $0x8] sm:$0xff] %v1143
        %1152 = vst [vmem:[#allocation2 + $0x10] sm:$0xff] %v1144
        %1153 = vst [vmem:[#allocation2 + $0x18] sm:$0xff] %v1145
        %1154 = vst [vmem:[#allocation2 + $0x20] sm:$0xff] %v1146
        %1155 = vst [vmem:[#allocation2 + $0x28] sm:$0xff] %v1147
        %1156 = vst [vmem:[#allocation2 + $0x30] sm:$0xff] %v1148
        %1157 = vst [vmem:[#allocation2 + $0x38] sm:$0xff] %v1149
        %v1158 = vld [vmem:[%s384] sm:$0x33]
        %v1160 = vcombine.high %v1158, %v1158
        %1162 = vrot.lane.b32.xlu0 %v1158, 127
        %v1163 = vpop.permute.xlu0 %1162
        %1164 = vrot.lane.b32.xlu0 %v1160, 127
        %v1165 = vpop.permute.xlu0 %1164
        %vm1166 = vcmp.lt.s32.totalorder %v513, 127
        %v1167 = vsel %vm1166, %v1163, %v1165
        %v1168 = vsel %vm1166, %v1165, %v1163
        %s1169 = scalar_lea.vmem %s9, 5
        %v1170 = vld [vmem:[%s1169] ss:$8 sm:$0x3]
        %v1172 = vlaneseq
        %v1173 = vshrl.u32 %v1172, 7
        %v1174 = vsub.s32 0, %v1173
        %v1175 = vrot.slane %v1170, %v1174
        %v1176 = vlaneseq
        %v1177 = vshrl.u32 %v1176, 7
        %v1178 = vsub.s32 1, %v1177
        %v1179 = vrot.slane %v1170, %v1178
        %v1182 = vmul.f32 %v1167, %v1175
        %v1183 = vmul.f32 %v1168, %v1179
        %v1184 = vld [vmem:[#allocation2] sm:$0xff]
        %v1185 = vld [vmem:[#allocation2 + $0x8] sm:$0xff]
        %v1186 = vld [vmem:[#allocation2 + $0x10] sm:$0xff]
        %v1187 = vld [vmem:[#allocation2 + $0x18] sm:$0xff]
        %v1188 = vld [vmem:[#allocation2 + $0x20] sm:$0xff]
        %v1189 = vld [vmem:[#allocation2 + $0x28] sm:$0xff]
        %v1190 = vld [vmem:[#allocation2 + $0x30] sm:$0xff]
        %v1191 = vld [vmem:[#allocation2 + $0x38] sm:$0xff]
        %s1192 = scalar_lea.vmem %s3, 80
        %v1193 = vld [vmem:[%s1192] sm:$0xf]
        %v1194 = vld [vmem:[%s1192 + $0x4] sm:$0xf]
        %v1195 = vld [vmem:[%s1192 + $0x8] sm:$0xf]
        %v1196 = vld [vmem:[%s1192 + $0xc] sm:$0xf]
        %v1197 = vpack.c.bf16 %v1182, %v1182
        %v1198 = vpack.c.bf16 %v1183, %v1183
        %v1203 = vunpack.c.l.b16 %v1193
        %v1204 = vunpack.c.l.b16 %v1194
        %v1205 = vunpack.c.l.b16 %v1195
        %v1206 = vunpack.c.l.b16 %v1196
        %v1207 = vpack.c.b16 %v1204, %v1203
        %v1208 = vpack.c.b16 %v1206, %v1205
        %v1210 = vsel %vm555, %v1207, 0
        %v1213 = vsel %vm555, %v1208, 0
        %v1216 = vsel %vm562, %v1197, 0
        %v1219 = vsel %vm562, %v1198, 0
        %1221 = vmatprep.subr.bf16.mxu0 %v1219
        %1222 = vmatpush1.bf16.msra.mxu0 %v1216
        %1223 = vmatprep.subr.bf16.mxu0 0
        %1224 = vmatpush1.bf16.msra.mxu0 0
        %1225 = vmatprep.subr.bf16.mxu0 0
        %1226 = vmatpush1.bf16.msra.mxu0 0
        %1227 = vmatprep.subr.bf16.mxu0 0
        %1228 = vmatpush1.bf16.msra.mxu0 0
        %1229 = vmatprep.subr.bf16.mxu0 0
        %1230 = vmatpush1.bf16.msra.mxu0 0
        %1231 = vmatprep.subr.bf16.mxu0 0
        %1232 = vmatpush1.bf16.msra.mxu0 0
        %1233 = vmatprep.subr.bf16.mxu0 0
        %1234 = vmatpush1.bf16.msra.mxu0 0
        %1235 = vmatprep.subr.bf16.mxu0 0
        %1236 = vmatpush1.bf16.msra.mxu0 0
        %1237 = vmatprep.subr.bf16.mxu0 0
        %1238 = vmatpush1.bf16.msra.mxu0 0
        %1239 = vmatprep.subr.bf16.mxu0 0
        %1240 = vmatpush1.bf16.msra.mxu0 0
        %1241 = vmatprep.subr.bf16.mxu0 0
        %1242 = vmatpush1.bf16.msra.mxu0 0
        %1243 = vmatprep.subr.bf16.mxu0 0
        %1244 = vmatpush1.bf16.msra.mxu0 0
        %1245 = vmatprep.subr.bf16.mxu0 0
        %1246 = vmatpush1.bf16.msra.mxu0 0
        %1247 = vmatprep.subr.bf16.mxu0 0
        %1248 = vmatpush1.bf16.msra.mxu0 0
        %1249 = vmatprep.subr.bf16.mxu0 0
        %1250 = vmatpush1.bf16.msra.mxu0 0
        %1251 = vmatprep.subr.bf16.mxu0 0
        %1252 = vmatpush1.bf16.msra.mxu0 0
        %1253 = vmatprep.mubr.bf16.mxu0 0
        %1254 = vmatmul.mubr.bf16.gmra.mrb[0].mxu0 %v1210
        %v1255 = vpop.f32.mrb[0].mxu0
        %v1256 = vadd.f32 0.0, %v1255
        %v1257 = vpop.f32.mrb[0].mxu0
        %v1258 = vadd.f32 0.0, %v1257
        %v1259 = vpop.f32.mrb[0].mxu0
        %v1260 = vadd.f32 0.0, %v1259
        %v1261 = vpop.f32.mrb[0].mxu0
        %v1262 = vadd.f32 0.0, %v1261
        %1263 = vmatprep.mubr.bf16.mxu0 0
        %1264 = vmatmul.mubr.bf16.gmra.mrb[0].mxu0 %v1213
        %v1265 = vpop.f32.mrb[0].mxu0
        %v1266 = vadd.f32 0.0, %v1265
        %v1267 = vpop.f32.mrb[0].mxu0
        %v1268 = vadd.f32 0.0, %v1267
        %v1269 = vpop.f32.mrb[0].mxu0
        %v1270 = vadd.f32 0.0, %v1269
        %v1271 = vpop.f32.mrb[0].mxu0
        %v1272 = vadd.f32 0.0, %v1271
        %1273 = vdwg.mxu0
        %v1274 = vadd.f32 %v1184, %v1256
        %v1275 = vadd.f32 %v1185, %v1258
        %v1276 = vadd.f32 %v1186, %v1260
        %v1277 = vadd.f32 %v1187, %v1262
        %v1278 = vadd.f32 %v1188, %v1266
        %v1279 = vadd.f32 %v1189, %v1268
        %v1280 = vadd.f32 %v1190, %v1270
        %v1281 = vadd.f32 %v1191, %v1272
        %1282 = vst [vmem:[#allocation2] sm:$0xff] %v1274
        %1283 = vst [vmem:[#allocation2 + $0x8] sm:$0xff] %v1275
        %1284 = vst [vmem:[#allocation2 + $0x10] sm:$0xff] %v1276
        %1285 = vst [vmem:[#allocation2 + $0x18] sm:$0xff] %v1277
        %1286 = vst [vmem:[#allocation2 + $0x20] sm:$0xff] %v1278
        %1287 = vst [vmem:[#allocation2 + $0x28] sm:$0xff] %v1279
        %1288 = vst [vmem:[#allocation2 + $0x30] sm:$0xff] %v1280
        %1289 = vst [vmem:[#allocation2 + $0x38] sm:$0xff] %v1281
        %v1290 = vld [vmem:[%s384] sm:$0x33]
        %v1292 = vcombine.high %v1290, %v1290
        %1294 = vrot.lane.b32.xlu0 %v1290, 113
        %v1295 = vpop.permute.xlu0 %1294
        %1296 = vrot.lane.b32.xlu0 %v1292, 113
        %v1297 = vpop.permute.xlu0 %1296
        %vm1298 = vcmp.lt.s32.totalorder %v513, 113
        %v1299 = vsel %vm1298, %v1295, %v1297
        %v1300 = vsel %vm1298, %v1297, %v1295
        %s1301 = scalar_lea.vmem %s9, 6
        %v1302 = vld [vmem:[%s1301] ss:$8 sm:$0x3]
        %v1304 = vlaneseq
        %v1305 = vshrl.u32 %v1304, 7
        %v1306 = vsub.s32 0, %v1305
        %v1307 = vrot.slane %v1302, %v1306
        %v1308 = vlaneseq
        %v1309 = vshrl.u32 %v1308, 7
        %v1310 = vsub.s32 1, %v1309
        %v1311 = vrot.slane %v1302, %v1310
        %v1314 = vmul.f32 %v1299, %v1307
        %v1315 = vmul.f32 %v1300, %v1311
        %v1316 = vld [vmem:[#allocation2] sm:$0xff]
        %v1317 = vld [vmem:[#allocation2 + $0x8] sm:$0xff]
        %v1318 = vld [vmem:[#allocation2 + $0x10] sm:$0xff]
        %v1319 = vld [vmem:[#allocation2 + $0x18] sm:$0xff]
        %v1320 = vld [vmem:[#allocation2 + $0x20] sm:$0xff]
        %v1321 = vld [vmem:[#allocation2 + $0x28] sm:$0xff]
        %v1322 = vld [vmem:[#allocation2 + $0x30] sm:$0xff]
        %v1323 = vld [vmem:[#allocation2 + $0x38] sm:$0xff]
        %s1324 = scalar_lea.vmem %s3, 96
        %v1325 = vld [vmem:[%s1324] sm:$0xf]
        %v1326 = vld [vmem:[%s1324 + $0x4] sm:$0xf]
        %v1327 = vld [vmem:[%s1324 + $0x8] sm:$0xf]
        %v1328 = vld [vmem:[%s1324 + $0xc] sm:$0xf]
        %v1329 = vpack.c.bf16 %v1314, %v1314
        %v1330 = vpack.c.bf16 %v1315, %v1315
        %v1335 = vunpack.c.l.b16 %v1325
        %v1336 = vunpack.c.l.b16 %v1326
        %v1337 = vunpack.c.l.b16 %v1327
        %v1338 = vunpack.c.l.b16 %v1328
        %v1339 = vpack.c.b16 %v1336, %v1335
        %v1340 = vpack.c.b16 %v1338, %v1337
        %v1342 = vsel %vm555, %v1339, 0
        %v1345 = vsel %vm555, %v1340, 0
        %v1348 = vsel %vm562, %v1329, 0
        %v1351 = vsel %vm562, %v1330, 0
        %1353 = vmatprep.subr.bf16.mxu0 %v1351
        %1354 = vmatpush1.bf16.msra.mxu0 %v1348
        %1355 = vmatprep.subr.bf16.mxu0 0
        %1356 = vmatpush1.bf16.msra.mxu0 0
        %1357 = vmatprep.subr.bf16.mxu0 0
        %1358 = vmatpush1.bf16.msra.mxu0 0
        %1359 = vmatprep.subr.bf16.mxu0 0
        %1360 = vmatpush1.bf16.msra.mxu0 0
        %1361 = vmatprep.subr.bf16.mxu0 0
        %1362 = vmatpush1.bf16.msra.mxu0 0
        %1363 = vmatprep.subr.bf16.mxu0 0
        %1364 = vmatpush1.bf16.msra.mxu0 0
        %1365 = vmatprep.subr.bf16.mxu0 0
        %1366 = vmatpush1.bf16.msra.mxu0 0
        %1367 = vmatprep.subr.bf16.mxu0 0
        %1368 = vmatpush1.bf16.msra.mxu0 0
        %1369 = vmatprep.subr.bf16.mxu0 0
        %1370 = vmatpush1.bf16.msra.mxu0 0
        %1371 = vmatprep.subr.bf16.mxu0 0
        %1372 = vmatpush1.bf16.msra.mxu0 0
        %1373 = vmatprep.subr.bf16.mxu0 0
        %1374 = vmatpush1.bf16.msra.mxu0 0
        %1375 = vmatprep.subr.bf16.mxu0 0
        %1376 = vmatpush1.bf16.msra.mxu0 0
        %1377 = vmatprep.subr.bf16.mxu0 0
        %1378 = vmatpush1.bf16.msra.mxu0 0
        %1379 = vmatprep.subr.bf16.mxu0 0
        %1380 = vmatpush1.bf16.msra.mxu0 0
        %1381 = vmatprep.subr.bf16.mxu0 0
        %1382 = vmatpush1.bf16.msra.mxu0 0
        %1383 = vmatprep.subr.bf16.mxu0 0
        %1384 = vmatpush1.bf16.msra.mxu0 0
        %1385 = vmatprep.mubr.bf16.mxu0 0
        %1386 = vmatmul.mubr.bf16.gmra.mrb[0].mxu0 %v1342
        %v1387 = vpop.f32.mrb[0].mxu0
        %v1388 = vadd.f32 0.0, %v1387
        %v1389 = vpop.f32.mrb[0].mxu0
        %v1390 = vadd.f32 0.0, %v1389
        %v1391 = vpop.f32.mrb[0].mxu0
        %v1392 = vadd.f32 0.0, %v1391
        %v1393 = vpop.f32.mrb[0].mxu0
        %v1394 = vadd.f32 0.0, %v1393
        %1395 = vmatprep.mubr.bf16.mxu0 0
        %1396 = vmatmul.mubr.bf16.gmra.mrb[0].mxu0 %v1345
        %v1397 = vpop.f32.mrb[0].mxu0
        %v1398 = vadd.f32 0.0, %v1397
        %v1399 = vpop.f32.mrb[0].mxu0
        %v1400 = vadd.f32 0.0, %v1399
        %v1401 = vpop.f32.mrb[0].mxu0
        %v1402 = vadd.f32 0.0, %v1401
        %v1403 = vpop.f32.mrb[0].mxu0
        %v1404 = vadd.f32 0.0, %v1403
        %1405 = vdwg.mxu0
        %v1406 = vadd.f32 %v1316, %v1388
        %v1407 = vadd.f32 %v1317, %v1390
        %v1408 = vadd.f32 %v1318, %v1392
        %v1409 = vadd.f32 %v1319, %v1394
        %v1410 = vadd.f32 %v1320, %v1398
        %v1411 = vadd.f32 %v1321, %v1400
        %v1412 = vadd.f32 %v1322, %v1402
        %v1413 = vadd.f32 %v1323, %v1404
        %1414 = vst [vmem:[#allocation2] sm:$0xff] %v1406
        %1415 = vst [vmem:[#allocation2 + $0x8] sm:$0xff] %v1407
        %1416 = vst [vmem:[#allocation2 + $0x10] sm:$0xff] %v1408
        %1417 = vst [vmem:[#allocation2 + $0x18] sm:$0xff] %v1409
        %1418 = vst [vmem:[#allocation2 + $0x20] sm:$0xff] %v1410
        %1419 = vst [vmem:[#allocation2 + $0x28] sm:$0xff] %v1411
        %1420 = vst [vmem:[#allocation2 + $0x30] sm:$0xff] %v1412
        %1421 = vst [vmem:[#allocation2 + $0x38] sm:$0xff] %v1413
        %v1422 = vld [vmem:[%s384] sm:$0x33]
        %v1424 = vcombine.high %v1422, %v1422
        %1426 = vrot.lane.b32.xlu0 %v1422, 112
        %v1427 = vpop.permute.xlu0 %1426
        %1428 = vrot.lane.b32.xlu0 %v1424, 112
        %v1429 = vpop.permute.xlu0 %1428
        %vm1430 = vcmp.lt.s32.totalorder %v513, 112
        %v1431 = vsel %vm1430, %v1427, %v1429
        %v1432 = vsel %vm1430, %v1429, %v1427
        %s1433 = scalar_lea.vmem %s9, 7
        %v1434 = vld [vmem:[%s1433] ss:$8 sm:$0x3]
        %v1436 = vlaneseq
        %v1437 = vshrl.u32 %v1436, 7
        %v1438 = vsub.s32 0, %v1437
        %v1439 = vrot.slane %v1434, %v1438
        %v1440 = vlaneseq
        %v1441 = vshrl.u32 %v1440, 7
        %v1442 = vsub.s32 1, %v1441
        %v1443 = vrot.slane %v1434, %v1442
        %v1446 = vmul.f32 %v1431, %v1439
        %v1447 = vmul.f32 %v1432, %v1443
        %v1448 = vld [vmem:[#allocation2] sm:$0xff]
        %v1449 = vld [vmem:[#allocation2 + $0x8] sm:$0xff]
        %v1450 = vld [vmem:[#allocation2 + $0x10] sm:$0xff]
        %v1451 = vld [vmem:[#allocation2 + $0x18] sm:$0xff]
        %v1452 = vld [vmem:[#allocation2 + $0x20] sm:$0xff]
        %v1453 = vld [vmem:[#allocation2 + $0x28] sm:$0xff]
        %v1454 = vld [vmem:[#allocation2 + $0x30] sm:$0xff]
        %v1455 = vld [vmem:[#allocation2 + $0x38] sm:$0xff]
        %s1456 = scalar_lea.vmem %s3, 112
        %v1457 = vld [vmem:[%s1456] sm:$0xf]
        %v1458 = vld [vmem:[%s1456 + $0x4] sm:$0xf]
        %v1459 = vld [vmem:[%s1456 + $0x8] sm:$0xf]
        %v1460 = vld [vmem:[%s1456 + $0xc] sm:$0xf]
        %v1461 = vpack.c.bf16 %v1446, %v1446
        %v1462 = vpack.c.bf16 %v1447, %v1447
        %v1467 = vunpack.c.l.b16 %v1457
        %v1468 = vunpack.c.l.b16 %v1458
        %v1469 = vunpack.c.l.b16 %v1459
        %v1470 = vunpack.c.l.b16 %v1460
        %v1471 = vpack.c.b16 %v1468, %v1467
        %v1472 = vpack.c.b16 %v1470, %v1469
        %v1474 = vsel %vm555, %v1471, 0
        %v1477 = vsel %vm555, %v1472, 0
        %v1480 = vsel %vm562, %v1461, 0
        %v1483 = vsel %vm562, %v1462, 0
        %1485 = vmatprep.subr.bf16.mxu0 %v1483
        %1486 = vmatpush1.bf16.msra.mxu0 %v1480
        %1487 = vmatprep.subr.bf16.mxu0 0
        %1488 = vmatpush1.bf16.msra.mxu0 0
        %1489 = vmatprep.subr.bf16.mxu0 0
        %1490 = vmatpush1.bf16.msra.mxu0 0
        %1491 = vmatprep.subr.bf16.mxu0 0
        %1492 = vmatpush1.bf16.msra.mxu0 0
        %1493 = vmatprep.subr.bf16.mxu0 0
        %1494 = vmatpush1.bf16.msra.mxu0 0
        %1495 = vmatprep.subr.bf16.mxu0 0
        %1496 = vmatpush1.bf16.msra.mxu0 0
        %1497 = vmatprep.subr.bf16.mxu0 0
        %1498 = vmatpush1.bf16.msra.mxu0 0
        %1499 = vmatprep.subr.bf16.mxu0 0
        %1500 = vmatpush1.bf16.msra.mxu0 0
        %1501 = vmatprep.subr.bf16.mxu0 0
        %1502 = vmatpush1.bf16.msra.mxu0 0
        %1503 = vmatprep.subr.bf16.mxu0 0
        %1504 = vmatpush1.bf16.msra.mxu0 0
        %1505 = vmatprep.subr.bf16.mxu0 0
        %1506 = vmatpush1.bf16.msra.mxu0 0
        %1507 = vmatprep.subr.bf16.mxu0 0
        %1508 = vmatpush1.bf16.msra.mxu0 0
        %1509 = vmatprep.subr.bf16.mxu0 0
        %1510 = vmatpush1.bf16.msra.mxu0 0
        %1511 = vmatprep.subr.bf16.mxu0 0
        %1512 = vmatpush1.bf16.msra.mxu0 0
        %1513 = vmatprep.subr.bf16.mxu0 0
        %1514 = vmatpush1.bf16.msra.mxu0 0
        %1515 = vmatprep.subr.bf16.mxu0 0
        %1516 = vmatpush1.bf16.msra.mxu0 0
        %1517 = vmatprep.mubr.bf16.mxu0 0
        %1518 = vmatmul.mubr.bf16.gmra.mrb[0].mxu0 %v1474
        %v1519 = vpop.f32.mrb[0].mxu0
        %v1520 = vadd.f32 0.0, %v1519
        %v1521 = vpop.f32.mrb[0].mxu0
        %v1522 = vadd.f32 0.0, %v1521
        %v1523 = vpop.f32.mrb[0].mxu0
        %v1524 = vadd.f32 0.0, %v1523
        %v1525 = vpop.f32.mrb[0].mxu0
        %v1526 = vadd.f32 0.0, %v1525
        %1527 = vmatprep.mubr.bf16.mxu0 0
        %1528 = vmatmul.mubr.bf16.gmra.mrb[0].mxu0 %v1477
        %v1529 = vpop.f32.mrb[0].mxu0
        %v1530 = vadd.f32 0.0, %v1529
        %v1531 = vpop.f32.mrb[0].mxu0
        %v1532 = vadd.f32 0.0, %v1531
        %v1533 = vpop.f32.mrb[0].mxu0
        %v1534 = vadd.f32 0.0, %v1533
        %v1535 = vpop.f32.mrb[0].mxu0
        %v1536 = vadd.f32 0.0, %v1535
        %1537 = vdwg.mxu0
        %v1538 = vadd.f32 %v1448, %v1520
        %v1539 = vadd.f32 %v1449, %v1522
        %v1540 = vadd.f32 %v1450, %v1524
        %v1541 = vadd.f32 %v1451, %v1526
        %v1542 = vadd.f32 %v1452, %v1530
        %v1543 = vadd.f32 %v1453, %v1532
        %v1544 = vadd.f32 %v1454, %v1534
        %v1545 = vadd.f32 %v1455, %v1536
        %1546 = vst [vmem:[#allocation2] sm:$0xff] %v1538
        %1547 = vst [vmem:[#allocation2 + $0x8] sm:$0xff] %v1539
        %1548 = vst [vmem:[#allocation2 + $0x10] sm:$0xff] %v1540
        %1549 = vst [vmem:[#allocation2 + $0x18] sm:$0xff] %v1541
        %1550 = vst [vmem:[#allocation2 + $0x20] sm:$0xff] %v1542
        %1551 = vst [vmem:[#allocation2 + $0x28] sm:$0xff] %v1543
        %1552 = vst [vmem:[#allocation2 + $0x30] sm:$0xff] %v1544
        %1553 = vst [vmem:[#allocation2 + $0x38] sm:$0xff] %v1545
        %v1554 = vld [vmem:[%s384] sm:$0x33]
        %v1556 = vcombine.high %v1554, %v1554
        %1558 = vrot.lane.b32.xlu0 %v1554, 111
        %v1559 = vpop.permute.xlu0 %1558
        %1560 = vrot.lane.b32.xlu0 %v1556, 111
        %v1561 = vpop.permute.xlu0 %1560
        %vm1562 = vcmp.lt.s32.totalorder %v513, 111
        %v1563 = vsel %vm1562, %v1559, %v1561
        %v1564 = vsel %vm1562, %v1561, %v1559
        %s1565 = scalar_lea.vmem %s9, 16
        %v1566 = vld [vmem:[%s1565] ss:$8 sm:$0x3]
        %v1568 = vlaneseq
        %v1569 = vshrl.u32 %v1568, 7
        %v1570 = vsub.s32 0, %v1569
        %v1571 = vrot.slane %v1566, %v1570
        %v1572 = vlaneseq
        %v1573 = vshrl.u32 %v1572, 7
        %v1574 = vsub.s32 1, %v1573
        %v1575 = vrot.slane %v1566, %v1574
        %v1578 = vmul.f32 %v1563, %v1571
        %v1579 = vmul.f32 %v1564, %v1575
        %v1580 = vld [vmem:[#allocation2] sm:$0xff]
        %v1581 = vld [vmem:[#allocation2 + $0x8] sm:$0xff]
        %v1582 = vld [vmem:[#allocation2 + $0x10] sm:$0xff]
        %v1583 = vld [vmem:[#allocation2 + $0x18] sm:$0xff]
        %v1584 = vld [vmem:[#allocation2 + $0x20] sm:$0xff]
        %v1585 = vld [vmem:[#allocation2 + $0x28] sm:$0xff]
        %v1586 = vld [vmem:[#allocation2 + $0x30] sm:$0xff]
        %v1587 = vld [vmem:[#allocation2 + $0x38] sm:$0xff]
        %s1588 = scalar_lea.vmem %s3, 128
        %v1589 = vld [vmem:[%s1588] sm:$0xf]
        %v1590 = vld [vmem:[%s1588 + $0x4] sm:$0xf]
        %v1591 = vld [vmem:[%s1588 + $0x8] sm:$0xf]
        %v1592 = vld [vmem:[%s1588 + $0xc] sm:$0xf]
        %v1593 = vpack.c.bf16 %v1578, %v1578
        %v1594 = vpack.c.bf16 %v1579, %v1579
        %v1599 = vunpack.c.l.b16 %v1589
        %v1600 = vunpack.c.l.b16 %v1590
        %v1601 = vunpack.c.l.b16 %v1591
        %v1602 = vunpack.c.l.b16 %v1592
        %v1603 = vpack.c.b16 %v1600, %v1599
        %v1604 = vpack.c.b16 %v1602, %v1601
        %v1606 = vsel %vm555, %v1603, 0
        %v1609 = vsel %vm555, %v1604, 0
        %v1612 = vsel %vm562, %v1593, 0
        %v1615 = vsel %vm562, %v1594, 0
        %1617 = vmatprep.subr.bf16.mxu0 %v1615
        %1618 = vmatpush1.bf16.msra.mxu0 %v1612
        %1619 = vmatprep.subr.bf16.mxu0 0
        %1620 = vmatpush1.bf16.msra.mxu0 0
        %1621 = vmatprep.subr.bf16.mxu0 0
        %1622 = vmatpush1.bf16.msra.mxu0 0
        %1623 = vmatprep.subr.bf16.mxu0 0
        %1624 = vmatpush1.bf16.msra.mxu0 0
        %1625 = vmatprep.subr.bf16.mxu0 0
        %1626 = vmatpush1.bf16.msra.mxu0 0
        %1627 = vmatprep.subr.bf16.mxu0 0
        %1628 = vmatpush1.bf16.msra.mxu0 0
        %1629 = vmatprep.subr.bf16.mxu0 0
        %1630 = vmatpush1.bf16.msra.mxu0 0
        %1631 = vmatprep.subr.bf16.mxu0 0
        %1632 = vmatpush1.bf16.msra.mxu0 0
        %1633 = vmatprep.subr.bf16.mxu0 0
        %1634 = vmatpush1.bf16.msra.mxu0 0
        %1635 = vmatprep.subr.bf16.mxu0 0
        %1636 = vmatpush1.bf16.msra.mxu0 0
        %1637 = vmatprep.subr.bf16.mxu0 0
        %1638 = vmatpush1.bf16.msra.mxu0 0
        %1639 = vmatprep.subr.bf16.mxu0 0
        %1640 = vmatpush1.bf16.msra.mxu0 0
        %1641 = vmatprep.subr.bf16.mxu0 0
        %1642 = vmatpush1.bf16.msra.mxu0 0
        %1643 = vmatprep.subr.bf16.mxu0 0
        %1644 = vmatpush1.bf16.msra.mxu0 0
        %1645 = vmatprep.subr.bf16.mxu0 0
        %1646 = vmatpush1.bf16.msra.mxu0 0
        %1647 = vmatprep.subr.bf16.mxu0 0
        %1648 = vmatpush1.bf16.msra.mxu0 0
        %1649 = vmatprep.mubr.bf16.mxu0 0
        %1650 = vmatmul.mubr.bf16.gmra.mrb[0].mxu0 %v1606
        %v1651 = vpop.f32.mrb[0].mxu0
        %v1652 = vadd.f32 0.0, %v1651
        %v1653 = vpop.f32.mrb[0].mxu0
        %v1654 = vadd.f32 0.0, %v1653
        %v1655 = vpop.f32.mrb[0].mxu0
        %v1656 = vadd.f32 0.0, %v1655
        %v1657 = vpop.f32.mrb[0].mxu0
        %v1658 = vadd.f32 0.0, %v1657
        %1659 = vmatprep.mubr.bf16.mxu0 0
        %1660 = vmatmul.mubr.bf16.gmra.mrb[0].mxu0 %v1609
        %v1661 = vpop.f32.mrb[0].mxu0
        %v1662 = vadd.f32 0.0, %v1661
        %v1663 = vpop.f32.mrb[0].mxu0
        %v1664 = vadd.f32 0.0, %v1663
        %v1665 = vpop.f32.mrb[0].mxu0
        %v1666 = vadd.f32 0.0, %v1665
        %v1667 = vpop.f32.mrb[0].mxu0
        %v1668 = vadd.f32 0.0, %v1667
        %1669 = vdwg.mxu0
        %v1670 = vadd.f32 %v1580, %v1652
        %v1671 = vadd.f32 %v1581, %v1654
        %v1672 = vadd.f32 %v1582, %v1656
        %v1673 = vadd.f32 %v1583, %v1658
        %v1674 = vadd.f32 %v1584, %v1662
        %v1675 = vadd.f32 %v1585, %v1664
        %v1676 = vadd.f32 %v1586, %v1666
        %v1677 = vadd.f32 %v1587, %v1668
        %1678 = vst [vmem:[#allocation2] sm:$0xff] %v1670
        %1679 = vst [vmem:[#allocation2 + $0x8] sm:$0xff] %v1671
        %1680 = vst [vmem:[#allocation2 + $0x10] sm:$0xff] %v1672
        %1681 = vst [vmem:[#allocation2 + $0x18] sm:$0xff] %v1673
        %1682 = vst [vmem:[#allocation2 + $0x20] sm:$0xff] %v1674
        %1683 = vst [vmem:[#allocation2 + $0x28] sm:$0xff] %v1675
        %1684 = vst [vmem:[#allocation2 + $0x30] sm:$0xff] %v1676
        %1685 = vst [vmem:[#allocation2 + $0x38] sm:$0xff] %v1677
        %v1686 = vld [vmem:[#allocation2] sm:$0xff]
        %v1687 = vld [vmem:[#allocation2 + $0x8] sm:$0xff]
        %v1688 = vld [vmem:[#allocation2 + $0x10] sm:$0xff]
        %v1689 = vld [vmem:[#allocation2 + $0x18] sm:$0xff]
        %v1690 = vld [vmem:[#allocation2 + $0x20] sm:$0xff]
        %v1691 = vld [vmem:[#allocation2 + $0x28] sm:$0xff]
        %v1692 = vld [vmem:[#allocation2 + $0x30] sm:$0xff]
        %v1693 = vld [vmem:[#allocation2 + $0x38] sm:$0xff]
        %v1694 = vld [vmem:[%s4] sm:$0xff]
        %v1695 = vld [vmem:[%s4 + $0x8] sm:$0xff]
        %v1696 = vld [vmem:[%s4 + $0x10] sm:$0xff]
        %v1697 = vld [vmem:[%s4 + $0x18] sm:$0xff]
        %1699 = vset.pattern.permute.xlu0 0
        %1700 = vperm.xlu0 %1699, %v1694
        %v1701 = vpop.permute.xlu0 %1700
        %1704 = vset.pattern.permute.xlu0 0
        %1705 = vperm.xlu0 %1704, %v1695
        %v1706 = vpop.permute.xlu0 %1705
        %1709 = vset.pattern.permute.xlu0 0
        %1710 = vperm.xlu0 %1709, %v1696
        %v1711 = vpop.permute.xlu0 %1710
        %1714 = vset.pattern.permute.xlu0 0
        %1715 = vperm.xlu0 %1714, %v1697
        %v1716 = vpop.permute.xlu0 %1715
        %v1718 = vadd.f32 %v1686, %v1701
        %v1719 = vadd.f32 %v1687, %v1701
        %v1720 = vadd.f32 %v1688, %v1706
        %v1721 = vadd.f32 %v1689, %v1706
        %v1722 = vadd.f32 %v1690, %v1711
        %v1723 = vadd.f32 %v1691, %v1711
        %v1724 = vadd.f32 %v1692, %v1716
        %v1725 = vadd.f32 %v1693, %v1716
        %v1726 = vmax.f32 %v1718, 0.0
        %v1727 = vmax.f32 %v1719, 0.0
        %v1728 = vmax.f32 %v1720, 0.0
        %v1729 = vmax.f32 %v1721, 0.0
        %v1730 = vmax.f32 %v1722, 0.0
        %v1731 = vmax.f32 %v1723, 0.0
        %v1732 = vmax.f32 %v1724, 0.0
        %v1733 = vmax.f32 %v1725, 0.0
        %v1734 = vpack.c.bf16 %v1728, %v1726
        %v1735 = vpack.c.bf16 %v1729, %v1727
        %v1736 = vpack.c.bf16 %v1732, %v1730
        %v1737 = vpack.c.bf16 %v1733, %v1731
        %1738 = vst [vmem:[#allocation3] sm:$0xff] %v1734
        %1739 = vst [vmem:[#allocation3 + $0x8] sm:$0xff] %v1735
        %1740 = vst [vmem:[#allocation3 + $0x10] sm:$0xff] %v1736
        %1741 = vst [vmem:[#allocation3 + $0x18] sm:$0xff] %v1737
        %v1742 = vld [vmem:[%s5] sm:$0xf]
        %v1743 = vld [vmem:[%s5 + $0x4] sm:$0xf]
        %v1744 = vld [vmem:[%s5 + $0x8] sm:$0xf]
        %v1745 = vld [vmem:[%s5 + $0xc] sm:$0xf]
        %v1746 = vld [vmem:[#allocation3] sm:$0xff]
        %v1747 = vld [vmem:[#allocation3 + $0x8] sm:$0xff]
        %v1748 = vld [vmem:[#allocation3 + $0x10] sm:$0xff]
        %v1749 = vld [vmem:[#allocation3 + $0x18] sm:$0xff]
        %v1750 = vld [vmem:[%s6] sm:$0xff]
        %v1751 = vld [vmem:[%s6 + $0x8] sm:$0xff]
        %v1752 = vld [vmem:[%s6 + $0x10] sm:$0xff]
        %v1753 = vld [vmem:[%s6 + $0x18] sm:$0xff]
        %1755 = vset.pattern.permute.xlu0 0
        %1756 = vperm.xlu0 %1755, %v1750
        %v1757 = vpop.permute.xlu0 %1756
        %1760 = vset.pattern.permute.xlu0 0
        %1761 = vperm.xlu0 %1760, %v1751
        %v1762 = vpop.permute.xlu0 %1761
        %1765 = vset.pattern.permute.xlu0 0
        %1766 = vperm.xlu0 %1765, %v1752
        %v1767 = vpop.permute.xlu0 %1766
        %1770 = vset.pattern.permute.xlu0 0
        %1771 = vperm.xlu0 %1770, %v1753
        %v1772 = vpop.permute.xlu0 %1771
        %v1778 = vunpack.c.l.b16 %v1742
        %v1779 = vunpack.c.l.b16 %v1743
        %v1780 = vunpack.c.l.b16 %v1744
        %v1781 = vunpack.c.l.b16 %v1745
        %v1782 = vpack.c.b16 %v1779, %v1778
        %v1783 = vpack.c.b16 %v1781, %v1780
        %vm1784 = vcmask 261120
        %v1786 = vsel %vm1784, %v1782, 0
        %v1789 = vsel %vm1784, %v1783, 0
        %1791 = vmatprep.subr.bf16.mxu0 %v1747
        %1792 = vmatpush1.bf16.msra.mxu0 %v1746
        %1793 = vmatprep.subr.bf16.mxu0 %v1749
        %1794 = vmatpush1.bf16.msra.mxu0 %v1748
        %1795 = vmatprep.subr.bf16.mxu0 0
        %1796 = vmatpush1.bf16.msra.mxu0 0
        %1797 = vmatprep.subr.bf16.mxu0 0
        %1798 = vmatpush1.bf16.msra.mxu0 0
        %1799 = vmatprep.subr.bf16.mxu0 0
        %1800 = vmatpush1.bf16.msra.mxu0 0
        %1801 = vmatprep.subr.bf16.mxu0 0
        %1802 = vmatpush1.bf16.msra.mxu0 0
        %1803 = vmatprep.subr.bf16.mxu0 0
        %1804 = vmatpush1.bf16.msra.mxu0 0
        %1805 = vmatprep.subr.bf16.mxu0 0
        %1806 = vmatpush1.bf16.msra.mxu0 0
        %1807 = vmatprep.subr.bf16.mxu0 0
        %1808 = vmatpush1.bf16.msra.mxu0 0
        %1809 = vmatprep.subr.bf16.mxu0 0
        %1810 = vmatpush1.bf16.msra.mxu0 0
        %1811 = vmatprep.subr.bf16.mxu0 0
        %1812 = vmatpush1.bf16.msra.mxu0 0
        %1813 = vmatprep.subr.bf16.mxu0 0
        %1814 = vmatpush1.bf16.msra.mxu0 0
        %1815 = vmatprep.subr.bf16.mxu0 0
        %1816 = vmatpush1.bf16.msra.mxu0 0
        %1817 = vmatprep.subr.bf16.mxu0 0
        %1818 = vmatpush1.bf16.msra.mxu0 0
        %1819 = vmatprep.subr.bf16.mxu0 0
        %1820 = vmatpush1.bf16.msra.mxu0 0
        %1821 = vmatprep.subr.bf16.mxu0 0
        %1822 = vmatpush1.bf16.msra.mxu0 0
        %1823 = vmatprep.mubr.bf16.mxu0 0
        %1824 = vmatmul.mubr.bf16.gmra.mrb[0].mxu0 %v1786
        %v1825 = vpop.f32.mrb[0].mxu0
        %v1826 = vadd.f32 %v1757, %v1825
        %v1827 = vpop.f32.mrb[0].mxu0
        %v1828 = vadd.f32 %v1757, %v1827
        %v1829 = vpop.f32.mrb[0].mxu0
        %v1830 = vadd.f32 %v1762, %v1829
        %v1831 = vpop.f32.mrb[0].mxu0
        %v1832 = vadd.f32 %v1762, %v1831
        %1833 = vmatprep.mubr.bf16.mxu0 0
        %1834 = vmatmul.mubr.bf16.gmra.mrb[0].mxu0 %v1789
        %v1835 = vpop.f32.mrb[0].mxu0
        %v1836 = vadd.f32 %v1767, %v1835
        %v1837 = vpop.f32.mrb[0].mxu0
        %v1838 = vadd.f32 %v1767, %v1837
        %v1839 = vpop.f32.mrb[0].mxu0
        %v1840 = vadd.f32 %v1772, %v1839
        %v1841 = vpop.f32.mrb[0].mxu0
        %v1842 = vadd.f32 %v1772, %v1841
        %1843 = vdwg.mxu0
        %v1844 = vmax.f32 %v1826, 0.0
        %v1845 = vmax.f32 %v1828, 0.0
        %v1846 = vmax.f32 %v1830, 0.0
        %v1847 = vmax.f32 %v1832, 0.0
        %v1848 = vmax.f32 %v1836, 0.0
        %v1849 = vmax.f32 %v1838, 0.0
        %v1850 = vmax.f32 %v1840, 0.0
        %v1851 = vmax.f32 %v1842, 0.0
        %v1852 = vpack.c.bf16 %v1846, %v1844
        %v1853 = vpack.c.bf16 %v1847, %v1845
        %v1854 = vpack.c.bf16 %v1850, %v1848
        %v1855 = vpack.c.bf16 %v1851, %v1849
        %1856 = vst [vmem:[#allocation4] sm:$0xff] %v1852
        %1857 = vst [vmem:[#allocation4 + $0x8] sm:$0xff] %v1853
        %1858 = vst [vmem:[#allocation4 + $0x10] sm:$0xff] %v1854
        %1859 = vst [vmem:[#allocation4 + $0x18] sm:$0xff] %v1855
        %1860 = vst [vmem:[#allocation5] sm:$0xff] 0.0
        %v1861 = vld [vmem:[%s7] sm:$0x3]
        %v1862 = vld [vmem:[#allocation4] sm:$0xff]
        %v1863 = vld [vmem:[#allocation4 + $0x8] sm:$0xff]
        %v1864 = vld [vmem:[#allocation4 + $0x10] sm:$0xff]
        %v1865 = vld [vmem:[#allocation4 + $0x18] sm:$0xff]
        %v1867 = vsel %vm1784, %v1861, 0
        %1869 = vmatprep.subr.bf16.mxu0 %v1863
        %1870 = vmatpush1.bf16.msra.mxu0 %v1862
        %1871 = vmatprep.subr.bf16.mxu0 %v1865
        %1872 = vmatpush1.bf16.msra.mxu0 %v1864
        %1873 = vmatprep.subr.bf16.mxu0 0
        %1874 = vmatpush1.bf16.msra.mxu0 0
        %1875 = vmatprep.subr.bf16.mxu0 0
        %1876 = vmatpush1.bf16.msra.mxu0 0
        %1877 = vmatprep.subr.bf16.mxu0 0
        %1878 = vmatpush1.bf16.msra.mxu0 0
        %1879 = vmatprep.subr.bf16.mxu0 0
        %1880 = vmatpush1.bf16.msra.mxu0 0
        %1881 = vmatprep.subr.bf16.mxu0 0
        %1882 = vmatpush1.bf16.msra.mxu0 0
        %1883 = vmatprep.subr.bf16.mxu0 0
        %1884 = vmatpush1.bf16.msra.mxu0 0
        %1885 = vmatprep.subr.bf16.mxu0 0
        %1886 = vmatpush1.bf16.msra.mxu0 0
        %1887 = vmatprep.subr.bf16.mxu0 0
        %1888 = vmatpush1.bf16.msra.mxu0 0
        %1889 = vmatprep.subr.bf16.mxu0 0
        %1890 = vmatpush1.bf16.msra.mxu0 0
        %1891 = vmatprep.subr.bf16.mxu0 0
        %1892 = vmatpush1.bf16.msra.mxu0 0
        %1893 = vmatprep.subr.bf16.mxu0 0
        %1894 = vmatpush1.bf16.msra.mxu0 0
        %1895 = vmatprep.subr.bf16.mxu0 0
        %1896 = vmatpush1.bf16.msra.mxu0 0
        %1897 = vmatprep.subr.bf16.mxu0 0
        %1898 = vmatpush1.bf16.msra.mxu0 0
        %1899 = vmatprep.subr.bf16.mxu0 0
        %1900 = vmatpush1.bf16.msra.mxu0 0
        %1901 = vmatprep.mubr.bf16.mxu0 0
        %1902 = vmatmul.mubr.bf16.gmra.mrb[0].mxu0 %v1867
        %v1903 = vpop.f32.mrb[0].mxu0
        %v1904 = vadd.f32 0.0, %v1903
        %v1905 = vpop.f32.mrb[0].mxu0
        %v1906 = vadd.f32 0.0, %v1905
        %v1907 = vpop.f32.mrb[0].mxu0
        %v1908 = vpop.f32.mrb[0].mxu0
        %1909 = vdwg.mxu0
        %v1910 = vld [vmem:[#allocation5] sm:$0xff]
        %1911 = vrot.lane.b32.xlu0 %v1904, 17
        %v1912 = vpop.permute.xlu0 %1911
        %1913 = vrot.lane.b32.xlu0 %v1906, 17
        %v1914 = vpop.permute.xlu0 %1913
        %v1915 = vsel %vm514, %v1912, %v1914
        %v1916 = vsel %vm514, %v1914, %v1912
        %v1917 = vld [vmem:[%s9] ss:$8 sm:$0x3]
        %v1919 = vlaneseq
        %v1920 = vshrl.u32 %v1919, 7
        %v1921 = vsub.s32 0, %v1920
        %v1922 = vrot.slane %v1917, %v1921
        %v1923 = vlaneseq
        %v1924 = vshrl.u32 %v1923, 7
        %v1925 = vsub.s32 1, %v1924
        %v1926 = vrot.slane %v1917, %v1925
        %v1929 = vmul.f32 %v1916, %v1922
        %v1930 = vmul.f32 %v1915, %v1926
        %v1933 = vcombine.low %v1929, %v1930
        %v1935 = vadd.f32 %v1910, %v1933
        %1936 = vst [vmem:[#allocation5] sm:$0xff] %v1935
        %s1937 = scalar_lea.vmem %s7, 2
        %v1938 = vld [vmem:[%s1937] sm:$0x3]
        %v1939 = vld [vmem:[#allocation4] sm:$0xff]
        %v1940 = vld [vmem:[#allocation4 + $0x8] sm:$0xff]
        %v1941 = vld [vmem:[#allocation4 + $0x10] sm:$0xff]
        %v1942 = vld [vmem:[#allocation4 + $0x18] sm:$0xff]
        %v1944 = vsel %vm1784, %v1938, 0
        %1946 = vmatprep.subr.bf16.mxu0 %v1940
        %1947 = vmatpush1.bf16.msra.mxu0 %v1939
        %1948 = vmatprep.subr.bf16.mxu0 %v1942
        %1949 = vmatpush1.bf16.msra.mxu0 %v1941
        %1950 = vmatprep.subr.bf16.mxu0 0
        %1951 = vmatpush1.bf16.msra.mxu0 0
        %1952 = vmatprep.subr.bf16.mxu0 0
        %1953 = vmatpush1.bf16.msra.mxu0 0
        %1954 = vmatprep.subr.bf16.mxu0 0
        %1955 = vmatpush1.bf16.msra.mxu0 0
        %1956 = vmatprep.subr.bf16.mxu0 0
        %1957 = vmatpush1.bf16.msra.mxu0 0
        %1958 = vmatprep.subr.bf16.mxu0 0
        %1959 = vmatpush1.bf16.msra.mxu0 0
        %1960 = vmatprep.subr.bf16.mxu0 0
        %1961 = vmatpush1.bf16.msra.mxu0 0
        %1962 = vmatprep.subr.bf16.mxu0 0
        %1963 = vmatpush1.bf16.msra.mxu0 0
        %1964 = vmatprep.subr.bf16.mxu0 0
        %1965 = vmatpush1.bf16.msra.mxu0 0
        %1966 = vmatprep.subr.bf16.mxu0 0
        %1967 = vmatpush1.bf16.msra.mxu0 0
        %1968 = vmatprep.subr.bf16.mxu0 0
        %1969 = vmatpush1.bf16.msra.mxu0 0
        %1970 = vmatprep.subr.bf16.mxu0 0
        %1971 = vmatpush1.bf16.msra.mxu0 0
        %1972 = vmatprep.subr.bf16.mxu0 0
        %1973 = vmatpush1.bf16.msra.mxu0 0
        %1974 = vmatprep.subr.bf16.mxu0 0
        %1975 = vmatpush1.bf16.msra.mxu0 0
        %1976 = vmatprep.subr.bf16.mxu0 0
        %1977 = vmatpush1.bf16.msra.mxu0 0
        %1978 = vmatprep.mubr.bf16.mxu0 0
        %1979 = vmatmul.mubr.bf16.gmra.mrb[0].mxu0 %v1944
        %v1980 = vpop.f32.mrb[0].mxu0
        %v1981 = vadd.f32 0.0, %v1980
        %v1982 = vpop.f32.mrb[0].mxu0
        %v1983 = vadd.f32 0.0, %v1982
        %v1984 = vpop.f32.mrb[0].mxu0
        %v1985 = vpop.f32.mrb[0].mxu0
        %1986 = vdwg.mxu0
        %v1987 = vld [vmem:[#allocation5] sm:$0xff]
        %1988 = vrot.lane.b32.xlu0 %v1981, 16
        %v1989 = vpop.permute.xlu0 %1988
        %1990 = vrot.lane.b32.xlu0 %v1983, 16
        %v1991 = vpop.permute.xlu0 %1990
        %v1992 = vsel %vm646, %v1989, %v1991
        %v1993 = vsel %vm646, %v1991, %v1989
        %v1994 = vld [vmem:[%s649] ss:$8 sm:$0x3]
        %v1996 = vlaneseq
        %v1997 = vshrl.u32 %v1996, 7
        %v1998 = vsub.s32 0, %v1997
        %v1999 = vrot.slane %v1994, %v1998
        %v2000 = vlaneseq
        %v2001 = vshrl.u32 %v2000, 7
        %v2002 = vsub.s32 1, %v2001
        %v2003 = vrot.slane %v1994, %v2002
        %v2006 = vmul.f32 %v1993, %v1999
        %v2007 = vmul.f32 %v1992, %v2003
        %v2010 = vcombine.low %v2006, %v2007
        %v2012 = vadd.f32 %v1987, %v2010
        %2013 = vst [vmem:[#allocation5] sm:$0xff] %v2012
        %s2014 = scalar_lea.vmem %s7, 4
        %v2015 = vld [vmem:[%s2014] sm:$0x3]
        %v2016 = vld [vmem:[#allocation4] sm:$0xff]
        %v2017 = vld [vmem:[#allocation4 + $0x8] sm:$0xff]
        %v2018 = vld [vmem:[#allocation4 + $0x10] sm:$0xff]
        %v2019 = vld [vmem:[#allocation4 + $0x18] sm:$0xff]
        %v2021 = vsel %vm1784, %v2015, 0
        %2023 = vmatprep.subr.bf16.mxu0 %v2017
        %2024 = vmatpush1.bf16.msra.mxu0 %v2016
        %2025 = vmatprep.subr.bf16.mxu0 %v2019
        %2026 = vmatpush1.bf16.msra.mxu0 %v2018
        %2027 = vmatprep.subr.bf16.mxu0 0
        %2028 = vmatpush1.bf16.msra.mxu0 0
        %2029 = vmatprep.subr.bf16.mxu0 0
        %2030 = vmatpush1.bf16.msra.mxu0 0
        %2031 = vmatprep.subr.bf16.mxu0 0
        %2032 = vmatpush1.bf16.msra.mxu0 0
        %2033 = vmatprep.subr.bf16.mxu0 0
        %2034 = vmatpush1.bf16.msra.mxu0 0
        %2035 = vmatprep.subr.bf16.mxu0 0
        %2036 = vmatpush1.bf16.msra.mxu0 0
        %2037 = vmatprep.subr.bf16.mxu0 0
        %2038 = vmatpush1.bf16.msra.mxu0 0
        %2039 = vmatprep.subr.bf16.mxu0 0
        %2040 = vmatpush1.bf16.msra.mxu0 0
        %2041 = vmatprep.subr.bf16.mxu0 0
        %2042 = vmatpush1.bf16.msra.mxu0 0
        %2043 = vmatprep.subr.bf16.mxu0 0
        %2044 = vmatpush1.bf16.msra.mxu0 0
        %2045 = vmatprep.subr.bf16.mxu0 0
        %2046 = vmatpush1.bf16.msra.mxu0 0
        %2047 = vmatprep.subr.bf16.mxu0 0
        %2048 = vmatpush1.bf16.msra.mxu0 0
        %2049 = vmatprep.subr.bf16.mxu0 0
        %2050 = vmatpush1.bf16.msra.mxu0 0
        %2051 = vmatprep.subr.bf16.mxu0 0
        %2052 = vmatpush1.bf16.msra.mxu0 0
        %2053 = vmatprep.subr.bf16.mxu0 0
        %2054 = vmatpush1.bf16.msra.mxu0 0
        %2055 = vmatprep.mubr.bf16.mxu0 0
        %2056 = vmatmul.mubr.bf16.gmra.mrb[0].mxu0 %v2021
        %v2057 = vpop.f32.mrb[0].mxu0
        %v2058 = vadd.f32 0.0, %v2057
        %v2059 = vpop.f32.mrb[0].mxu0
        %v2060 = vadd.f32 0.0, %v2059
        %v2061 = vpop.f32.mrb[0].mxu0
        %v2062 = vpop.f32.mrb[0].mxu0
        %2063 = vdwg.mxu0
        %v2064 = vld [vmem:[#allocation5] sm:$0xff]
        %2065 = vrot.lane.b32.xlu0 %v2058, 15
        %v2066 = vpop.permute.xlu0 %2065
        %2067 = vrot.lane.b32.xlu0 %v2060, 15
        %v2068 = vpop.permute.xlu0 %2067
        %v2069 = vsel %vm778, %v2066, %v2068
        %v2070 = vsel %vm778, %v2068, %v2066
        %v2071 = vld [vmem:[%s781] ss:$8 sm:$0x3]
        %v2073 = vlaneseq
        %v2074 = vshrl.u32 %v2073, 7
        %v2075 = vsub.s32 0, %v2074
        %v2076 = vrot.slane %v2071, %v2075
        %v2077 = vlaneseq
        %v2078 = vshrl.u32 %v2077, 7
        %v2079 = vsub.s32 1, %v2078
        %v2080 = vrot.slane %v2071, %v2079
        %v2083 = vmul.f32 %v2070, %v2076
        %v2084 = vmul.f32 %v2069, %v2080
        %v2087 = vcombine.low %v2083, %v2084
        %v2089 = vadd.f32 %v2064, %v2087
        %2090 = vst [vmem:[#allocation5] sm:$0xff] %v2089
        %s2091 = scalar_lea.vmem %s7, 6
        %v2092 = vld [vmem:[%s2091] sm:$0x3]
        %v2093 = vld [vmem:[#allocation4] sm:$0xff]
        %v2094 = vld [vmem:[#allocation4 + $0x8] sm:$0xff]
        %v2095 = vld [vmem:[#allocation4 + $0x10] sm:$0xff]
        %v2096 = vld [vmem:[#allocation4 + $0x18] sm:$0xff]
        %v2098 = vsel %vm1784, %v2092, 0
        %2100 = vmatprep.subr.bf16.mxu0 %v2094
        %2101 = vmatpush1.bf16.msra.mxu0 %v2093
        %2102 = vmatprep.subr.bf16.mxu0 %v2096
        %2103 = vmatpush1.bf16.msra.mxu0 %v2095
        %2104 = vmatprep.subr.bf16.mxu0 0
        %2105 = vmatpush1.bf16.msra.mxu0 0
        %2106 = vmatprep.subr.bf16.mxu0 0
        %2107 = vmatpush1.bf16.msra.mxu0 0
        %2108 = vmatprep.subr.bf16.mxu0 0
        %2109 = vmatpush1.bf16.msra.mxu0 0
        %2110 = vmatprep.subr.bf16.mxu0 0
        %2111 = vmatpush1.bf16.msra.mxu0 0
        %2112 = vmatprep.subr.bf16.mxu0 0
        %2113 = vmatpush1.bf16.msra.mxu0 0
        %2114 = vmatprep.subr.bf16.mxu0 0
        %2115 = vmatpush1.bf16.msra.mxu0 0
        %2116 = vmatprep.subr.bf16.mxu0 0
        %2117 = vmatpush1.bf16.msra.mxu0 0
        %2118 = vmatprep.subr.bf16.mxu0 0
        %2119 = vmatpush1.bf16.msra.mxu0 0
        %2120 = vmatprep.subr.bf16.mxu0 0
        %2121 = vmatpush1.bf16.msra.mxu0 0
        %2122 = vmatprep.subr.bf16.mxu0 0
        %2123 = vmatpush1.bf16.msra.mxu0 0
        %2124 = vmatprep.subr.bf16.mxu0 0
        %2125 = vmatpush1.bf16.msra.mxu0 0
        %2126 = vmatprep.subr.bf16.mxu0 0
        %2127 = vmatpush1.bf16.msra.mxu0 0
        %2128 = vmatprep.subr.bf16.mxu0 0
        %2129 = vmatpush1.bf16.msra.mxu0 0
        %2130 = vmatprep.subr.bf16.mxu0 0
        %2131 = vmatpush1.bf16.msra.mxu0 0
        %2132 = vmatprep.mubr.bf16.mxu0 0
        %2133 = vmatmul.mubr.bf16.gmra.mrb[0].mxu0 %v2098
        %v2134 = vpop.f32.mrb[0].mxu0
        %v2135 = vadd.f32 0.0, %v2134
        %v2136 = vpop.f32.mrb[0].mxu0
        %v2137 = vadd.f32 0.0, %v2136
        %v2138 = vpop.f32.mrb[0].mxu0
        %v2139 = vpop.f32.mrb[0].mxu0
        %2140 = vdwg.mxu0
        %v2141 = vld [vmem:[#allocation5] sm:$0xff]
        %2142 = vrot.lane.b32.xlu0 %v2135, 1
        %v2143 = vpop.permute.xlu0 %2142
        %2144 = vrot.lane.b32.xlu0 %v2137, 1
        %v2145 = vpop.permute.xlu0 %2144
        %v2146 = vsel %vm910, %v2143, %v2145
        %v2147 = vsel %vm910, %v2145, %v2143
        %v2148 = vld [vmem:[%s913] ss:$8 sm:$0x3]
        %v2150 = vlaneseq
        %v2151 = vshrl.u32 %v2150, 7
        %v2152 = vsub.s32 0, %v2151
        %v2153 = vrot.slane %v2148, %v2152
        %v2154 = vlaneseq
        %v2155 = vshrl.u32 %v2154, 7
        %v2156 = vsub.s32 1, %v2155
        %v2157 = vrot.slane %v2148, %v2156
        %v2160 = vmul.f32 %v2147, %v2153
        %v2161 = vmul.f32 %v2146, %v2157
        %v2164 = vcombine.low %v2160, %v2161
        %v2166 = vadd.f32 %v2141, %v2164
        %2167 = vst [vmem:[#allocation5] sm:$0xff] %v2166
        %s2168 = scalar_lea.vmem %s7, 8
        %v2169 = vld [vmem:[%s2168] sm:$0x3]
        %v2170 = vld [vmem:[#allocation4] sm:$0xff]
        %v2171 = vld [vmem:[#allocation4 + $0x8] sm:$0xff]
        %v2172 = vld [vmem:[#allocation4 + $0x10] sm:$0xff]
        %v2173 = vld [vmem:[#allocation4 + $0x18] sm:$0xff]
        %v2175 = vsel %vm1784, %v2169, 0
        %2177 = vmatprep.subr.bf16.mxu0 %v2171
        %2178 = vmatpush1.bf16.msra.mxu0 %v2170
        %2179 = vmatprep.subr.bf16.mxu0 %v2173
        %2180 = vmatpush1.bf16.msra.mxu0 %v2172
        %2181 = vmatprep.subr.bf16.mxu0 0
        %2182 = vmatpush1.bf16.msra.mxu0 0
        %2183 = vmatprep.subr.bf16.mxu0 0
        %2184 = vmatpush1.bf16.msra.mxu0 0
        %2185 = vmatprep.subr.bf16.mxu0 0
        %2186 = vmatpush1.bf16.msra.mxu0 0
        %2187 = vmatprep.subr.bf16.mxu0 0
        %2188 = vmatpush1.bf16.msra.mxu0 0
        %2189 = vmatprep.subr.bf16.mxu0 0
        %2190 = vmatpush1.bf16.msra.mxu0 0
        %2191 = vmatprep.subr.bf16.mxu0 0
        %2192 = vmatpush1.bf16.msra.mxu0 0
        %2193 = vmatprep.subr.bf16.mxu0 0
        %2194 = vmatpush1.bf16.msra.mxu0 0
        %2195 = vmatprep.subr.bf16.mxu0 0
        %2196 = vmatpush1.bf16.msra.mxu0 0
        %2197 = vmatprep.subr.bf16.mxu0 0
        %2198 = vmatpush1.bf16.msra.mxu0 0
        %2199 = vmatprep.subr.bf16.mxu0 0
        %2200 = vmatpush1.bf16.msra.mxu0 0
        %2201 = vmatprep.subr.bf16.mxu0 0
        %2202 = vmatpush1.bf16.msra.mxu0 0
        %2203 = vmatprep.subr.bf16.mxu0 0
        %2204 = vmatpush1.bf16.msra.mxu0 0
        %2205 = vmatprep.subr.bf16.mxu0 0
        %2206 = vmatpush1.bf16.msra.mxu0 0
        %2207 = vmatprep.subr.bf16.mxu0 0
        %2208 = vmatpush1.bf16.msra.mxu0 0
        %2209 = vmatprep.mubr.bf16.mxu0 0
        %2210 = vmatmul.mubr.bf16.gmra.mrb[0].mxu0 %v2175
        %v2211 = vpop.f32.mrb[0].mxu0
        %v2212 = vadd.f32 0.0, %v2211
        %v2213 = vpop.f32.mrb[0].mxu0
        %v2214 = vadd.f32 0.0, %v2213
        %v2215 = vpop.f32.mrb[0].mxu0
        %v2216 = vpop.f32.mrb[0].mxu0
        %2217 = vdwg.mxu0
        %v2218 = vld [vmem:[#allocation5] sm:$0xff]
        %v2219 = vld [vmem:[%s1035] ss:$8 sm:$0x3]
        %v2221 = vlaneseq
        %v2222 = vshrl.u32 %v2221, 7
        %v2223 = vsub.s32 0, %v2222
        %v2224 = vrot.slane %v2219, %v2223
        %v2225 = vlaneseq
        %v2226 = vshrl.u32 %v2225, 7
        %v2227 = vsub.s32 1, %v2226
        %v2228 = vrot.slane %v2219, %v2227
        %v2231 = vmul.f32 %v2212, %v2224
        %v2232 = vmul.f32 %v2214, %v2228
        %v2235 = vcombine.low %v2231, %v2232
        %v2237 = vadd.f32 %v2218, %v2235
        %2238 = vst [vmem:[#allocation5] sm:$0xff] %v2237
        %s2239 = scalar_lea.vmem %s7, 10
        %v2240 = vld [vmem:[%s2239] sm:$0x3]
        %v2241 = vld [vmem:[#allocation4] sm:$0xff]
        %v2242 = vld [vmem:[#allocation4 + $0x8] sm:$0xff]
        %v2243 = vld [vmem:[#allocation4 + $0x10] sm:$0xff]
        %v2244 = vld [vmem:[#allocation4 + $0x18] sm:$0xff]
        %v2246 = vsel %vm1784, %v2240, 0
        %2248 = vmatprep.subr.bf16.mxu0 %v2242
        %2249 = vmatpush1.bf16.msra.mxu0 %v2241
        %2250 = vmatprep.subr.bf16.mxu0 %v2244
        %2251 = vmatpush1.bf16.msra.mxu0 %v2243
        %2252 = vmatprep.subr.bf16.mxu0 0
        %2253 = vmatpush1.bf16.msra.mxu0 0
        %2254 = vmatprep.subr.bf16.mxu0 0
        %2255 = vmatpush1.bf16.msra.mxu0 0
        %2256 = vmatprep.subr.bf16.mxu0 0
        %2257 = vmatpush1.bf16.msra.mxu0 0
        %2258 = vmatprep.subr.bf16.mxu0 0
        %2259 = vmatpush1.bf16.msra.mxu0 0
        %2260 = vmatprep.subr.bf16.mxu0 0
        %2261 = vmatpush1.bf16.msra.mxu0 0
        %2262 = vmatprep.subr.bf16.mxu0 0
        %2263 = vmatpush1.bf16.msra.mxu0 0
        %2264 = vmatprep.subr.bf16.mxu0 0
        %2265 = vmatpush1.bf16.msra.mxu0 0
        %2266 = vmatprep.subr.bf16.mxu0 0
        %2267 = vmatpush1.bf16.msra.mxu0 0
        %2268 = vmatprep.subr.bf16.mxu0 0
        %2269 = vmatpush1.bf16.msra.mxu0 0
        %2270 = vmatprep.subr.bf16.mxu0 0
        %2271 = vmatpush1.bf16.msra.mxu0 0
        %2272 = vmatprep.subr.bf16.mxu0 0
        %2273 = vmatpush1.bf16.msra.mxu0 0
        %2274 = vmatprep.subr.bf16.mxu0 0
        %2275 = vmatpush1.bf16.msra.mxu0 0
        %2276 = vmatprep.subr.bf16.mxu0 0
        %2277 = vmatpush1.bf16.msra.mxu0 0
        %2278 = vmatprep.subr.bf16.mxu0 0
        %2279 = vmatpush1.bf16.msra.mxu0 0
        %2280 = vmatprep.mubr.bf16.mxu0 0
        %2281 = vmatmul.mubr.bf16.gmra.mrb[0].mxu0 %v2246
        %v2282 = vpop.f32.mrb[0].mxu0
        %v2283 = vadd.f32 0.0, %v2282
        %v2284 = vpop.f32.mrb[0].mxu0
        %v2285 = vadd.f32 0.0, %v2284
        %v2286 = vpop.f32.mrb[0].mxu0
        %v2287 = vpop.f32.mrb[0].mxu0
        %2288 = vdwg.mxu0
        %v2289 = vld [vmem:[#allocation5] sm:$0xff]
        %2290 = vrot.lane.b32.xlu0 %v2283, 127
        %v2291 = vpop.permute.xlu0 %2290
        %2292 = vrot.lane.b32.xlu0 %v2285, 127
        %v2293 = vpop.permute.xlu0 %2292
        %v2294 = vsel %vm1166, %v2291, %v2293
        %v2295 = vsel %vm1166, %v2293, %v2291
        %v2296 = vld [vmem:[%s1169] ss:$8 sm:$0x3]
        %v2298 = vlaneseq
        %v2299 = vshrl.u32 %v2298, 7
        %v2300 = vsub.s32 0, %v2299
        %v2301 = vrot.slane %v2296, %v2300
        %v2302 = vlaneseq
        %v2303 = vshrl.u32 %v2302, 7
        %v2304 = vsub.s32 1, %v2303
        %v2305 = vrot.slane %v2296, %v2304
        %v2308 = vmul.f32 %v2294, %v2301
        %v2309 = vmul.f32 %v2295, %v2305
        %v2312 = vcombine.low %v2308, %v2309
        %v2314 = vadd.f32 %v2289, %v2312
        %2315 = vst [vmem:[#allocation5] sm:$0xff] %v2314
        %s2316 = scalar_lea.vmem %s7, 12
        %v2317 = vld [vmem:[%s2316] sm:$0x3]
        %v2318 = vld [vmem:[#allocation4] sm:$0xff]
        %v2319 = vld [vmem:[#allocation4 + $0x8] sm:$0xff]
        %v2320 = vld [vmem:[#allocation4 + $0x10] sm:$0xff]
        %v2321 = vld [vmem:[#allocation4 + $0x18] sm:$0xff]
        %v2323 = vsel %vm1784, %v2317, 0
        %2325 = vmatprep.subr.bf16.mxu0 %v2319
        %2326 = vmatpush1.bf16.msra.mxu0 %v2318
        %2327 = vmatprep.subr.bf16.mxu0 %v2321
        %2328 = vmatpush1.bf16.msra.mxu0 %v2320
        %2329 = vmatprep.subr.bf16.mxu0 0
        %2330 = vmatpush1.bf16.msra.mxu0 0
        %2331 = vmatprep.subr.bf16.mxu0 0
        %2332 = vmatpush1.bf16.msra.mxu0 0
        %2333 = vmatprep.subr.bf16.mxu0 0
        %2334 = vmatpush1.bf16.msra.mxu0 0
        %2335 = vmatprep.subr.bf16.mxu0 0
        %2336 = vmatpush1.bf16.msra.mxu0 0
        %2337 = vmatprep.subr.bf16.mxu0 0
        %2338 = vmatpush1.bf16.msra.mxu0 0
        %2339 = vmatprep.subr.bf16.mxu0 0
        %2340 = vmatpush1.bf16.msra.mxu0 0
        %2341 = vmatprep.subr.bf16.mxu0 0
        %2342 = vmatpush1.bf16.msra.mxu0 0
        %2343 = vmatprep.subr.bf16.mxu0 0
        %2344 = vmatpush1.bf16.msra.mxu0 0
        %2345 = vmatprep.subr.bf16.mxu0 0
        %2346 = vmatpush1.bf16.msra.mxu0 0
        %2347 = vmatprep.subr.bf16.mxu0 0
        %2348 = vmatpush1.bf16.msra.mxu0 0
        %2349 = vmatprep.subr.bf16.mxu0 0
        %2350 = vmatpush1.bf16.msra.mxu0 0
        %2351 = vmatprep.subr.bf16.mxu0 0
        %2352 = vmatpush1.bf16.msra.mxu0 0
        %2353 = vmatprep.subr.bf16.mxu0 0
        %2354 = vmatpush1.bf16.msra.mxu0 0
        %2355 = vmatprep.subr.bf16.mxu0 0
        %2356 = vmatpush1.bf16.msra.mxu0 0
        %2357 = vmatprep.mubr.bf16.mxu0 0
        %2358 = vmatmul.mubr.bf16.gmra.mrb[0].mxu0 %v2323
        %v2359 = vpop.f32.mrb[0].mxu0
        %v2360 = vadd.f32 0.0, %v2359
        %v2361 = vpop.f32.mrb[0].mxu0
        %v2362 = vadd.f32 0.0, %v2361
        %v2363 = vpop.f32.mrb[0].mxu0
        %v2364 = vpop.f32.mrb[0].mxu0
        %2365 = vdwg.mxu0
        %v2366 = vld [vmem:[#allocation5] sm:$0xff]
        %2367 = vrot.lane.b32.xlu0 %v2360, 113
        %v2368 = vpop.permute.xlu0 %2367
        %2369 = vrot.lane.b32.xlu0 %v2362, 113
        %v2370 = vpop.permute.xlu0 %2369
        %v2371 = vsel %vm1298, %v2368, %v2370
        %v2372 = vsel %vm1298, %v2370, %v2368
        %v2373 = vld [vmem:[%s1301] ss:$8 sm:$0x3]
        %v2375 = vlaneseq
        %v2376 = vshrl.u32 %v2375, 7
        %v2377 = vsub.s32 0, %v2376
        %v2378 = vrot.slane %v2373, %v2377
        %v2379 = vlaneseq
        %v2380 = vshrl.u32 %v2379, 7
        %v2381 = vsub.s32 1, %v2380
        %v2382 = vrot.slane %v2373, %v2381
        %v2385 = vmul.f32 %v2371, %v2378
        %v2386 = vmul.f32 %v2372, %v2382
        %v2389 = vcombine.low %v2385, %v2386
        %v2391 = vadd.f32 %v2366, %v2389
        %2392 = vst [vmem:[#allocation5] sm:$0xff] %v2391
        %s2393 = scalar_lea.vmem %s7, 14
        %v2394 = vld [vmem:[%s2393] sm:$0x3]
        %v2395 = vld [vmem:[#allocation4] sm:$0xff]
        %v2396 = vld [vmem:[#allocation4 + $0x8] sm:$0xff]
        %v2397 = vld [vmem:[#allocation4 + $0x10] sm:$0xff]
        %v2398 = vld [vmem:[#allocation4 + $0x18] sm:$0xff]
        %v2400 = vsel %vm1784, %v2394, 0
        %2402 = vmatprep.subr.bf16.mxu0 %v2396
        %2403 = vmatpush1.bf16.msra.mxu0 %v2395
        %2404 = vmatprep.subr.bf16.mxu0 %v2398
        %2405 = vmatpush1.bf16.msra.mxu0 %v2397
        %2406 = vmatprep.subr.bf16.mxu0 0
        %2407 = vmatpush1.bf16.msra.mxu0 0
        %2408 = vmatprep.subr.bf16.mxu0 0
        %2409 = vmatpush1.bf16.msra.mxu0 0
        %2410 = vmatprep.subr.bf16.mxu0 0
        %2411 = vmatpush1.bf16.msra.mxu0 0
        %2412 = vmatprep.subr.bf16.mxu0 0
        %2413 = vmatpush1.bf16.msra.mxu0 0
        %2414 = vmatprep.subr.bf16.mxu0 0
        %2415 = vmatpush1.bf16.msra.mxu0 0
        %2416 = vmatprep.subr.bf16.mxu0 0
        %2417 = vmatpush1.bf16.msra.mxu0 0
        %2418 = vmatprep.subr.bf16.mxu0 0
        %2419 = vmatpush1.bf16.msra.mxu0 0
        %2420 = vmatprep.subr.bf16.mxu0 0
        %2421 = vmatpush1.bf16.msra.mxu0 0
        %2422 = vmatprep.subr.bf16.mxu0 0
        %2423 = vmatpush1.bf16.msra.mxu0 0
        %2424 = vmatprep.subr.bf16.mxu0 0
        %2425 = vmatpush1.bf16.msra.mxu0 0
        %2426 = vmatprep.subr.bf16.mxu0 0
        %2427 = vmatpush1.bf16.msra.mxu0 0
        %2428 = vmatprep.subr.bf16.mxu0 0
        %2429 = vmatpush1.bf16.msra.mxu0 0
        %2430 = vmatprep.subr.bf16.mxu0 0
        %2431 = vmatpush1.bf16.msra.mxu0 0
        %2432 = vmatprep.subr.bf16.mxu0 0
        %2433 = vmatpush1.bf16.msra.mxu0 0
        %2434 = vmatprep.mubr.bf16.mxu0 0
        %2435 = vmatmul.mubr.bf16.gmra.mrb[0].mxu0 %v2400
        %v2436 = vpop.f32.mrb[0].mxu0
        %v2437 = vadd.f32 0.0, %v2436
        %v2438 = vpop.f32.mrb[0].mxu0
        %v2439 = vadd.f32 0.0, %v2438
        %v2440 = vpop.f32.mrb[0].mxu0
        %v2441 = vpop.f32.mrb[0].mxu0
        %2442 = vdwg.mxu0
        %v2443 = vld [vmem:[#allocation5] sm:$0xff]
        %2444 = vrot.lane.b32.xlu0 %v2437, 112
        %v2445 = vpop.permute.xlu0 %2444
        %2446 = vrot.lane.b32.xlu0 %v2439, 112
        %v2447 = vpop.permute.xlu0 %2446
        %v2448 = vsel %vm1430, %v2445, %v2447
        %v2449 = vsel %vm1430, %v2447, %v2445
        %v2450 = vld [vmem:[%s1433] ss:$8 sm:$0x3]
        %v2452 = vlaneseq
        %v2453 = vshrl.u32 %v2452, 7
        %v2454 = vsub.s32 0, %v2453
        %v2455 = vrot.slane %v2450, %v2454
        %v2456 = vlaneseq
        %v2457 = vshrl.u32 %v2456, 7
        %v2458 = vsub.s32 1, %v2457
        %v2459 = vrot.slane %v2450, %v2458
        %v2462 = vmul.f32 %v2448, %v2455
        %v2463 = vmul.f32 %v2449, %v2459
        %v2466 = vcombine.low %v2462, %v2463
        %v2468 = vadd.f32 %v2443, %v2466
        %2469 = vst [vmem:[#allocation5] sm:$0xff] %v2468
        %s2470 = scalar_lea.vmem %s7, 16
        %v2471 = vld [vmem:[%s2470] sm:$0x3]
        %v2472 = vld [vmem:[#allocation4] sm:$0xff]
        %v2473 = vld [vmem:[#allocation4 + $0x8] sm:$0xff]
        %v2474 = vld [vmem:[#allocation4 + $0x10] sm:$0xff]
        %v2475 = vld [vmem:[#allocation4 + $0x18] sm:$0xff]
        %v2477 = vsel %vm1784, %v2471, 0
        %2479 = vmatprep.subr.bf16.mxu0 %v2473
        %2480 = vmatpush1.bf16.msra.mxu0 %v2472
        %2481 = vmatprep.subr.bf16.mxu0 %v2475
        %2482 = vmatpush1.bf16.msra.mxu0 %v2474
        %2483 = vmatprep.subr.bf16.mxu0 0
        %2484 = vmatpush1.bf16.msra.mxu0 0
        %2485 = vmatprep.subr.bf16.mxu0 0
        %2486 = vmatpush1.bf16.msra.mxu0 0
        %2487 = vmatprep.subr.bf16.mxu0 0
        %2488 = vmatpush1.bf16.msra.mxu0 0
        %2489 = vmatprep.subr.bf16.mxu0 0
        %2490 = vmatpush1.bf16.msra.mxu0 0
        %2491 = vmatprep.subr.bf16.mxu0 0
        %2492 = vmatpush1.bf16.msra.mxu0 0
        %2493 = vmatprep.subr.bf16.mxu0 0
        %2494 = vmatpush1.bf16.msra.mxu0 0
        %2495 = vmatprep.subr.bf16.mxu0 0
        %2496 = vmatpush1.bf16.msra.mxu0 0
        %2497 = vmatprep.subr.bf16.mxu0 0
        %2498 = vmatpush1.bf16.msra.mxu0 0
        %2499 = vmatprep.subr.bf16.mxu0 0
        %2500 = vmatpush1.bf16.msra.mxu0 0
        %2501 = vmatprep.subr.bf16.mxu0 0
        %2502 = vmatpush1.bf16.msra.mxu0 0
        %2503 = vmatprep.subr.bf16.mxu0 0
        %2504 = vmatpush1.bf16.msra.mxu0 0
        %2505 = vmatprep.subr.bf16.mxu0 0
        %2506 = vmatpush1.bf16.msra.mxu0 0
        %2507 = vmatprep.subr.bf16.mxu0 0
        %2508 = vmatpush1.bf16.msra.mxu0 0
        %2509 = vmatprep.subr.bf16.mxu0 0
        %2510 = vmatpush1.bf16.msra.mxu0 0
        %2511 = vmatprep.mubr.bf16.mxu0 0
        %2512 = vmatmul.mubr.bf16.gmra.mrb[0].mxu0 %v2477
        %v2513 = vpop.f32.mrb[0].mxu0
        %v2514 = vadd.f32 0.0, %v2513
        %v2515 = vpop.f32.mrb[0].mxu0
        %v2516 = vadd.f32 0.0, %v2515
        %v2517 = vpop.f32.mrb[0].mxu0
        %v2518 = vpop.f32.mrb[0].mxu0
        %2519 = vdwg.mxu0
        %v2520 = vld [vmem:[#allocation5] sm:$0xff]
        %2521 = vrot.lane.b32.xlu0 %v2514, 111
        %v2522 = vpop.permute.xlu0 %2521
        %2523 = vrot.lane.b32.xlu0 %v2516, 111
        %v2524 = vpop.permute.xlu0 %2523
        %v2525 = vsel %vm1562, %v2522, %v2524
        %v2526 = vsel %vm1562, %v2524, %v2522
        %v2527 = vld [vmem:[%s1565] ss:$8 sm:$0x3]
        %v2529 = vlaneseq
        %v2530 = vshrl.u32 %v2529, 7
        %v2531 = vsub.s32 0, %v2530
        %v2532 = vrot.slane %v2527, %v2531
        %v2533 = vlaneseq
        %v2534 = vshrl.u32 %v2533, 7
        %v2535 = vsub.s32 1, %v2534
        %v2536 = vrot.slane %v2527, %v2535
        %v2539 = vmul.f32 %v2525, %v2532
        %v2540 = vmul.f32 %v2526, %v2536
        %v2543 = vcombine.low %v2539, %v2540
        %v2545 = vadd.f32 %v2520, %v2543
        %2546 = vst [vmem:[#allocation5] sm:$0xff] %v2545
        %v2547 = vld [vmem:[#allocation5] sm:$0xff]
        %v2548 = vld [vmem:[%s8] sm:$0xf]
        %2550 = vset.pattern.permute.xlu0 0
        %2551 = vperm.xlu0 %2550, %v2548
        %v2552 = vpop.permute.xlu0 %2551
        %v2554 = vunpack.c.l.s4 839922192
        %v2555 = vunpack.c.0.s8 %v2554
        %v2556 = vlaneseq
        %v2557 = vshrl.u32 %v2556, 7
        %v2558 = vsub.s32 %v2555, %v2557
        %v2559 = vrot.slane %v2552, %v2558
        %v2561 = vadd.f32 %v2547, %v2559
        %v2562 = vadd.f32 %v2561, 0.0
        %v2563 = vsub.f32 0.0, %v2562
        %v2564 = vmul.f32 %v2563, 1.442695
        %v2565 = vpow.pop %v2564
        %v2566 = vadd.f32 %v2565, 1.0
        %v2567 = vrcp.pop %v2566
        %v2568 = vadd.f32 %v2567, 0.001
        %v2569 = vld [vmem:[%s384] sm:$0xcc]
        %v2571 = vrot.slane %v2561, 6
        %v2573 = vadd.f32 %v2569, %v2571
        %v2574 = vmul.f32 %v2573, %v2568
        %2575 = vst [vmem:[%s384] sm:$0xcc] %v2574
        %v2576 = vmul.f32 %v2566, 0.001
        %v2577 = vadd.f32 %v2576, 1.0
        %v2578 = vlog2.pop %v2577
        %v2579 = vmul.f32 %v2578, 0.6931472
        %v2580 = vlog2.pop %v2566
        %v2581 = vmul.f32 %v2580, 0.6931472
        %v2582 = vsub.f32 %v2579, %v2581
        %v2584 = vcombine.high %v2582, %v2582
        %v2585 = vrot.slane %v2582, 2
        %v2586 = vrot.slane %v2584, 2
        %vm2589 = vcmask 1041408
        %v2590 = vsel %vm2589, %v2585, 0.0
        %v2591 = vrot.slane %v2590, 4
        %v2592 = vadd.f32 %v2590, %v2591
        %v2593 = vrot.slane %v2592, 2
        %v2594 = vadd.f32 %v2592, %v2593
        %v2595 = vrot.slane %v2594, 1
        %v2596 = vadd.f32 %v2594, %v2595
        %v2597 = vsel %vm2589, %v2586, 0.0
        %v2598 = vrot.slane %v2597, 4
        %v2599 = vadd.f32 %v2597, %v2598
        %v2600 = vrot.slane %v2599, 2
        %v2601 = vadd.f32 %v2599, %v2600
        %v2602 = vrot.slane %v2601, 1
        %v2603 = vadd.f32 %v2601, %v2602
        %v2606 = vcombine.low %v2596, %v2603
        %v2608 = vunpack.c.l.s4 1966171168
        %v2609 = vunpack.c.0.s8 %v2608
        %v2610 = vlaneseq
        %v2611 = vshrl.u32 %v2610, 7
        %v2612 = vsub.s32 %v2609, %v2611
        %v2613 = vrot.slane %v2606, %v2612
        %v2615 = vunpack.c.l.s4 1966171168
        %v2616 = vunpack.c.0.s8 %v2615
        %v2617 = vlaneseq
        %v2618 = vshrl.u32 %v2617, 7
        %v2619 = vsub.s32 %v2616, %v2618
        %v2620 = vrot.slane %v2613, %v2619
        %v2622 = vlaneseq
        %vm2623 = vcmp.ge.s32.totalorder %v2622, 0
        %vm2624 = vcmp.lt.s32.totalorder %v2622, 256
        %vm2625 = vmand %vm2623, %vm2624
        %2626 = vst.msk [vmem:[%s391] sm:$0x3] %vm2625, %v2620
        %s2627 = sand.u32 %s252, 1
        %s2628 = scalar_lea.sflag [#allocation7], %s2627
        %s2629 = sand.u32 %s252, 1
        %s2630 = smul.addr %s2629, 8
        %s2631 = scalar_lea.vmem [#allocation6], %s2630
        %s2632 = sand.u32 %s278, 1
        %s2633 = scalar_lea.sflag [#allocation9], %s2632
        %s2634 = sand.u32 %s278, 1
        %s2635 = smul.addr %s2634, 2
        %s2636 = scalar_lea.vmem [#allocation8], %s2635
        // Predicated region
        $region61: #{tpu_custom_call.1} parent=59 // pred_check
          %p2637 = pneg %p262
        $region62: #{tpu_custom_call.1} parent=59 // pred_check_branch
          %2639 = sbr.rel (%p2637) target = $region64
        $region63: #{tpu_custom_call.1} parent=59 // pred_region
          %s2640 = smul.u32 2, %s29
          %s2642 = ssub.s32 128, 128
          %2643 = vsyncadd %s2628, %s2642
          %s2644 = smul.addr %s2640, 64
          %s2645 = scalar_lea.hbm %s10, %s2644
          %s2647 = sshll.u32 %s2631, 4
          %s2648 = int_to_ptr.vmem [resolvable:$true] %s2647
          %2650 = dma.vmem_to_hbm [thread:$0]  %s2648, 128, %s2645, %s2628
        $region64: #{tpu_custom_call.1} parent=59 // pred_fallthru
          _
        // Predicated region
        $region65: #{tpu_custom_call.1} parent=59 // pred_check
          %p2651 = pneg %p288
        $region66: #{tpu_custom_call.1} parent=59 // pred_check_branch
          %2653 = sbr.rel (%p2651) target = $region68
        $region67: #{tpu_custom_call.1} parent=59 // pred_region
          %s2654 = smul.u32 2, %s29
          %s2656 = ssub.s32 32, 32
          %2657 = vsyncadd %s2633, %s2656
          %s2658 = smul.addr %s2654, 16
          %s2659 = scalar_lea.hbm %s11, %s2658
          %s2661 = sshll.u32 %s2636, 4
          %s2662 = int_to_ptr.vmem [resolvable:$true] %s2661
          %2664 = dma.vmem_to_hbm [thread:$0]  %s2662, 32, %s2659, %s2633
        $region68: #{tpu_custom_call.1} parent=59 // pred_fallthru
          _
      $region60: #{tpu_custom_call.1} parent=5 // pred_fallthru
        _
      %p2665 = scmp.le.s32.totalorder 2, %s24
      // Predicated region
      $region69: #{tpu_custom_call.1} parent=5 // pred_check
        %p2666 = pneg %p2665
      $region70: #{tpu_custom_call.1} parent=5 // pred_check_branch
        %2668 = sbr.rel (%p2666) target = $region72
      $region71: #{tpu_custom_call.1} parent=5 // pred_region
        %s2669 = ssub.s32 %s24, 2
        // Predicated region
        $region73: #{tpu_custom_call.1} parent=71 // pred_check
          %p2670 = pneg %p268
        $region74: #{tpu_custom_call.1} parent=71 // pred_check_branch
          %2672 = sbr.rel (%p2670) target = $region76
        $region75: #{tpu_custom_call.1} parent=71 // pred_region
          %s2673 = sand.u32 %s253, 1
          %s2674 = scalar_lea.sflag [#allocation7], %s2673
          %s2675 = sand.u32 %s253, 1
          %s2676 = smul.addr %s2675, 8
          %s2677 = scalar_lea.vmem [#allocation6], %s2676
          %2678 = dma.done %s2674, 128
        $region76: #{tpu_custom_call.1} parent=71 // pred_fallthru
          _
        // Predicated region
        $region77: #{tpu_custom_call.1} parent=71 // pred_check
          %p2679 = pneg %p294
        $region78: #{tpu_custom_call.1} parent=71 // pred_check_branch
          %2681 = sbr.rel (%p2679) target = $region80
        $region79: #{tpu_custom_call.1} parent=71 // pred_region
          %s2682 = sand.u32 %s279, 1
          %s2683 = scalar_lea.sflag [#allocation9], %s2682
          %s2684 = sand.u32 %s279, 1
          %s2685 = smul.addr %s2684, 2
          %s2686 = scalar_lea.vmem [#allocation8], %s2685
          %2687 = dma.done %s2683, 32
        $region80: #{tpu_custom_call.1} parent=71 // pred_fallthru
          _
      $region72: #{tpu_custom_call.1} parent=5 // pred_fallthru
        _
    $region6: #{tpu_custom_call.1} parent=1 // loop_footer
      %s28 = sadd.s32 1, %s24
    $region7: #{tpu_custom_call.1} parent=1 // loop_footer_branch
      %23 = sbr.rel target = $region3
    $region8: #{tpu_custom_call.1} parent=1 // loop_exit
      _
    %2688 = vsyncpa [#allocation7], 1
    %s2689 = scalar_lea.sflag [#allocation7], 1
    %2690 = vsyncpa %s2689, 1
    %2691 = vsyncpa [#allocation9], 1
    %s2692 = scalar_lea.sflag [#allocation9], 1
    %2693 = vsyncpa %s2692, 1

</llo_original>
